<compile_context>
chip_gen: v6e
topology: v6e:2x2x1
jax: 0.10.0
libtpu: 0.0.40
codegen_flags: <defaults>
</compile_context>

<pallas_src>
import functools

import jax
import jax.numpy as jnp
from jax.experimental import pallas as pl
from jax.experimental.pallas import tpu as pltpu


def _round_up(x, m):
    return ((x + m - 1) // m) * m


# ----------------------------------------------------------------------------
# Fused point trunk: conv1 -> conv2 -> conv3(raw) -> max over points
#                    (conv3 bias / relu deferred past the max-pool)
# ----------------------------------------------------------------------------
def _trunk_kernel(x_ref, w1_ref, b1_ref, w2_ref, b2_ref, w3_ref, b3_ref,
                  g_ref, acc_ref, *, relu3):
    # x_ref : (1, TN, 3)   f32  points-major tile for batch b
    # w1_ref: (1, 3, 64)   f32  conv1 weight (BN scale + optional 3x3 transform folded)
    # w2_ref: (64, 128)    bf16
    # w3_ref: (128, 1024)  bf16
    # b*_ref: (1, C)       f32  (conv bias + BN folded); b3 is applied post-max
    # g_ref : (1, 1, 1024) f32  per-batch output (written only on the last point tile)
    # acc_ref: (8, 1024)   f32  sublane-aligned running max (VMEM scratch)
    n_id = pl.program_id(1)
    n_last = pl.num_programs(1) - 1

    x = x_ref[0]                      # (TN, 3)
    w1 = w1_ref[0]                    # (3, 64)

    # conv1 (K=3): three VPU broadcast-FMAs -- keeps the lane-sparse K off the MXU.
    h = (x[:, 0:1] * w1[0:1, :]
         + x[:, 1:2] * w1[1:2, :]
         + x[:, 2:3] * w1[2:3, :]
         + b1_ref[...])
    h = jnp.maximum(h, 0.0)

    # conv2 / conv3 on the MXU, bf16 inputs, f32 accumulation.
    h = jnp.dot(h.astype(jnp.bfloat16), w2_ref[...],
                preferred_element_type=jnp.float32) + b2_ref[...]
    h = jnp.maximum(h, 0.0)
    h = jnp.dot(h.astype(jnp.bfloat16), w3_ref[...],
                preferred_element_type=jnp.float32)      # raw: bias/relu deferred

    # Sublane-aligned partial max: (TN,1024) -> (8,1024); no per-tile XLU reduce,
    # no masked 1-of-8-sublane accumulator traffic.
    partial = jnp.max(h.reshape(h.shape[0] // 8, 8, h.shape[1]), axis=0)

    @pl.when(n_id == 0)
    def _():
        acc_ref[...] = partial

    @pl.when(n_id != 0)
    def _():
        acc_ref[...] = jnp.maximum(acc_ref[...], partial)

    # Finalize once per batch: 8->1 cross-sublane reduce, deferred bias (+ relu).
    @pl.when(n_id == n_last)
    def _():
        m = jnp.max(acc_ref[...], axis=0, keepdims=True) + b3_ref[...]
        if relu3:
            m = jnp.maximum(m, 0.0)
        g_ref[0] = m


def _pick_point_tile(n):
    # Prefer big tiles that divide N exactly (no padding; amortizes grid-step overhead).
    for t in (2048, 1024, 512, 256, 128):
        if n % t == 0:
            return t
    # Otherwise keep padding waste bounded while keeping tiles reasonably large.
    if n >= 4096:
        return 1024
    if n >= 1024:
        return 256
    return _round_up(n, 8)            # single (padded) tile for small N


def fused_point_trunk(x_bnk, w1, b1, w2, b2, w3, b3, *, relu3):
    """x_bnk (B,N,3) f32; w1 (1,3,C1) shared or (B,3,C1) per-batch; -> (B,C3) pooled feats."""
    B, N, K = x_bnk.shape
    assert w1.shape[0] in (1, B)
    C1 = w1.shape[-1]
    C2 = w2.shape[-1]
    C3 = w3.shape[-1]

    tn = _pick_point_tile(N)
    n_pad = (-N) % tn
    if n_pad:
        # Pad by repeating a real point: a duplicate can never change the max (exact).
        pad = jnp.broadcast_to(x_bnk[:, :1, :], (B, n_pad, K))
        x_bnk = jnp.concatenate([x_bnk, pad], axis=1)
    n_padded = N + n_pad

    w1_per_batch = (w1.shape[0] == B) and (B > 1)
    w1_map = (lambda b, n: (b, 0, 0)) if w1_per_batch else (lambda b, n: (0, 0, 0))

    w2_bf = w2.astype(jnp.bfloat16)
    w3_bf = w3.astype(jnp.bfloat16)
    b1r = b1.reshape(1, C1).astype(jnp.float32)
    b2r = b2.reshape(1, C2).astype(jnp.float32)
    b3r = b3.reshape(1, C3).astype(jnp.float32)

    flops = 2 * B * n_padded * (K * C1 + C1 * C2 + C2 * C3)
    bytes_accessed = (x_bnk.size * 4 + w1.size * 4
                      + w2_bf.size * 2 + w3_bf.size * 2 + B * C3 * 4)

    out = pl.pallas_call(
        functools.partial(_trunk_kernel, relu3=relu3),
        out_shape=jax.ShapeDtypeStruct((B, 1, C3), jnp.float32),
        grid=(B, n_padded // tn),
        in_specs=[
            pl.BlockSpec((1, tn, K), lambda b, n: (b, n, 0)),
            pl.BlockSpec((1, K, C1), w1_map),
            pl.BlockSpec((1, C1), lambda b, n: (0, 0)),
            pl.BlockSpec((C1, C2), lambda b, n: (0, 0)),
            pl.BlockSpec((1, C2), lambda b, n: (0, 0)),
            pl.BlockSpec((C2, C3), lambda b, n: (0, 0)),
            pl.BlockSpec((1, C3), lambda b, n: (0, 0)),
        ],
        out_specs=pl.BlockSpec((1, 1, C3), lambda b, n: (b, 0, 0)),
        scratch_shapes=[pltpu.VMEM((8, C3), jnp.float32)],
        compiler_params=pltpu.CompilerParams(
            dimension_semantics=("parallel", "arbitrary"),
            vmem_limit_bytes=48 * 1024 * 1024,
        ),
        cost_estimate=pl.CostEstimate(
            flops=flops, transcendentals=0, bytes_accessed=bytes_accessed),
    )(x_bnk, w1, b1r, w2_bf, b2r, w3_bf, b3r)
    return out.reshape(B, C3)


# ----------------------------------------------------------------------------
# Fused TNet head: fc1 -> fc2 -> fc3 (+identity folded into fc3 bias)
# ----------------------------------------------------------------------------
def _head_kernel(g_ref, w1_ref, b1_ref, w2_ref, b2_ref, w3_ref, b3_ref, o_ref):
    h = jnp.dot(g_ref[...].astype(jnp.bfloat16), w1_ref[...],
                preferred_element_type=jnp.float32) + b1_ref[...]
    h = jnp.maximum(h, 0.0)
    h = jnp.dot(h.astype(jnp.bfloat16), w2_ref[...],
                preferred_element_type=jnp.float32) + b2_ref[...]
    h = jnp.maximum(h, 0.0)
    # fc3 output is tiny (k*k lanes); keep it in f32.
    o_ref[...] = jnp.dot(h, w3_ref[...],
                         preferred_element_type=jnp.float32) + b3_ref[...]


def tnet_head(g, fc1, fc2, fc3, *, k):
    B, C = g.shape
    H1 = fc1["w"].shape[1]
    H2 = fc2["w"].shape[1]
    KK = k * k
    w1_bf = fc1["w"].astype(jnp.bfloat16)
    w2_bf = fc2["w"].astype(jnp.bfloat16)
    w3 = fc3["w"].astype(jnp.float32)
    b1 = fc1["b"].reshape(1, H1).astype(jnp.float32)
    b2 = fc2["b"].reshape(1, H2).astype(jnp.float32)
    # Fold the "+ identity" of the TNet into the fc3 bias.
    b3 = fc3["b"].reshape(1, KK) + jnp.eye(k, dtype=jnp.float32).reshape(1, KK)

    out = pl.pallas_call(
        _head_kernel,
        out_shape=jax.ShapeDtypeStruct((B, KK), jnp.float32),
        grid=(1,),
        in_specs=[
            pl.BlockSpec((B, C), lambda i: (0, 0)),
            pl.BlockSpec((C, H1), lambda i: (0, 0)),
            pl.BlockSpec((1, H1), lambda i: (0, 0)),
            pl.BlockSpec((H1, H2), lambda i: (0, 0)),
            pl.BlockSpec((1, H2), lambda i: (0, 0)),
            pl.BlockSpec((H2, KK), lambda i: (0, 0)),
            pl.BlockSpec((1, KK), lambda i: (0, 0)),
        ],
        out_specs=pl.BlockSpec((B, KK), lambda i: (0, 0)),
    )(g, w1_bf, b1, w2_bf, b2, w3, b3)
    return out.reshape(B, k, k)


# ----------------------------------------------------------------------------
# Parameters: deterministic, eval-mode BN folded into weight (scale) + bias
# ----------------------------------------------------------------------------
def _make_conv_bn(key, cin, cout, eps=1e-5):
    ks = jax.random.split(key, 6)
    w = 0.1 * jax.random.normal(ks[0], (cin, cout), jnp.float32)
    conv_b = 0.1 * jax.random.normal(ks[1], (cout,), jnp.float32)
    gamma = 1.0 + 0.1 * jax.random.normal(ks[2], (cout,), jnp.float32)
    beta = 0.1 * jax.random.normal(ks[3], (cout,), jnp.float32)
    run_mean = 0.1 * jax.random.normal(ks[4], (cout,), jnp.float32)
    run_var = 1.0 + 0.1 * jnp.abs(jax.random.normal(ks[5], (cout,), jnp.float32))
    scale = gamma / jnp.sqrt(run_var + eps)
    # Fold BN (eval) scale into the weight; bias folds BN shift + conv bias.
    return {"w": w * scale[None, :], "b": (conv_b - run_mean) * scale + beta}


def _make_linear(key, cin, cout):
    ks = jax.random.split(key, 2)
    return {"w": 0.1 * jax.random.normal(ks[0], (cin, cout), jnp.float32),
            "b": 0.1 * jax.random.normal(ks[1], (cout,), jnp.float32)}


def init_params(key):
    ks = jax.random.split(key, 9)
    stn = {
        "conv1": _make_conv_bn(ks[0], 3, 64),
        "conv2": _make_conv_bn(ks[1], 64, 128),
        "conv3": _make_conv_bn(ks[2], 128, 1024),
        "fc1": _make_conv_bn(ks[3], 1024, 512),
        "fc2": _make_conv_bn(ks[4], 512, 256),
        "fc3": _make_linear(ks[5], 256, 9),
    }
    return {
        "stn": stn,
        "conv1": _make_conv_bn(ks[6], 3, 64),
        "conv2": _make_conv_bn(ks[7], 64, 128),
        "conv3": _make_conv_bn(ks[8], 128, 1024),
    }


# ----------------------------------------------------------------------------
# Forward pass
# ----------------------------------------------------------------------------
def pointnet_encoder_forward(params, x):
    """x: (B, 3, N) matching the PyTorch Conv1d NCW convention."""
    B, D, N = x.shape
    x_bnk = jnp.transpose(x, (0, 2, 1)).astype(jnp.float32)        # (B, N, 3)

    # ---- STN (TNet, k=3): fused conv trunk + max, then fused fc head.
    # Shared conv1 weight goes in as a (1,3,64) block (constant index_map -> one DMA).
    stn = params["stn"]
    g = fused_point_trunk(x_bnk, stn["conv1"]["w"][None], stn["conv1"]["b"],
                          stn["conv2"]["w"], stn["conv2"]["b"],
                          stn["conv3"]["w"], stn["conv3"]["b"], relu3=True)
    trans = tnet_head(g, stn["fc1"], stn["fc2"], stn["fc3"], k=D)  # (B, 3, 3)

    # ---- encoder trunk. torch.bmm(trans, x) in points-major form is x @ trans.T,
    # which folds into conv1: (x @ trans.T) @ W1 == x @ (trans.T @ W1). ----
    w1_eff = jnp.einsum("bij,ic->bjc", trans, params["conv1"]["w"])
    g2 = fused_point_trunk(x_bnk, w1_eff, params["conv1"]["b"],
                           params["conv2"]["w"], params["conv2"]["b"],
                           params["conv3"]["w"], params["conv3"]["b"], relu3=False)
    return g2, trans, None                                          # global_feat=True


# ----------------------------------------------------------------------------
# Pure-JAX reference (same folded-BN / bf16-cast / deferred-bias math)
# ----------------------------------------------------------------------------
def _ref_trunk(x_bnk, w1_b, b1, w2, b2, w3, b3, relu3):
    if w1_b.shape[0] == 1:
        w1_b = jnp.broadcast_to(w1_b, (x_bnk.shape[0],) + w1_b.shape[1:])
    h = jnp.einsum("bnk,bkc->bnc", x_bnk, w1_b) + b1[None, None, :]
    h = jnp.maximum(h, 0.0)
    h = jnp.einsum("bnc,cd->bnd", h.astype(jnp.bfloat16), w2.astype(jnp.bfloat16),
                   preferred_element_type=jnp.float32) + b2[None, None, :]
    h = jnp.maximum(h, 0.0)
    h = jnp.einsum("bnd,de->bne", h.astype(jnp.bfloat16), w3.astype(jnp.bfloat16),
                   preferred_element_type=jnp.float32)
    g = jnp.max(h, axis=1) + b3[None, :]
    if relu3:
        g = jnp.maximum(g, 0.0)
    return g


def _ref_head(g, fc1, fc2, fc3, k):
    h = jnp.dot(g.astype(jnp.bfloat16), fc1["w"].astype(jnp.bfloat16),
                preferred_element_type=jnp.float32) + fc1["b"][None, :]
    h = jnp.maximum(h, 0.0)
    h = jnp.dot(h.astype(jnp.bfloat16), fc2["w"].astype(jnp.bfloat16),
                preferred_element_type=jnp.float32) + fc2["b"][None, :]
    h = jnp.maximum(h, 0.0)
    out = jnp.dot(h, fc3["w"], preferred_element_type=jnp.float32) + fc3["b"][None, :]
    out = out + jnp.eye(k, dtype=jnp.float32).reshape(1, k * k)
    return out.reshape(-1, k, k)


def _ref_encoder(params, x):
    B, D, N = x.shape
    x_bnk = jnp.transpose(x, (0, 2, 1)).astype(jnp.float32)
    stn = params["stn"]
    g = _ref_trunk(x_bnk, stn["conv1"]["w"][None], stn["conv1"]["b"],
                   stn["conv2"]["w"], stn["conv2"]["b"],
                   stn["conv3"]["w"], stn["conv3"]["b"], relu3=True)
    trans = _ref_head(g, stn["fc1"], stn["fc2"], stn["fc3"], D)
    w1_eff = jnp.einsum("bij,ic->bjc", trans, params["conv1"]["w"])
    g2 = _ref_trunk(x_bnk, w1_eff, params["conv1"]["b"], params["conv2"]["w"],
                    params["conv2"]["b"], params["conv3"]["w"], params["conv3"]["b"],
                    relu3=False)
    return g2, trans, None


# ----------------------------------------------------------------------------
if __name__ == "__main__":
    key = jax.random.PRNGKey(0)
    kx, kp, kx2 = jax.random.split(key, 3)
    params = init_params(kp)
    fwd = jax.jit(pointnet_encoder_forward)

    # Case 1: tile divides N exactly.
    B, D, N = 2, 3, 16
    x = jax.random.normal(kx, (B, D, N), dtype=jnp.float32)
    global_feat, trans, trans_feat = fwd(params, x)
    global_feat, trans = jax.block_until_ready((global_feat, trans))
    ref_feat, ref_trans, _ = _ref_encoder(params, x)
    assert global_feat.shape == (B, 1024) and trans.shape == (B, D, D)
    assert trans_feat is None
    assert jnp.allclose(global_feat, ref_feat, rtol=2e-2, atol=5e-3), (
        float(jnp.max(jnp.abs(global_feat - ref_feat))))
    assert jnp.allclose(trans, ref_trans, rtol=2e-2, atol=5e-3), (
        float(jnp.max(jnp.abs(trans - ref_trans))))

    # Case 2: N not divisible by the tile -> exercises the duplicate-point padding path.
    N2 = 20
    x2 = jax.random.normal(kx2, (B, D, N2), dtype=jnp.float32)
    gf2, tr2, _ = jax.block_until_ready(fwd(params, x2))
    rf2, rt2, _ = _ref_encoder(params, x2)
    assert jnp.allclose(gf2, rf2, rtol=2e-2, atol=5e-3), (
        float(jnp.max(jnp.abs(gf2 - rf2))))
    assert jnp.allclose(tr2, rt2, rtol=2e-2, atol=5e-3), (
        float(jnp.max(jnp.abs(tr2 - rt2))))

    print("KERNEL_OK")
</pallas_src>

<mosaic_0001>
module attributes {stable_mosaic.version = 11 : i64} {
  func.func @_trunk_kernel(%arg0: i32, %arg1: i32, %arg2: memref<1x16x3xf32, #tpu.memory_space<vmem>>, %arg3: memref<1x3x64xf32, #tpu.memory_space<vmem>>, %arg4: memref<1x64xf32, #tpu.memory_space<vmem>>, %arg5: memref<64x128xbf16, #tpu.memory_space<vmem>>, %arg6: memref<1x128xf32, #tpu.memory_space<vmem>>, %arg7: memref<128x1024xbf16, #tpu.memory_space<vmem>>, %arg8: memref<1x1024xf32, #tpu.memory_space<vmem>>, %arg9: memref<1x1x1024xf32, #tpu.memory_space<vmem>>, %arg10: memref<8x1024xf32, #tpu.memory_space<vmem>>) attributes {dimension_semantics = [#tpu.dimension_semantics<parallel>, #tpu.dimension_semantics<arbitrary>], iteration_bounds = array<i64: 2, 1>, scalar_prefetch = 0 : i64, scratch_operands = 1 : i64, tpu.core_type = #tpu.core_type<tc>, window_params = [{transform_indices = @transform_0, window_bounds = array<i64: 1, 16, 3>}, {pipeline_mode = #tpu.pipeline_mode<synchronous>, transform_indices = @transform_1, window_bounds = array<i64: 1, 3, 64>}, {pipeline_mode = #tpu.pipeline_mode<synchronous>, transform_indices = @transform_2, window_bounds = array<i64: 1, 64>}, {pipeline_mode = #tpu.pipeline_mode<synchronous>, transform_indices = @transform_3, window_bounds = array<i64: 64, 128>}, {pipeline_mode = #tpu.pipeline_mode<synchronous>, transform_indices = @transform_4, window_bounds = array<i64: 1, 128>}, {pipeline_mode = #tpu.pipeline_mode<synchronous>, transform_indices = @transform_5, window_bounds = array<i64: 128, 1024>}, {pipeline_mode = #tpu.pipeline_mode<synchronous>, transform_indices = @transform_6, window_bounds = array<i64: 1, 1024>}, {transform_indices = @transform_7, window_bounds = array<i64: 1, 1, 1024>}]} {
    %c0 = arith.constant 0 : index
    %c0_0 = arith.constant 0 : index
    %c0_1 = arith.constant 0 : index
    %0 = vector.load %arg2[%c0, %c0_0, %c0_1] : memref<1x16x3xf32, #tpu.memory_space<vmem>>, vector<1x16x3xf32>
    %1 = vector.shape_cast %0 : vector<1x16x3xf32> to vector<16x3xf32>
    %c0_2 = arith.constant 0 : index
    %c0_3 = arith.constant 0 : index
    %c0_4 = arith.constant 0 : index
    %2 = vector.load %arg3[%c0_2, %c0_3, %c0_4] : memref<1x3x64xf32, #tpu.memory_space<vmem>>, vector<1x3x64xf32>
    %3 = vector.shape_cast %2 : vector<1x3x64xf32> to vector<3x64xf32>
    %4 = vector.extract_strided_slice %1 {offsets = [0, 0], sizes = [16, 1], strides = [1, 1]} : vector<16x3xf32> to vector<16x1xf32>
    %5 = vector.extract_strided_slice %3 {offsets = [0, 0], sizes = [1, 64], strides = [1, 1]} : vector<3x64xf32> to vector<1x64xf32>
    %6 = vector.broadcast %4 : vector<16x1xf32> to vector<16x64xf32>
    %7 = vector.broadcast %5 : vector<1x64xf32> to vector<16x64xf32>
    %8 = arith.mulf %6, %7 : vector<16x64xf32>
    %9 = vector.extract_strided_slice %1 {offsets = [0, 1], sizes = [16, 1], strides = [1, 1]} : vector<16x3xf32> to vector<16x1xf32>
    %10 = vector.extract_strided_slice %3 {offsets = [1, 0], sizes = [1, 64], strides = [1, 1]} : vector<3x64xf32> to vector<1x64xf32>
    %11 = vector.broadcast %9 : vector<16x1xf32> to vector<16x64xf32>
    %12 = vector.broadcast %10 : vector<1x64xf32> to vector<16x64xf32>
    %13 = arith.mulf %11, %12 : vector<16x64xf32>
    %14 = arith.addf %8, %13 : vector<16x64xf32>
    %15 = vector.extract_strided_slice %1 {offsets = [0, 2], sizes = [16, 1], strides = [1, 1]} : vector<16x3xf32> to vector<16x1xf32>
    %16 = vector.extract_strided_slice %3 {offsets = [2, 0], sizes = [1, 64], strides = [1, 1]} : vector<3x64xf32> to vector<1x64xf32>
    %17 = vector.broadcast %15 : vector<16x1xf32> to vector<16x64xf32>
    %18 = vector.broadcast %16 : vector<1x64xf32> to vector<16x64xf32>
    %19 = arith.mulf %17, %18 : vector<16x64xf32>
    %20 = arith.addf %14, %19 : vector<16x64xf32>
    %c0_5 = arith.constant 0 : index
    %c0_6 = arith.constant 0 : index
    %21 = vector.load %arg4[%c0_5, %c0_6] : memref<1x64xf32, #tpu.memory_space<vmem>>, vector<1x64xf32>
    %22 = vector.broadcast %21 : vector<1x64xf32> to vector<16x64xf32>
    %23 = arith.addf %20, %22 : vector<16x64xf32>
    %cst = arith.constant 0.000000e+00 : f32
    %24 = vector.broadcast %cst : f32 to vector<16x64xf32>
    %25 = arith.maximumf %23, %24 : vector<16x64xf32>
    %26 = arith.truncf %25 : vector<16x64xf32> to vector<16x64xbf16>
    %c0_7 = arith.constant 0 : index
    %c0_8 = arith.constant 0 : index
    %27 = vector.load %arg5[%c0_7, %c0_8] : memref<64x128xbf16, #tpu.memory_space<vmem>>, vector<64x128xbf16>
    %cst_9 = arith.constant dense<0.000000e+00> : vector<16x128xf32>
    %28 = tpu.matmul %26, %27, %cst_9 {dimension_numbers = #tpu.dot_dimension_numbers<[1], [0], [0], [1], [0, 0, 1, 1], [], []>} : vector<16x64xbf16>, vector<64x128xbf16>, vector<16x128xf32> -> vector<16x128xf32>
    %c0_10 = arith.constant 0 : index
    %c0_11 = arith.constant 0 : index
    %29 = vector.load %arg6[%c0_10, %c0_11] : memref<1x128xf32, #tpu.memory_space<vmem>>, vector<1x128xf32>
    %30 = vector.broadcast %29 : vector<1x128xf32> to vector<16x128xf32>
    %31 = arith.addf %28, %30 : vector<16x128xf32>
    %cst_12 = arith.constant 0.000000e+00 : f32
    %32 = vector.broadcast %cst_12 : f32 to vector<16x128xf32>
    %33 = arith.maximumf %31, %32 : vector<16x128xf32>
    %34 = arith.truncf %33 : vector<16x128xf32> to vector<16x128xbf16>
    %c0_13 = arith.constant 0 : index
    %c0_14 = arith.constant 0 : index
    %35 = vector.load %arg7[%c0_13, %c0_14] : memref<128x1024xbf16, #tpu.memory_space<vmem>>, vector<128x1024xbf16>
    %cst_15 = arith.constant dense<0.000000e+00> : vector<16x1024xf32>
    %36 = tpu.matmul %34, %35, %cst_15 {dimension_numbers = #tpu.dot_dimension_numbers<[1], [0], [0], [1], [0, 0, 1, 1], [], []>} : vector<16x128xbf16>, vector<128x1024xbf16>, vector<16x1024xf32> -> vector<16x1024xf32>
    %37 = vector.shape_cast %36 : vector<16x1024xf32> to vector<2x8x1024xf32>
    %cst_16 = arith.constant dense<0xFF800000> : vector<8x1024xf32>
    %38 = vector.multi_reduction <maximumf>, %37, %cst_16 [0] : vector<2x8x1024xf32> to vector<8x1024xf32>
    %c0_i32 = arith.constant 0 : i32
    %39 = arith.cmpi eq, %arg1, %c0_i32 : i32
    %40 = arith.extui %39 : i1 to i32
    %c0_i32_17 = arith.constant 0 : i32
    %41 = arith.cmpi ne, %40, %c0_i32_17 : i32
    scf.if %41 {
      %c0_22 = arith.constant 0 : index
      %c0_23 = arith.constant 0 : index
      %48 = vector.load %arg10[%c0_22, %c0_23] : memref<8x1024xf32, #tpu.memory_space<vmem>>, vector<8x1024xf32>
      tpu.vector_store %arg10[%c0_22, %c0_23], %38 {strides = array<i32>} : memref<8x1024xf32, #tpu.memory_space<vmem>>, vector<8x1024xf32>,
    } else {
    }
    %c0_i32_18 = arith.constant 0 : i32
    %42 = arith.cmpi ne, %arg1, %c0_i32_18 : i32
    %43 = arith.extui %42 : i1 to i32
    %c0_i32_19 = arith.constant 0 : i32
    %44 = arith.cmpi ne, %43, %c0_i32_19 : i32
    scf.if %44 {
      %c0_22 = arith.constant 0 : index
      %c0_23 = arith.constant 0 : index
      %48 = vector.load %arg10[%c0_22, %c0_23] : memref<8x1024xf32, #tpu.memory_space<vmem>>, vector<8x1024xf32>
      %49 = arith.maximumf %48, %38 : vector<8x1024xf32>
      %c0_24 = arith.constant 0 : index
      %c0_25 = arith.constant 0 : index
      %50 = vector.load %arg10[%c0_24, %c0_25] : memref<8x1024xf32, #tpu.memory_space<vmem>>, vector<8x1024xf32>
      tpu.vector_store %arg10[%c0_24, %c0_25], %49 {strides = array<i32>} : memref<8x1024xf32, #tpu.memory_space<vmem>>, vector<8x1024xf32>,
    } else {
    }
    %c0_i32_20 = arith.constant 0 : i32
    %45 = arith.cmpi eq, %arg1, %c0_i32_20 : i32
    %46 = arith.extui %45 : i1 to i32
    %c0_i32_21 = arith.constant 0 : i32
    %47 = arith.cmpi ne, %46, %c0_i32_21 : i32
    scf.if %47 {
      %c0_22 = arith.constant 0 : index
      %c0_23 = arith.constant 0 : index
      %48 = vector.load %arg10[%c0_22, %c0_23] : memref<8x1024xf32, #tpu.memory_space<vmem>>, vector<8x1024xf32>
      %cst_24 = arith.constant dense<0xFF800000> : vector<1024xf32>
      %49 = vector.multi_reduction <maximumf>, %48, %cst_24 [0] : vector<8x1024xf32> to vector<1024xf32>
      %50 = vector.shape_cast %49 : vector<1024xf32> to vector<1x1024xf32>
      %c0_25 = arith.constant 0 : index
      %c0_26 = arith.constant 0 : index
      %51 = vector.load %arg8[%c0_25, %c0_26] : memref<1x1024xf32, #tpu.memory_space<vmem>>, vector<1x1024xf32>
      %52 = arith.addf %50, %51 : vector<1x1024xf32>
      %cst_27 = arith.constant 0.000000e+00 : f32
      %53 = vector.broadcast %cst_27 : f32 to vector<1x1024xf32>
      %54 = arith.maximumf %52, %53 : vector<1x1024xf32>
      %c0_28 = arith.constant 0 : index
      %c0_29 = arith.constant 0 : index
      %c0_30 = arith.constant 0 : index
      %55 = vector.load %arg9[%c0_28, %c0_29, %c0_30] : memref<1x1x1024xf32, #tpu.memory_space<vmem>>, vector<1x1x1024xf32>
      %56 = vector.shape_cast %55 : vector<1x1x1024xf32> to vector<1x1024xf32>
      %57 = vector.shape_cast %54 : vector<1x1024xf32> to vector<1x1x1024xf32>
      tpu.vector_store %arg9[%c0_28, %c0_29, %c0_30], %57 {strides = array<i32>} : memref<1x1x1024xf32, #tpu.memory_space<vmem>>, vector<1x1x1024xf32>,
    } else {
    }
    return
  }
  func.func @transform_0(%arg0: i32, %arg1: i32) -> (i32, i32, i32) {
    %c0_i32 = arith.constant 0 : i32
    %c0_i32_0 = arith.constant 0 : i32
    return %arg0, %arg1, %c0_i32 : i32, i32, i32
  }
  func.func @transform_1(%arg0: i32, %arg1: i32) -> (i32, i32, i32) {
    %c0_i32 = arith.constant 0 : i32
    %c0_i32_0 = arith.constant 0 : i32
    %c0_i32_1 = arith.constant 0 : i32
    %c0_i32_2 = arith.constant 0 : i32
    return %c0_i32, %c0_i32_0, %c0_i32_1 : i32, i32, i32
  }
  func.func @transform_2(%arg0: i32, %arg1: i32) -> (i32, i32) {
    %c0_i32 = arith.constant 0 : i32
    %c0_i32_0 = arith.constant 0 : i32
    %c0_i32_1 = arith.constant 0 : i32
    return %c0_i32, %c0_i32_0 : i32, i32
  }
  func.func @transform_3(%arg0: i32, %arg1: i32) -> (i32, i32) {
    %c0_i32 = arith.constant 0 : i32
    %c0_i32_0 = arith.constant 0 : i32
    %c0_i32_1 = arith.constant 0 : i32
    return %c0_i32, %c0_i32_0 : i32, i32
  }
  func.func @transform_4(%arg0: i32, %arg1: i32) -> (i32, i32) {
    %c0_i32 = arith.constant 0 : i32
    %c0_i32_0 = arith.constant 0 : i32
    %c0_i32_1 = arith.constant 0 : i32
    return %c0_i32, %c0_i32_0 : i32, i32
  }
  func.func @transform_5(%arg0: i32, %arg1: i32) -> (i32, i32) {
    %c0_i32 = arith.constant 0 : i32
    %c0_i32_0 = arith.constant 0 : i32
    %c0_i32_1 = arith.constant 0 : i32
    return %c0_i32, %c0_i32_0 : i32, i32
  }
  func.func @transform_6(%arg0: i32, %arg1: i32) -> (i32, i32) {
    %c0_i32 = arith.constant 0 : i32
    %c0_i32_0 = arith.constant 0 : i32
    %c0_i32_1 = arith.constant 0 : i32
    return %c0_i32, %c0_i32_0 : i32, i32
  }
  func.func @transform_7(%arg0: i32, %arg1: i32) -> (i32, i32, i32) {
    %c0_i32 = arith.constant 0 : i32
    %c0_i32_0 = arith.constant 0 : i32
    %c0_i32_1 = arith.constant 0 : i32
    return %arg0, %c0_i32, %c0_i32_0 : i32, i32, i32
  }
}

module attributes {stable_mosaic.version = 11 : i64} {
  func.func @_head_kernel(%arg0: i32, %arg1: memref<2x1024xf32, #tpu.memory_space<vmem>>, %arg2: memref<1024x512xbf16, #tpu.memory_space<vmem>>, %arg3: memref<1x512xf32, #tpu.memory_space<vmem>>, %arg4: memref<512x256xbf16, #tpu.memory_space<vmem>>, %arg5: memref<1x256xf32, #tpu.memory_space<vmem>>, %arg6: memref<256x9xf32, #tpu.memory_space<vmem>>, %arg7: memref<1x9xf32, #tpu.memory_space<vmem>>, %arg8: memref<2x9xf32, #tpu.memory_space<vmem>>) attributes {dimension_semantics = [#tpu.dimension_semantics<arbitrary>], iteration_bounds = array<i64: 1>, scalar_prefetch = 0 : i64, scratch_operands = 0 : i64, tpu.core_type = #tpu.core_type<tc>, window_params = [{pipeline_mode = #tpu.pipeline_mode<synchronous>, transform_indices = @transform_0, window_bounds = array<i64: 2, 1024>}, {pipeline_mode = #tpu.pipeline_mode<synchronous>, transform_indices = @transform_1, window_bounds = array<i64: 1024, 512>}, {pipeline_mode = #tpu.pipeline_mode<synchronous>, transform_indices = @transform_2, window_bounds = array<i64: 1, 512>}, {pipeline_mode = #tpu.pipeline_mode<synchronous>, transform_indices = @transform_3, window_bounds = array<i64: 512, 256>}, {pipeline_mode = #tpu.pipeline_mode<synchronous>, transform_indices = @transform_4, window_bounds = array<i64: 1, 256>}, {pipeline_mode = #tpu.pipeline_mode<synchronous>, transform_indices = @transform_5, window_bounds = array<i64: 256, 9>}, {pipeline_mode = #tpu.pipeline_mode<synchronous>, transform_indices = @transform_6, window_bounds = array<i64: 1, 9>}, {pipeline_mode = #tpu.pipeline_mode<synchronous>, transform_indices = @transform_7, window_bounds = array<i64: 2, 9>}]} {
    %c0 = arith.constant 0 : index
    %c0_0 = arith.constant 0 : index
    %0 = vector.load %arg1[%c0, %c0_0] : memref<2x1024xf32, #tpu.memory_space<vmem>>, vector<2x1024xf32>
    %1 = arith.truncf %0 : vector<2x1024xf32> to vector<2x1024xbf16>
    %c0_1 = arith.constant 0 : index
    %c0_2 = arith.constant 0 : index
    %2 = vector.load %arg2[%c0_1, %c0_2] : memref<1024x512xbf16, #tpu.memory_space<vmem>>, vector<1024x512xbf16>
    %cst = arith.constant dense<0.000000e+00> : vector<2x512xf32>
    %3 = tpu.matmul %1, %2, %cst {dimension_numbers = #tpu.dot_dimension_numbers<[1], [0], [0], [1], [0, 0, 1, 1], [], []>} : vector<2x1024xbf16>, vector<1024x512xbf16>, vector<2x512xf32> -> vector<2x512xf32>
    %c0_3 = arith.constant 0 : index
    %c0_4 = arith.constant 0 : index
    %4 = vector.load %arg3[%c0_3, %c0_4] : memref<1x512xf32, #tpu.memory_space<vmem>>, vector<1x512xf32>
    %5 = vector.broadcast %4 : vector<1x512xf32> to vector<2x512xf32>
    %6 = arith.addf %3, %5 : vector<2x512xf32>
    %cst_5 = arith.constant 0.000000e+00 : f32
    %7 = vector.broadcast %cst_5 : f32 to vector<2x512xf32>
    %8 = arith.maximumf %6, %7 : vector<2x512xf32>
    %9 = arith.truncf %8 : vector<2x512xf32> to vector<2x512xbf16>
    %c0_6 = arith.constant 0 : index
    %c0_7 = arith.constant 0 : index
    %10 = vector.load %arg4[%c0_6, %c0_7] : memref<512x256xbf16, #tpu.memory_space<vmem>>, vector<512x256xbf16>
    %cst_8 = arith.constant dense<0.000000e+00> : vector<2x256xf32>
    %11 = tpu.matmul %9, %10, %cst_8 {dimension_numbers = #tpu.dot_dimension_numbers<[1], [0], [0], [1], [0, 0, 1, 1], [], []>} : vector<2x512xbf16>, vector<512x256xbf16>, vector<2x256xf32> -> vector<2x256xf32>
    %c0_9 = arith.constant 0 : index
    %c0_10 = arith.constant 0 : index
    %12 = vector.load %arg5[%c0_9, %c0_10] : memref<1x256xf32, #tpu.memory_space<vmem>>, vector<1x256xf32>
    %13 = vector.broadcast %12 : vector<1x256xf32> to vector<2x256xf32>
    %14 = arith.addf %11, %13 : vector<2x256xf32>
    %cst_11 = arith.constant 0.000000e+00 : f32
    %15 = vector.broadcast %cst_11 : f32 to vector<2x256xf32>
    %16 = arith.maximumf %14, %15 : vector<2x256xf32>
    %c0_12 = arith.constant 0 : index
    %c0_13 = arith.constant 0 : index
    %17 = vector.load %arg6[%c0_12, %c0_13] : memref<256x9xf32, #tpu.memory_space<vmem>>, vector<256x9xf32>
    %cst_14 = arith.constant dense<0.000000e+00> : vector<2x9xf32>
    %18 = tpu.matmul %16, %17, %cst_14 {dimension_numbers = #tpu.dot_dimension_numbers<[1], [0], [0], [1], [0, 0, 1, 1], [], []>} : vector<2x256xf32>, vector<256x9xf32>, vector<2x9xf32> -> vector<2x9xf32>
    %c0_15 = arith.constant 0 : index
    %c0_16 = arith.constant 0 : index
    %19 = vector.load %arg7[%c0_15, %c0_16] : memref<1x9xf32, #tpu.memory_space<vmem>>, vector<1x9xf32>
    %20 = vector.broadcast %19 : vector<1x9xf32> to vector<2x9xf32>
    %21 = arith.addf %18, %20 : vector<2x9xf32>
    %c0_17 = arith.constant 0 : index
    %c0_18 = arith.constant 0 : index
    %22 = vector.load %arg8[%c0_17, %c0_18] : memref<2x9xf32, #tpu.memory_space<vmem>>, vector<2x9xf32>
    tpu.vector_store %arg8[%c0_17, %c0_18], %21 {strides = array<i32>} : memref<2x9xf32, #tpu.memory_space<vmem>>, vector<2x9xf32>,
    return
  }
  func.func @transform_0(%arg0: i32) -> (i32, i32) {
    %c0_i32 = arith.constant 0 : i32
    %c0_i32_0 = arith.constant 0 : i32
    %c0_i32_1 = arith.constant 0 : i32
    return %c0_i32, %c0_i32_0 : i32, i32
  }
  func.func @transform_1(%arg0: i32) -> (i32, i32) {
    %c0_i32 = arith.constant 0 : i32
    %c0_i32_0 = arith.constant 0 : i32
    %c0_i32_1 = arith.constant 0 : i32
    return %c0_i32, %c0_i32_0 : i32, i32
  }
  func.func @transform_2(%arg0: i32) -> (i32, i32) {
    %c0_i32 = arith.constant 0 : i32
    %c0_i32_0 = arith.constant 0 : i32
    %c0_i32_1 = arith.constant 0 : i32
    return %c0_i32, %c0_i32_0 : i32, i32
  }
  func.func @transform_3(%arg0: i32) -> (i32, i32) {
    %c0_i32 = arith.constant 0 : i32
    %c0_i32_0 = arith.constant 0 : i32
    %c0_i32_1 = arith.constant 0 : i32
    return %c0_i32, %c0_i32_0 : i32, i32
  }
  func.func @transform_4(%arg0: i32) -> (i32, i32) {
    %c0_i32 = arith.constant 0 : i32
    %c0_i32_0 = arith.constant 0 : i32
    %c0_i32_1 = arith.constant 0 : i32
    return %c0_i32, %c0_i32_0 : i32, i32
  }
  func.func @transform_5(%arg0: i32) -> (i32, i32) {
    %c0_i32 = arith.constant 0 : i32
    %c0_i32_0 = arith.constant 0 : i32
    %c0_i32_1 = arith.constant 0 : i32
    return %c0_i32, %c0_i32_0 : i32, i32
  }
  func.func @transform_6(%arg0: i32) -> (i32, i32) {
    %c0_i32 = arith.constant 0 : i32
    %c0_i32_0 = arith.constant 0 : i32
    %c0_i32_1 = arith.constant 0 : i32
    return %c0_i32, %c0_i32_0 : i32, i32
  }
  func.func @transform_7(%arg0: i32) -> (i32, i32) {
    %c0_i32 = arith.constant 0 : i32
    %c0_i32_0 = arith.constant 0 : i32
    %c0_i32_1 = arith.constant 0 : i32
    return %c0_i32, %c0_i32_0 : i32, i32
  }
}

module attributes {stable_mosaic.version = 11 : i64} {
  func.func @_trunk_kernel(%arg0: i32, %arg1: i32, %arg2: memref<1x16x3xf32, #tpu.memory_space<vmem>>, %arg3: memref<1x3x64xf32, #tpu.memory_space<vmem>>, %arg4: memref<1x64xf32, #tpu.memory_space<vmem>>, %arg5: memref<64x128xbf16, #tpu.memory_space<vmem>>, %arg6: memref<1x128xf32, #tpu.memory_space<vmem>>, %arg7: memref<128x1024xbf16, #tpu.memory_space<vmem>>, %arg8: memref<1x1024xf32, #tpu.memory_space<vmem>>, %arg9: memref<1x1x1024xf32, #tpu.memory_space<vmem>>, %arg10: memref<8x1024xf32, #tpu.memory_space<vmem>>) attributes {dimension_semantics = [#tpu.dimension_semantics<parallel>, #tpu.dimension_semantics<arbitrary>], iteration_bounds = array<i64: 2, 1>, scalar_prefetch = 0 : i64, scratch_operands = 1 : i64, tpu.core_type = #tpu.core_type<tc>, window_params = [{transform_indices = @transform_0, window_bounds = array<i64: 1, 16, 3>}, {transform_indices = @transform_1, window_bounds = array<i64: 1, 3, 64>}, {pipeline_mode = #tpu.pipeline_mode<synchronous>, transform_indices = @transform_2, window_bounds = array<i64: 1, 64>}, {pipeline_mode = #tpu.pipeline_mode<synchronous>, transform_indices = @transform_3, window_bounds = array<i64: 64, 128>}, {pipeline_mode = #tpu.pipeline_mode<synchronous>, transform_indices = @transform_4, window_bounds = array<i64: 1, 128>}, {pipeline_mode = #tpu.pipeline_mode<synchronous>, transform_indices = @transform_5, window_bounds = array<i64: 128, 1024>}, {pipeline_mode = #tpu.pipeline_mode<synchronous>, transform_indices = @transform_6, window_bounds = array<i64: 1, 1024>}, {transform_indices = @transform_7, window_bounds = array<i64: 1, 1, 1024>}]} {
    %c0 = arith.constant 0 : index
    %c0_0 = arith.constant 0 : index
    %c0_1 = arith.constant 0 : index
    %0 = vector.load %arg2[%c0, %c0_0, %c0_1] : memref<1x16x3xf32, #tpu.memory_space<vmem>>, vector<1x16x3xf32>
    %1 = vector.shape_cast %0 : vector<1x16x3xf32> to vector<16x3xf32>
    %c0_2 = arith.constant 0 : index
    %c0_3 = arith.constant 0 : index
    %c0_4 = arith.constant 0 : index
    %2 = vector.load %arg3[%c0_2, %c0_3, %c0_4] : memref<1x3x64xf32, #tpu.memory_space<vmem>>, vector<1x3x64xf32>
    %3 = vector.shape_cast %2 : vector<1x3x64xf32> to vector<3x64xf32>
    %4 = vector.extract_strided_slice %1 {offsets = [0, 0], sizes = [16, 1], strides = [1, 1]} : vector<16x3xf32> to vector<16x1xf32>
    %5 = vector.extract_strided_slice %3 {offsets = [0, 0], sizes = [1, 64], strides = [1, 1]} : vector<3x64xf32> to vector<1x64xf32>
    %6 = vector.broadcast %4 : vector<16x1xf32> to vector<16x64xf32>
    %7 = vector.broadcast %5 : vector<1x64xf32> to vector<16x64xf32>
    %8 = arith.mulf %6, %7 : vector<16x64xf32>
    %9 = vector.extract_strided_slice %1 {offsets = [0, 1], sizes = [16, 1], strides = [1, 1]} : vector<16x3xf32> to vector<16x1xf32>
    %10 = vector.extract_strided_slice %3 {offsets = [1, 0], sizes = [1, 64], strides = [1, 1]} : vector<3x64xf32> to vector<1x64xf32>
    %11 = vector.broadcast %9 : vector<16x1xf32> to vector<16x64xf32>
    %12 = vector.broadcast %10 : vector<1x64xf32> to vector<16x64xf32>
    %13 = arith.mulf %11, %12 : vector<16x64xf32>
    %14 = arith.addf %8, %13 : vector<16x64xf32>
    %15 = vector.extract_strided_slice %1 {offsets = [0, 2], sizes = [16, 1], strides = [1, 1]} : vector<16x3xf32> to vector<16x1xf32>
    %16 = vector.extract_strided_slice %3 {offsets = [2, 0], sizes = [1, 64], strides = [1, 1]} : vector<3x64xf32> to vector<1x64xf32>
    %17 = vector.broadcast %15 : vector<16x1xf32> to vector<16x64xf32>
    %18 = vector.broadcast %16 : vector<1x64xf32> to vector<16x64xf32>
    %19 = arith.mulf %17, %18 : vector<16x64xf32>
    %20 = arith.addf %14, %19 : vector<16x64xf32>
    %c0_5 = arith.constant 0 : index
    %c0_6 = arith.constant 0 : index
    %21 = vector.load %arg4[%c0_5, %c0_6] : memref<1x64xf32, #tpu.memory_space<vmem>>, vector<1x64xf32>
    %22 = vector.broadcast %21 : vector<1x64xf32> to vector<16x64xf32>
    %23 = arith.addf %20, %22 : vector<16x64xf32>
    %cst = arith.constant 0.000000e+00 : f32
    %24 = vector.broadcast %cst : f32 to vector<16x64xf32>
    %25 = arith.maximumf %23, %24 : vector<16x64xf32>
    %26 = arith.truncf %25 : vector<16x64xf32> to vector<16x64xbf16>
    %c0_7 = arith.constant 0 : index
    %c0_8 = arith.constant 0 : index
    %27 = vector.load %arg5[%c0_7, %c0_8] : memref<64x128xbf16, #tpu.memory_space<vmem>>, vector<64x128xbf16>
    %cst_9 = arith.constant dense<0.000000e+00> : vector<16x128xf32>
    %28 = tpu.matmul %26, %27, %cst_9 {dimension_numbers = #tpu.dot_dimension_numbers<[1], [0], [0], [1], [0, 0, 1, 1], [], []>} : vector<16x64xbf16>, vector<64x128xbf16>, vector<16x128xf32> -> vector<16x128xf32>
    %c0_10 = arith.constant 0 : index
    %c0_11 = arith.constant 0 : index
    %29 = vector.load %arg6[%c0_10, %c0_11] : memref<1x128xf32, #tpu.memory_space<vmem>>, vector<1x128xf32>
    %30 = vector.broadcast %29 : vector<1x128xf32> to vector<16x128xf32>
    %31 = arith.addf %28, %30 : vector<16x128xf32>
    %cst_12 = arith.constant 0.000000e+00 : f32
    %32 = vector.broadcast %cst_12 : f32 to vector<16x128xf32>
    %33 = arith.maximumf %31, %32 : vector<16x128xf32>
    %34 = arith.truncf %33 : vector<16x128xf32> to vector<16x128xbf16>
    %c0_13 = arith.constant 0 : index
    %c0_14 = arith.constant 0 : index
    %35 = vector.load %arg7[%c0_13, %c0_14] : memref<128x1024xbf16, #tpu.memory_space<vmem>>, vector<128x1024xbf16>
    %cst_15 = arith.constant dense<0.000000e+00> : vector<16x1024xf32>
    %36 = tpu.matmul %34, %35, %cst_15 {dimension_numbers = #tpu.dot_dimension_numbers<[1], [0], [0], [1], [0, 0, 1, 1], [], []>} : vector<16x128xbf16>, vector<128x1024xbf16>, vector<16x1024xf32> -> vector<16x1024xf32>
    %37 = vector.shape_cast %36 : vector<16x1024xf32> to vector<2x8x1024xf32>
    %cst_16 = arith.constant dense<0xFF800000> : vector<8x1024xf32>
    %38 = vector.multi_reduction <maximumf>, %37, %cst_16 [0] : vector<2x8x1024xf32> to vector<8x1024xf32>
    %c0_i32 = arith.constant 0 : i32
    %39 = arith.cmpi eq, %arg1, %c0_i32 : i32
    %40 = arith.extui %39 : i1 to i32
    %c0_i32_17 = arith.constant 0 : i32
    %41 = arith.cmpi ne, %40, %c0_i32_17 : i32
    scf.if %41 {
      %c0_22 = arith.constant 0 : index
      %c0_23 = arith.constant 0 : index
      %48 = vector.load %arg10[%c0_22, %c0_23] : memref<8x1024xf32, #tpu.memory_space<vmem>>, vector<8x1024xf32>
      tpu.vector_store %arg10[%c0_22, %c0_23], %38 {strides = array<i32>} : memref<8x1024xf32, #tpu.memory_space<vmem>>, vector<8x1024xf32>,
    } else {
    }
    %c0_i32_18 = arith.constant 0 : i32
    %42 = arith.cmpi ne, %arg1, %c0_i32_18 : i32
    %43 = arith.extui %42 : i1 to i32
    %c0_i32_19 = arith.constant 0 : i32
    %44 = arith.cmpi ne, %43, %c0_i32_19 : i32
    scf.if %44 {
      %c0_22 = arith.constant 0 : index
      %c0_23 = arith.constant 0 : index
      %48 = vector.load %arg10[%c0_22, %c0_23] : memref<8x1024xf32, #tpu.memory_space<vmem>>, vector<8x1024xf32>
      %49 = arith.maximumf %48, %38 : vector<8x1024xf32>
      %c0_24 = arith.constant 0 : index
      %c0_25 = arith.constant 0 : index
      %50 = vector.load %arg10[%c0_24, %c0_25] : memref<8x1024xf32, #tpu.memory_space<vmem>>, vector<8x1024xf32>
      tpu.vector_store %arg10[%c0_24, %c0_25], %49 {strides = array<i32>} : memref<8x1024xf32, #tpu.memory_space<vmem>>, vector<8x1024xf32>,
    } else {
    }
    %c0_i32_20 = arith.constant 0 : i32
    %45 = arith.cmpi eq, %arg1, %c0_i32_20 : i32
    %46 = arith.extui %45 : i1 to i32
    %c0_i32_21 = arith.constant 0 : i32
    %47 = arith.cmpi ne, %46, %c0_i32_21 : i32
    scf.if %47 {
      %c0_22 = arith.constant 0 : index
      %c0_23 = arith.constant 0 : index
      %48 = vector.load %arg10[%c0_22, %c0_23] : memref<8x1024xf32, #tpu.memory_space<vmem>>, vector<8x1024xf32>
      %cst_24 = arith.constant dense<0xFF800000> : vector<1024xf32>
      %49 = vector.multi_reduction <maximumf>, %48, %cst_24 [0] : vector<8x1024xf32> to vector<1024xf32>
      %50 = vector.shape_cast %49 : vector<1024xf32> to vector<1x1024xf32>
      %c0_25 = arith.constant 0 : index
      %c0_26 = arith.constant 0 : index
      %51 = vector.load %arg8[%c0_25, %c0_26] : memref<1x1024xf32, #tpu.memory_space<vmem>>, vector<1x1024xf32>
      %52 = arith.addf %50, %51 : vector<1x1024xf32>
      %c0_27 = arith.constant 0 : index
      %c0_28 = arith.constant 0 : index
      %c0_29 = arith.constant 0 : index
      %53 = vector.load %arg9[%c0_27, %c0_28, %c0_29] : memref<1x1x1024xf32, #tpu.memory_space<vmem>>, vector<1x1x1024xf32>
      %54 = vector.shape_cast %53 : vector<1x1x1024xf32> to vector<1x1024xf32>
      %55 = vector.shape_cast %52 : vector<1x1024xf32> to vector<1x1x1024xf32>
      tpu.vector_store %arg9[%c0_27, %c0_28, %c0_29], %55 {strides = array<i32>} : memref<1x1x1024xf32, #tpu.memory_space<vmem>>, vector<1x1x1024xf32>,
    } else {
    }
    return
  }
  func.func @transform_0(%arg0: i32, %arg1: i32) -> (i32, i32, i32) {
    %c0_i32 = arith.constant 0 : i32
    %c0_i32_0 = arith.constant 0 : i32
    return %arg0, %arg1, %c0_i32 : i32, i32, i32
  }
  func.func @transform_1(%arg0: i32, %arg1: i32) -> (i32, i32, i32) {
    %c0_i32 = arith.constant 0 : i32
    %c0_i32_0 = arith.constant 0 : i32
    %c0_i32_1 = arith.constant 0 : i32
    return %arg0, %c0_i32, %c0_i32_0 : i32, i32, i32
  }
  func.func @transform_2(%arg0: i32, %arg1: i32) -> (i32, i32) {
    %c0_i32 = arith.constant 0 : i32
    %c0_i32_0 = arith.constant 0 : i32
    %c0_i32_1 = arith.constant 0 : i32
    return %c0_i32, %c0_i32_0 : i32, i32
  }
  func.func @transform_3(%arg0: i32, %arg1: i32) -> (i32, i32) {
    %c0_i32 = arith.constant 0 : i32
    %c0_i32_0 = arith.constant 0 : i32
    %c0_i32_1 = arith.constant 0 : i32
    return %c0_i32, %c0_i32_0 : i32, i32
  }
  func.func @transform_4(%arg0: i32, %arg1: i32) -> (i32, i32) {
    %c0_i32 = arith.constant 0 : i32
    %c0_i32_0 = arith.constant 0 : i32
    %c0_i32_1 = arith.constant 0 : i32
    return %c0_i32, %c0_i32_0 : i32, i32
  }
  func.func @transform_5(%arg0: i32, %arg1: i32) -> (i32, i32) {
    %c0_i32 = arith.constant 0 : i32
    %c0_i32_0 = arith.constant 0 : i32
    %c0_i32_1 = arith.constant 0 : i32
    return %c0_i32, %c0_i32_0 : i32, i32
  }
  func.func @transform_6(%arg0: i32, %arg1: i32) -> (i32, i32) {
    %c0_i32 = arith.constant 0 : i32
    %c0_i32_0 = arith.constant 0 : i32
    %c0_i32_1 = arith.constant 0 : i32
    return %c0_i32, %c0_i32_0 : i32, i32
  }
  func.func @transform_7(%arg0: i32, %arg1: i32) -> (i32, i32, i32) {
    %c0_i32 = arith.constant 0 : i32
    %c0_i32_0 = arith.constant 0 : i32
    %c0_i32_1 = arith.constant 0 : i32
    return %arg0, %c0_i32, %c0_i32_0 : i32, i32, i32
  }
}

</mosaic_0001>

<llo_original>
// kernel: pointnet_encoder_forward.3
$region0: #{pointnet_encoder_forward.3}
  #allocation0 [shape = 'u32[]', space=smem, size = 0x4, offset = 0x4, fixed_abs, tag = 'smem constant byte address 0x4 - core index']
  #allocation1 [shape = 'u32[144,128]{1,0:T(1,128)}', space=vmem, size = 0x12000, scoped, tag = 'internal scratch']
  #allocation2 [shape = 'f32[8,1024]{1,0:T(8,128)}', space=vmem, size = 0x8000, scoped, tag = 'scratch operand']
  %s0 = inlined_call_operand.vmem [shape: f32[2,16,3], index: 0, kind: input, shape index: {}]
  %s1 = inlined_call_operand.hbm [shape: f32[1,3,64], index: 1, kind: input, shape index: {}]
  %s2 = inlined_call_operand.hbm [shape: f32[1,64], index: 2, kind: input, shape index: {}]
  %s3 = inlined_call_operand.vmem [shape: bf16[64,128], index: 3, kind: input, shape index: {}]
  %s4 = inlined_call_operand.hbm [shape: f32[1,128], index: 4, kind: input, shape index: {}]
  %s5 = inlined_call_operand.vmem [shape: bf16[128,1024], index: 5, kind: input, shape index: {}]
  %s6 = inlined_call_operand.hbm [shape: f32[1,1024], index: 6, kind: input, shape index: {}]
  %s7 = inlined_call_operand.vmem [shape: f32[2,1,1024], index: 7, kind: output, shape index: {}]
  %s8 = sld [smem:[#allocation0]]
  $region89: #{pointnet_encoder_forward.3} parent=0
    _
  %s10 = ssub.s32 1, %s8
  %s11 = scalar_select 0, %s10, %s8
  $region1: #{pointnet_encoder_forward.3} parent=0
    #allocation3 [shape = 'u8[2048]{0}', space=vmem, size = 0x800, scoped, tag = 'input window, operand 1, single buffered']
    #allocation4 [shape = 's32[2]{0}', space=sflag, size = 0x8, scoped, tag = 'scoped memory for pointnet_encoder_forward.3']
    #allocation5 [shape = 'u8[512]{0}', space=vmem, size = 0x400, scoped, tag = 'input window, operand 2, single buffered']
    #allocation6 [shape = 's32[1]{0}', space=sflag, size = 0x4, scoped, tag = 'scoped memory for pointnet_encoder_forward.3']
    #allocation7 [shape = 'u8[512]{0}', space=vmem, size = 0x400, scoped, tag = 'input window, operand 4, single buffered']
    #allocation8 [shape = 'u8[4096]{0}', space=vmem, size = 0x1000, scoped, tag = 'input window, operand 6, single buffered']
    #allocation9 [shape = 's32[1]{0}', space=sflag, size = 0x4, scoped, tag = 'scoped memory for pointnet_encoder_forward.3']
    %12 = vsyncpa [#allocation4], 0
    %13 = vsyncpa [#allocation6], 0
    %14 = vsyncpa [#allocation9], 0
    loop: start=0, step=1, limit=4
    $region2: #{pointnet_encoder_forward.3} parent=1 // loop_pre_header
      _
    $region3: #{pointnet_encoder_forward.3} parent=1 // loop_header
      %s16 = sphi 0, %s20
      %p17 = scmp.ge.s32.totalorder %s16, 4
      %s23 = sphi 0, %s35
      %s24 = sphi 0, %s31
      %s25 = sphi 0, %s23
      %s26 = sphi 0, %s24
      %s27 = sphi 0, %s25
      %s28 = sphi 0, %s26
      %s40 = sphi 0, %s42
      %s43 = sphi 0, %s40
      %s44 = sphi 0, %s43
      %s60 = sphi 0, %s44
      %s64 = sphi 0, %s64
      %s66 = sphi 0, %s64
      %s67 = sphi 0, %s66
      %s81 = sphi 0, %s67
      %s85 = sphi 0, %s85
      %s87 = sphi 0, %s85
      %s88 = sphi 0, %s87
      %s102 = sphi 0, %s88
      %s106 = sphi 0, %s106
      %s108 = sphi 0, %s106
      %s109 = sphi 0, %s108
      %s123 = sphi 0, %s109
      %s127 = sphi 0, %s127
      %s129 = sphi 0, %s127
      %s130 = sphi 0, %s129
      %s144 = sphi 0, %s130
      %s148 = sphi 0, %s148
      %s150 = sphi 0, %s148
      %s151 = sphi 0, %s150
      %s165 = sphi 0, %s151
      %s169 = sphi 0, %s169
      %s171 = sphi 0, %s169
      %s172 = sphi 0, %s171
      %s186 = sphi 0, %s172
      %s192 = sphi 0, %s194
      %s195 = sphi 0, %s192
      %s196 = sphi 0, %s195
      %s212 = sphi 0, %s196
    $region4: #{pointnet_encoder_forward.3} parent=1 // loop_header_branch
      %19 = sbr.rel (%p17) target = $region8
    $region5: #{pointnet_encoder_forward.3} parent=1 // loop_body
      %s21 = ssub.s32 %s16, 1
      %s22 = ssub.s32 %s16, 2
      %s29 = sadd.s32 1, %s24
      %p30 = scmp.ge.s32.totalorder %s29, 1
      %s31 = scalar_select %p30, 0, %s29
      %s32 = sadd.s32 1, %s23
      %s33 = scalar_select %p30, %s32, %s23
      %p34 = scmp.ge.s32.totalorder %s33, 2
      %s35 = scalar_select %p34, 0, %s33
      %s36 = ssub.s32 %s23, %s35
      %s37 = ssub.s32 %s24, %s31
      %s38 = sor.u32 %s36, %s37
      %p39 = scmp.eq.s32.totalorder %s38, 0
      %s41 = sadd.s32 %s40, 1
      %s42 = scalar_select %p39, %s40, %s41
      %p45 = pneg %p39
      %p46 = scmp.eq.s32.totalorder %s16, 1
      %p47 = por %p45, %p46
      %p48 = scmp.ne.s32.totalorder %s40, %s43
      %p49 = scmp.eq.s32.totalorder %s16, 0
      %p50 = por %p48, %p49
      %p51 = scmp.ne.s32.totalorder %s40, %s43
      %p52 = scmp.eq.s32.totalorder %s21, 1
      %p53 = por %p51, %p52
      %p54 = scmp.ne.s32.totalorder %s43, %s44
      %p55 = scmp.eq.s32.totalorder %s21, 0
      %p56 = por %p54, %p55
      %p57 = scmp.ne.s32.totalorder %s43, %s44
      %p58 = scmp.eq.s32.totalorder %s22, 1
      %p59 = por %p57, %p58
      %p61 = scmp.ne.s32.totalorder %s44, %s60
      %p62 = scmp.eq.s32.totalorder %s22, 0
      %p63 = por %p61, %p62
      %s65 = sadd.s32 %s64, 1
      %p68 = scmp.eq.s32.totalorder %s16, 1
      %p69 = scmp.ne.s32.totalorder %s64, %s66
      %p70 = scmp.eq.s32.totalorder %s16, 0
      %p71 = por %p69, %p70
      %p72 = scmp.ne.s32.totalorder %s64, %s66
      %p73 = scmp.eq.s32.totalorder %s21, 1
      %p74 = por %p72, %p73
      %p75 = scmp.ne.s32.totalorder %s66, %s67
      %p76 = scmp.eq.s32.totalorder %s21, 0
      %p77 = por %p75, %p76
      %p78 = scmp.ne.s32.totalorder %s66, %s67
      %p79 = scmp.eq.s32.totalorder %s22, 1
      %p80 = por %p78, %p79
      %p82 = scmp.ne.s32.totalorder %s67, %s81
      %p83 = scmp.eq.s32.totalorder %s22, 0
      %p84 = por %p82, %p83
      %s86 = sadd.s32 %s85, 1
      %p89 = scmp.eq.s32.totalorder %s16, 1
      %p90 = scmp.ne.s32.totalorder %s85, %s87
      %p91 = scmp.eq.s32.totalorder %s16, 0
      %p92 = por %p90, %p91
      %p93 = scmp.ne.s32.totalorder %s85, %s87
      %p94 = scmp.eq.s32.totalorder %s21, 1
      %p95 = por %p93, %p94
      %p96 = scmp.ne.s32.totalorder %s87, %s88
      %p97 = scmp.eq.s32.totalorder %s21, 0
      %p98 = por %p96, %p97
      %p99 = scmp.ne.s32.totalorder %s87, %s88
      %p100 = scmp.eq.s32.totalorder %s22, 1
      %p101 = por %p99, %p100
      %p103 = scmp.ne.s32.totalorder %s88, %s102
      %p104 = scmp.eq.s32.totalorder %s22, 0
      %p105 = por %p103, %p104
      %s107 = sadd.s32 %s106, 1
      %p110 = scmp.eq.s32.totalorder %s16, 1
      %p111 = scmp.ne.s32.totalorder %s106, %s108
      %p112 = scmp.eq.s32.totalorder %s16, 0
      %p113 = por %p111, %p112
      %p114 = scmp.ne.s32.totalorder %s106, %s108
      %p115 = scmp.eq.s32.totalorder %s21, 1
      %p116 = por %p114, %p115
      %p117 = scmp.ne.s32.totalorder %s108, %s109
      %p118 = scmp.eq.s32.totalorder %s21, 0
      %p119 = por %p117, %p118
      %p120 = scmp.ne.s32.totalorder %s108, %s109
      %p121 = scmp.eq.s32.totalorder %s22, 1
      %p122 = por %p120, %p121
      %p124 = scmp.ne.s32.totalorder %s109, %s123
      %p125 = scmp.eq.s32.totalorder %s22, 0
      %p126 = por %p124, %p125
      %s128 = sadd.s32 %s127, 1
      %p131 = scmp.eq.s32.totalorder %s16, 1
      %p132 = scmp.ne.s32.totalorder %s127, %s129
      %p133 = scmp.eq.s32.totalorder %s16, 0
      %p134 = por %p132, %p133
      %p135 = scmp.ne.s32.totalorder %s127, %s129
      %p136 = scmp.eq.s32.totalorder %s21, 1
      %p137 = por %p135, %p136
      %p138 = scmp.ne.s32.totalorder %s129, %s130
      %p139 = scmp.eq.s32.totalorder %s21, 0
      %p140 = por %p138, %p139
      %p141 = scmp.ne.s32.totalorder %s129, %s130
      %p142 = scmp.eq.s32.totalorder %s22, 1
      %p143 = por %p141, %p142
      %p145 = scmp.ne.s32.totalorder %s130, %s144
      %p146 = scmp.eq.s32.totalorder %s22, 0
      %p147 = por %p145, %p146
      %s149 = sadd.s32 %s148, 1
      %p152 = scmp.eq.s32.totalorder %s16, 1
      %p153 = scmp.ne.s32.totalorder %s148, %s150
      %p154 = scmp.eq.s32.totalorder %s16, 0
      %p155 = por %p153, %p154
      %p156 = scmp.ne.s32.totalorder %s148, %s150
      %p157 = scmp.eq.s32.totalorder %s21, 1
      %p158 = por %p156, %p157
      %p159 = scmp.ne.s32.totalorder %s150, %s151
      %p160 = scmp.eq.s32.totalorder %s21, 0
      %p161 = por %p159, %p160
      %p162 = scmp.ne.s32.totalorder %s150, %s151
      %p163 = scmp.eq.s32.totalorder %s22, 1
      %p164 = por %p162, %p163
      %p166 = scmp.ne.s32.totalorder %s151, %s165
      %p167 = scmp.eq.s32.totalorder %s22, 0
      %p168 = por %p166, %p167
      %s170 = sadd.s32 %s169, 1
      %p173 = scmp.eq.s32.totalorder %s16, 1
      %p174 = scmp.ne.s32.totalorder %s169, %s171
      %p175 = scmp.eq.s32.totalorder %s16, 0
      %p176 = por %p174, %p175
      %p177 = scmp.ne.s32.totalorder %s169, %s171
      %p178 = scmp.eq.s32.totalorder %s21, 1
      %p179 = por %p177, %p178
      %p180 = scmp.ne.s32.totalorder %s171, %s172
      %p181 = scmp.eq.s32.totalorder %s21, 0
      %p182 = por %p180, %p181
      %p183 = scmp.ne.s32.totalorder %s171, %s172
      %p184 = scmp.eq.s32.totalorder %s22, 1
      %p185 = por %p183, %p184
      %p187 = scmp.ne.s32.totalorder %s172, %s186
      %p188 = scmp.eq.s32.totalorder %s22, 0
      %p189 = por %p187, %p188
      %s190 = ssub.s32 %s23, %s35
      %p191 = scmp.eq.s32.totalorder %s190, 0
      %s193 = sadd.s32 %s192, 1
      %s194 = scalar_select %p191, %s192, %s193
      %p197 = pneg %p191
      %p198 = scmp.eq.s32.totalorder %s16, 1
      %p199 = por %p197, %p198
      %p200 = scmp.ne.s32.totalorder %s192, %s195
      %p201 = scmp.eq.s32.totalorder %s16, 0
      %p202 = por %p200, %p201
      %p203 = scmp.ne.s32.totalorder %s192, %s195
      %p204 = scmp.eq.s32.totalorder %s21, 1
      %p205 = por %p203, %p204
      %p206 = scmp.ne.s32.totalorder %s195, %s196
      %p207 = scmp.eq.s32.totalorder %s21, 0
      %p208 = por %p206, %p207
      %p209 = scmp.ne.s32.totalorder %s195, %s196
      %p210 = scmp.eq.s32.totalorder %s22, 1
      %p211 = por %p209, %p210
      %p213 = scmp.ne.s32.totalorder %s196, %s212
      %p214 = scmp.eq.s32.totalorder %s22, 0
      %p215 = por %p213, %p214
      %p216 = scmp.le.s32.totalorder 1, %s16
      %p217 = scmp.lt.s32.totalorder %s16, 3
      %p218 = pnand %p216, %p217
      %p219 = pneg %p218
      // Predicated region
      $region9: #{pointnet_encoder_forward.3} parent=5 // pred_check
        _
      $region10: #{pointnet_encoder_forward.3} parent=5 // pred_check_branch
        %221 = sbr.rel (%p218) target = $region12
      $region11: #{pointnet_encoder_forward.3} parent=5 // pred_region
        %s222 = ssub.s32 %s16, 1
        // Predicated region
        $region13: #{pointnet_encoder_forward.3} parent=11 // pred_check
          %p223 = pneg %p77
        $region14: #{pointnet_encoder_forward.3} parent=11 // pred_check_branch
          %225 = sbr.rel (%p223) target = $region16
        $region15: #{pointnet_encoder_forward.3} parent=11 // pred_region
          %s227 = ssub.s32 64, 64
          %228 = vsyncadd [#allocation4], %s227
          %s230 = sshll.u32 [#allocation3], 4
          %s231 = int_to_ptr.vmem [resolvable:$true] %s230
          %233 = dma.hbm_to_vmem [thread:$0]  %s1, 64, %s231, [#allocation4]
        $region16: #{pointnet_encoder_forward.3} parent=11 // pred_fallthru
          _
        // Predicated region
        $region17: #{pointnet_encoder_forward.3} parent=11 // pred_check
          %p234 = pneg %p98
        $region18: #{pointnet_encoder_forward.3} parent=11 // pred_check_branch
          %236 = sbr.rel (%p234) target = $region20
        $region19: #{pointnet_encoder_forward.3} parent=11 // pred_region
          %s238 = ssub.s32 16, 16
          %239 = vsyncadd [#allocation6], %s238
          %s241 = sshll.u32 [#allocation5], 4
          %s242 = int_to_ptr.vmem [resolvable:$true] %s241
          %244 = dma.hbm_to_vmem [thread:$0]  %s2, 16, %s242, [#allocation6]
        $region20: #{pointnet_encoder_forward.3} parent=11 // pred_fallthru
          _
        // Predicated region
        $region21: #{pointnet_encoder_forward.3} parent=11 // pred_check
          %p245 = pneg %p119
        $region22: #{pointnet_encoder_forward.3} parent=11 // pred_check_branch
          %247 = sbr.rel (%p245) target = $region24
        $region23: #{pointnet_encoder_forward.3} parent=11 // pred_region
          _
        $region24: #{pointnet_encoder_forward.3} parent=11 // pred_fallthru
          _
        // Predicated region
        $region25: #{pointnet_encoder_forward.3} parent=11 // pred_check
          %p248 = pneg %p140
        $region26: #{pointnet_encoder_forward.3} parent=11 // pred_check_branch
          %250 = sbr.rel (%p248) target = $region28
        $region27: #{pointnet_encoder_forward.3} parent=11 // pred_region
          %s252 = ssub.s32 16, 16
          %253 = vsyncadd [#allocation6], %s252
          %s255 = sshll.u32 [#allocation7], 4
          %s256 = int_to_ptr.vmem [resolvable:$true] %s255
          %258 = dma.hbm_to_vmem [thread:$0]  %s4, 16, %s256, [#allocation6]
        $region28: #{pointnet_encoder_forward.3} parent=11 // pred_fallthru
          _
        // Predicated region
        $region29: #{pointnet_encoder_forward.3} parent=11 // pred_check
          %p259 = pneg %p161
        $region30: #{pointnet_encoder_forward.3} parent=11 // pred_check_branch
          %261 = sbr.rel (%p259) target = $region32
        $region31: #{pointnet_encoder_forward.3} parent=11 // pred_region
          _
        $region32: #{pointnet_encoder_forward.3} parent=11 // pred_fallthru
          _
        // Predicated region
        $region33: #{pointnet_encoder_forward.3} parent=11 // pred_check
          %p262 = pneg %p182
        $region34: #{pointnet_encoder_forward.3} parent=11 // pred_check_branch
          %264 = sbr.rel (%p262) target = $region36
        $region35: #{pointnet_encoder_forward.3} parent=11 // pred_region
          %s266 = ssub.s32 128, 128
          %267 = vsyncadd [#allocation9], %s266
          %s269 = sshll.u32 [#allocation8], 4
          %s270 = int_to_ptr.vmem [resolvable:$true] %s269
          %272 = dma.hbm_to_vmem [thread:$0]  %s6, 128, %s270, [#allocation9]
        $region36: #{pointnet_encoder_forward.3} parent=11 // pred_fallthru
          _
      $region12: #{pointnet_encoder_forward.3} parent=5 // pred_fallthru
        _
      %p273 = scmp.lt.s32.totalorder %s16, 2
      // Predicated region
      $region37: #{pointnet_encoder_forward.3} parent=5 // pred_check
        %p274 = pneg %p273
      $region38: #{pointnet_encoder_forward.3} parent=5 // pred_check_branch
        %276 = sbr.rel (%p274) target = $region40
      $region39: #{pointnet_encoder_forward.3} parent=5 // pred_region
        // Predicated region
        $region41: #{pointnet_encoder_forward.3} parent=39 // pred_check
          %p277 = pneg %p50
        $region42: #{pointnet_encoder_forward.3} parent=39 // pred_check_branch
          %279 = sbr.rel (%p277) target = $region44
        $region43: #{pointnet_encoder_forward.3} parent=39 // pred_region
          %s280 = smul.u32 2, %s24
          %p281 = scmp.lt.s32.totalorder %s23, 1
          %s282 = scalar_select %p281, %s23, 1
          %p283 = scmp.lt.s32.totalorder %s280, 1
          %s284 = scalar_select %p283, %s280, 1
          %s285 = smul.addr %s282, 2
          %s286 = sadd.s32 %s284, %s285
          %s287 = smul.addr %s286, 8
          %s288 = scalar_lea.vmem %s0, %s287
          %s289 = smul.u32 2, %s24
        $region44: #{pointnet_encoder_forward.3} parent=39 // pred_fallthru
          _
      $region40: #{pointnet_encoder_forward.3} parent=5 // pred_fallthru
        _
      %p290 = scmp.le.s32.totalorder 1, %s16
      %p291 = scmp.lt.s32.totalorder %s16, 3
      %p292 = pnand %p290, %p291
      %p293 = pneg %p292
      // Predicated region
      $region45: #{pointnet_encoder_forward.3} parent=5 // pred_check
        _
      $region46: #{pointnet_encoder_forward.3} parent=5 // pred_check_branch
        %295 = sbr.rel (%p292) target = $region48
      $region47: #{pointnet_encoder_forward.3} parent=5 // pred_region
        %s296 = ssub.s32 %s16, 1
        // Predicated region
        $region49: #{pointnet_encoder_forward.3} parent=47 // pred_check
          %p297 = pneg %p77
        $region50: #{pointnet_encoder_forward.3} parent=47 // pred_check_branch
          %299 = sbr.rel (%p297) target = $region52
        $region51: #{pointnet_encoder_forward.3} parent=47 // pred_region
          %300 = dma.done [#allocation4], 64
        $region52: #{pointnet_encoder_forward.3} parent=47 // pred_fallthru
          _
        // Predicated region
        $region53: #{pointnet_encoder_forward.3} parent=47 // pred_check
          %p301 = pneg %p98
        $region54: #{pointnet_encoder_forward.3} parent=47 // pred_check_branch
          %303 = sbr.rel (%p301) target = $region56
        $region55: #{pointnet_encoder_forward.3} parent=47 // pred_region
          %304 = dma.done [#allocation6], 16
        $region56: #{pointnet_encoder_forward.3} parent=47 // pred_fallthru
          _
        // Predicated region
        $region57: #{pointnet_encoder_forward.3} parent=47 // pred_check
          %p305 = pneg %p140
        $region58: #{pointnet_encoder_forward.3} parent=47 // pred_check_branch
          %307 = sbr.rel (%p305) target = $region60
        $region59: #{pointnet_encoder_forward.3} parent=47 // pred_region
          %308 = dma.done [#allocation6], 16
        $region60: #{pointnet_encoder_forward.3} parent=47 // pred_fallthru
          _
        // Predicated region
        $region61: #{pointnet_encoder_forward.3} parent=47 // pred_check
          %p309 = pneg %p182
        $region62: #{pointnet_encoder_forward.3} parent=47 // pred_check_branch
          %311 = sbr.rel (%p309) target = $region64
        $region63: #{pointnet_encoder_forward.3} parent=47 // pred_region
          %312 = dma.done [#allocation9], 128
        $region64: #{pointnet_encoder_forward.3} parent=47 // pred_fallthru
          _
        %s313 = smul.u32 2, %s26
        %p314 = scmp.lt.s32.totalorder %s25, 1
        %s315 = scalar_select %p314, %s25, 1
        %p316 = scmp.lt.s32.totalorder %s313, 1
        %s317 = scalar_select %p316, %s313, 1
        %s318 = smul.addr %s315, 2
        %s319 = sadd.s32 %s317, %s318
        %s320 = smul.addr %s319, 8
        %s321 = scalar_lea.vmem %s0, %s320
        %p322 = pneg %p56
        %p323 = pneg %p53
        %p324 = pneg %p77
        %p325 = pneg %p74
        %p326 = pneg %p98
        %p327 = pneg %p95
        %p328 = pneg %p119
        %p329 = pneg %p116
        %p330 = pneg %p140
        %p331 = pneg %p137
        %p332 = pneg %p161
        %p333 = pneg %p158
        %p334 = pneg %p182
        %p335 = pneg %p179
        %p336 = pneg %p208
        %p337 = pneg %p205
        %p338 = scmp.lt.s32.totalorder %s25, 1
        %s339 = scalar_select %p338, %s25, 1
        %s340 = smul.addr %s339, 8
        %s341 = scalar_lea.vmem %s7, %s340
        %s342 = smul.u32 2, %s26
        %p343 = scmp.lt.s32.totalorder %s25, 1
        %s344 = scalar_select %p343, %s25, 1
        %p345 = scmp.lt.s32.totalorder %s342, 1
        %s346 = scalar_select %p345, %s342, 1
        %s347 = smul.addr %s344, 2
        %s348 = sadd.s32 %s346, %s347
        %s349 = smul.addr %s348, 8
        %s350 = scalar_lea.vmem %s0, %s349
        %s351 = smul.u32 2, %s26
        %p352 = scmp.lt.s32.totalorder %s25, 1
        %s353 = scalar_select %p352, %s25, 1
        %s354 = smul.addr %s353, 8
        %s355 = scalar_lea.vmem %s7, %s354
        %v357 = vld [vmem:[%s350] sm:$0xff]
        %v358 = vld [vmem:[%s350 + $0x8] sm:$0xff]
        %v359 = vld [vmem:[#allocation3] sm:$0x7]
        %361 = vset.pattern.permute.xlu0 0
        %362 = vperm.xlu0 %361, %v357
        %v363 = vpop.permute.xlu0 %362
        %366 = vset.pattern.permute.xlu0 0
        %367 = vperm.xlu0 %366, %v358
        %v368 = vpop.permute.xlu0 %367
        %v370 = vlaneseq
        %v371 = vshrl.u32 %v370, 7
        %v372 = vsub.s32 0, %v371
        %v373 = vrot.slane %v359, %v372
        %v374 = vmul.f32 %v363, %v373
        %v375 = vmul.f32 %v368, %v373
        %376 = vset.pattern.permute.xlu0 1
        %377 = vperm.xlu0 %376, %v357
        %v378 = vpop.permute.xlu0 %377
        %380 = vset.pattern.permute.xlu0 1
        %381 = vperm.xlu0 %380, %v358
        %v382 = vpop.permute.xlu0 %381
        %v384 = vlaneseq
        %v385 = vshrl.u32 %v384, 7
        %v386 = vsub.s32 1, %v385
        %v387 = vrot.slane %v359, %v386
        %v388 = vmul.f32 %v378, %v387
        %v389 = vmul.f32 %v382, %v387
        %v390 = vadd.f32 %v374, %v388
        %v391 = vadd.f32 %v375, %v389
        %392 = vset.pattern.permute.xlu0 2
        %393 = vperm.xlu0 %392, %v357
        %v394 = vpop.permute.xlu0 %393
        %396 = vset.pattern.permute.xlu0 2
        %397 = vperm.xlu0 %396, %v358
        %v398 = vpop.permute.xlu0 %397
        %v400 = vlaneseq
        %v401 = vshrl.u32 %v400, 7
        %v402 = vsub.s32 2, %v401
        %v403 = vrot.slane %v359, %v402
        %v404 = vmul.f32 %v394, %v403
        %v405 = vmul.f32 %v398, %v403
        %v406 = vadd.f32 %v390, %v404
        %v407 = vadd.f32 %v391, %v405
        %v408 = vld [vmem:[#allocation5] sm:$0x1]
        %v410 = vlaneseq
        %v411 = vshrl.u32 %v410, 7
        %v412 = vsub.s32 0, %v411
        %v413 = vrot.slane %v408, %v412
        %v415 = vadd.f32 %v406, %v413
        %v416 = vadd.f32 %v407, %v413
        %v417 = vmax.f32 %v415, 0.0
        %v418 = vmax.f32 %v416, 0.0
        %v419 = vpack.c.bf16 %v418, %v417
        %v420 = vld [vmem:[%s3] sm:$0xf]
        %v421 = vld [vmem:[%s3 + $0x4] sm:$0xf]
        %v422 = vld [vmem:[%s3 + $0x8] sm:$0xf]
        %v423 = vld [vmem:[%s3 + $0xc] sm:$0xf]
        %v424 = vld [vmem:[%s3 + $0x10] sm:$0xf]
        %v425 = vld [vmem:[%s3 + $0x14] sm:$0xf]
        %v426 = vld [vmem:[%s3 + $0x18] sm:$0xf]
        %v427 = vld [vmem:[%s3 + $0x1c] sm:$0xf]
        %v428 = vld [vmem:[#allocation7] sm:$0x1]
        %v430 = vlaneseq
        %v431 = vshrl.u32 %v430, 7
        %v432 = vsub.s32 0, %v431
        %v433 = vrot.slane %v428, %v432
        %v443 = vunpack.c.l.b16 %v420
        %v444 = vunpack.c.l.b16 %v421
        %v445 = vunpack.c.l.b16 %v422
        %v446 = vunpack.c.l.b16 %v423
        %v447 = vunpack.c.l.b16 %v424
        %v448 = vunpack.c.l.b16 %v425
        %v449 = vunpack.c.l.b16 %v426
        %v450 = vunpack.c.l.b16 %v427
        %v451 = vpack.c.b16 %v444, %v443
        %v452 = vpack.c.b16 %v446, %v445
        %v453 = vpack.c.b16 %v448, %v447
        %v454 = vpack.c.b16 %v450, %v449
        %vm459 = vcmask 523264
        %v461 = vsel %vm459, %v419, 0
        %463 = vmatprep.subr.bf16.mxu0 0
        %464 = vmatpush1.bf16.msra.mxu0 0
        %465 = vmatprep.subr.bf16.mxu0 0
        %466 = vmatpush1.bf16.msra.mxu0 0
        %467 = vmatprep.subr.bf16.mxu0 0
        %468 = vmatpush1.bf16.msra.mxu0 0
        %469 = vmatprep.subr.bf16.mxu0 0
        %470 = vmatpush1.bf16.msra.mxu0 0
        %471 = vmatprep.subr.bf16.mxu0 0
        %472 = vmatpush1.bf16.msra.mxu0 %v454
        %473 = vmatprep.subr.bf16.mxu0 0
        %474 = vmatpush1.bf16.msra.mxu0 %v453
        %475 = vmatprep.subr.bf16.mxu0 0
        %476 = vmatpush1.bf16.msra.mxu0 %v452
        %477 = vmatprep.subr.bf16.mxu0 0
        %478 = vmatpush1.bf16.msra.mxu0 %v451
        %479 = vmatprep.subr.bf16.mxu0 0
        %480 = vmatpush2.bf16.msra.mxu0 0
        %481 = vmatprep.subr.bf16.mxu0 0
        %482 = vmatpush2.bf16.msra.mxu0 0
        %483 = vmatprep.subr.bf16.mxu0 0
        %484 = vmatpush2.bf16.msra.mxu0 0
        %485 = vmatprep.subr.bf16.mxu0 0
        %486 = vmatpush2.bf16.msra.mxu0 0
        %487 = vmatprep.subr.bf16.mxu0 0
        %488 = vmatpush2.bf16.msra.mxu0 0
        %489 = vmatprep.subr.bf16.mxu0 0
        %490 = vmatpush2.bf16.msra.mxu0 0
        %491 = vmatprep.subr.bf16.mxu0 0
        %492 = vmatpush2.bf16.msra.mxu0 0
        %493 = vmatprep.subr.bf16.mxu0 0
        %494 = vmatpush2.bf16.msra.mxu0 0
        %495 = vmatprep.mubr.bf16.mxu0 0
        %496 = vmatmul.mubr.bf16.gmra.mxu0 %v461
        %v497 = vpop.f32.mrf.mxu0
        %v498 = vadd.f32 %v433, %v497
        %v499 = vpop.f32.mrf.mxu0
        %v500 = vpop.f32.mrf.mxu0
        %v501 = vadd.f32 %v433, %v500
        %v502 = vpop.f32.mrf.mxu0
        %503 = vdwg.mxu0
        %v504 = vmax.f32 %v498, 0.0
        %v505 = vmax.f32 %v501, 0.0
        %v506 = vpack.c.bf16 %v505, %v504
        %v507 = vld [vmem:[%s5] sm:$0xff]
        %v508 = vld [vmem:[%s5 + $0x8] sm:$0xff]
        %v509 = vld [vmem:[%s5 + $0x10] sm:$0xff]
        %v510 = vld [vmem:[%s5 + $0x18] sm:$0xff]
        %v511 = vld [vmem:[%s5 + $0x20] sm:$0xff]
        %v512 = vld [vmem:[%s5 + $0x28] sm:$0xff]
        %v513 = vld [vmem:[%s5 + $0x30] sm:$0xff]
        %v514 = vld [vmem:[%s5 + $0x38] sm:$0xff]
        %v515 = vld [vmem:[%s5 + $0x40] sm:$0xff]
        %v516 = vld [vmem:[%s5 + $0x48] sm:$0xff]
        %v517 = vld [vmem:[%s5 + $0x50] sm:$0xff]
        %v518 = vld [vmem:[%s5 + $0x58] sm:$0xff]
        %v519 = vld [vmem:[%s5 + $0x60] sm:$0xff]
        %v520 = vld [vmem:[%s5 + $0x68] sm:$0xff]
        %v521 = vld [vmem:[%s5 + $0x70] sm:$0xff]
        %v522 = vld [vmem:[%s5 + $0x78] sm:$0xff]
        %v523 = vld [vmem:[%s5 + $0x80] sm:$0xff]
        %v524 = vld [vmem:[%s5 + $0x88] sm:$0xff]
        %v525 = vld [vmem:[%s5 + $0x90] sm:$0xff]
        %v526 = vld [vmem:[%s5 + $0x98] sm:$0xff]
        %v527 = vld [vmem:[%s5 + $0xa0] sm:$0xff]
        %v528 = vld [vmem:[%s5 + $0xa8] sm:$0xff]
        %v529 = vld [vmem:[%s5 + $0xb0] sm:$0xff]
        %v530 = vld [vmem:[%s5 + $0xb8] sm:$0xff]
        %v531 = vld [vmem:[%s5 + $0xc0] sm:$0xff]
        %v532 = vld [vmem:[%s5 + $0xc8] sm:$0xff]
        %v533 = vld [vmem:[%s5 + $0xd0] sm:$0xff]
        %v534 = vld [vmem:[%s5 + $0xd8] sm:$0xff]
        %v535 = vld [vmem:[%s5 + $0xe0] sm:$0xff]
        %v536 = vld [vmem:[%s5 + $0xe8] sm:$0xff]
        %v537 = vld [vmem:[%s5 + $0xf0] sm:$0xff]
        %v538 = vld [vmem:[%s5 + $0xf8] sm:$0xff]
        %v539 = vld [vmem:[%s5 + $0x100] sm:$0xff]
        %v540 = vld [vmem:[%s5 + $0x108] sm:$0xff]
        %v541 = vld [vmem:[%s5 + $0x110] sm:$0xff]
        %v542 = vld [vmem:[%s5 + $0x118] sm:$0xff]
        %v543 = vld [vmem:[%s5 + $0x120] sm:$0xff]
        %v544 = vld [vmem:[%s5 + $0x128] sm:$0xff]
        %v545 = vld [vmem:[%s5 + $0x130] sm:$0xff]
        %v546 = vld [vmem:[%s5 + $0x138] sm:$0xff]
        %v547 = vld [vmem:[%s5 + $0x140] sm:$0xff]
        %v548 = vld [vmem:[%s5 + $0x148] sm:$0xff]
        %v549 = vld [vmem:[%s5 + $0x150] sm:$0xff]
        %v550 = vld [vmem:[%s5 + $0x158] sm:$0xff]
        %v551 = vld [vmem:[%s5 + $0x160] sm:$0xff]
        %v552 = vld [vmem:[%s5 + $0x168] sm:$0xff]
        %v553 = vld [vmem:[%s5 + $0x170] sm:$0xff]
        %v554 = vld [vmem:[%s5 + $0x178] sm:$0xff]
        %v555 = vld [vmem:[%s5 + $0x180] sm:$0xff]
        %v556 = vld [vmem:[%s5 + $0x188] sm:$0xff]
        %v557 = vld [vmem:[%s5 + $0x190] sm:$0xff]
        %v558 = vld [vmem:[%s5 + $0x198] sm:$0xff]
        %v559 = vld [vmem:[%s5 + $0x1a0] sm:$0xff]
        %v560 = vld [vmem:[%s5 + $0x1a8] sm:$0xff]
        %v561 = vld [vmem:[%s5 + $0x1b0] sm:$0xff]
        %v562 = vld [vmem:[%s5 + $0x1b8] sm:$0xff]
        %v563 = vld [vmem:[%s5 + $0x1c0] sm:$0xff]
        %v564 = vld [vmem:[%s5 + $0x1c8] sm:$0xff]
        %v565 = vld [vmem:[%s5 + $0x1d0] sm:$0xff]
        %v566 = vld [vmem:[%s5 + $0x1d8] sm:$0xff]
        %v567 = vld [vmem:[%s5 + $0x1e0] sm:$0xff]
        %v568 = vld [vmem:[%s5 + $0x1e8] sm:$0xff]
        %v569 = vld [vmem:[%s5 + $0x1f0] sm:$0xff]
        %v570 = vld [vmem:[%s5 + $0x1f8] sm:$0xff]
        %v635 = vunpack.c.l.b16 %v507
        %v636 = vunpack.c.h.b16 %v507
        %v637 = vunpack.c.l.b16 %v508
        %v638 = vunpack.c.h.b16 %v508
        %v639 = vunpack.c.l.b16 %v509
        %v640 = vunpack.c.h.b16 %v509
        %v641 = vunpack.c.l.b16 %v510
        %v642 = vunpack.c.h.b16 %v510
        %v643 = vunpack.c.l.b16 %v511
        %v644 = vunpack.c.h.b16 %v511
        %v645 = vunpack.c.l.b16 %v512
        %v646 = vunpack.c.h.b16 %v512
        %v647 = vunpack.c.l.b16 %v513
        %v648 = vunpack.c.h.b16 %v513
        %v649 = vunpack.c.l.b16 %v514
        %v650 = vunpack.c.h.b16 %v514
        %v651 = vunpack.c.l.b16 %v515
        %v652 = vunpack.c.h.b16 %v515
        %v653 = vunpack.c.l.b16 %v516
        %v654 = vunpack.c.h.b16 %v516
        %v655 = vunpack.c.l.b16 %v517
        %v656 = vunpack.c.h.b16 %v517
        %v657 = vunpack.c.l.b16 %v518
        %v658 = vunpack.c.h.b16 %v518
        %v659 = vunpack.c.l.b16 %v519
        %v660 = vunpack.c.h.b16 %v519
        %v661 = vunpack.c.l.b16 %v520
        %v662 = vunpack.c.h.b16 %v520
        %v663 = vunpack.c.l.b16 %v521
        %v664 = vunpack.c.h.b16 %v521
        %v665 = vunpack.c.l.b16 %v522
        %v666 = vunpack.c.h.b16 %v522
        %v667 = vunpack.c.l.b16 %v523
        %v668 = vunpack.c.h.b16 %v523
        %v669 = vunpack.c.l.b16 %v524
        %v670 = vunpack.c.h.b16 %v524
        %v671 = vunpack.c.l.b16 %v525
        %v672 = vunpack.c.h.b16 %v525
        %v673 = vunpack.c.l.b16 %v526
        %v674 = vunpack.c.h.b16 %v526
        %v675 = vunpack.c.l.b16 %v527
        %v676 = vunpack.c.h.b16 %v527
        %v677 = vunpack.c.l.b16 %v528
        %v678 = vunpack.c.h.b16 %v528
        %v679 = vunpack.c.l.b16 %v529
        %v680 = vunpack.c.h.b16 %v529
        %v681 = vunpack.c.l.b16 %v530
        %v682 = vunpack.c.h.b16 %v530
        %v683 = vunpack.c.l.b16 %v531
        %v684 = vunpack.c.h.b16 %v531
        %v685 = vunpack.c.l.b16 %v532
        %v686 = vunpack.c.h.b16 %v532
        %v687 = vunpack.c.l.b16 %v533
        %v688 = vunpack.c.h.b16 %v533
        %v689 = vunpack.c.l.b16 %v534
        %v690 = vunpack.c.h.b16 %v534
        %v691 = vunpack.c.l.b16 %v535
        %v692 = vunpack.c.h.b16 %v535
        %v693 = vunpack.c.l.b16 %v536
        %v694 = vunpack.c.h.b16 %v536
        %v695 = vunpack.c.l.b16 %v537
        %v696 = vunpack.c.h.b16 %v537
        %v697 = vunpack.c.l.b16 %v538
        %v698 = vunpack.c.h.b16 %v538
        %v699 = vunpack.c.l.b16 %v539
        %v700 = vunpack.c.h.b16 %v539
        %v701 = vunpack.c.l.b16 %v540
        %v702 = vunpack.c.h.b16 %v540
        %v703 = vunpack.c.l.b16 %v541
        %v704 = vunpack.c.h.b16 %v541
        %v705 = vunpack.c.l.b16 %v542
        %v706 = vunpack.c.h.b16 %v542
        %v707 = vunpack.c.l.b16 %v543
        %v708 = vunpack.c.h.b16 %v543
        %v709 = vunpack.c.l.b16 %v544
        %v710 = vunpack.c.h.b16 %v544
        %v711 = vunpack.c.l.b16 %v545
        %v712 = vunpack.c.h.b16 %v545
        %v713 = vunpack.c.l.b16 %v546
        %v714 = vunpack.c.h.b16 %v546
        %v715 = vunpack.c.l.b16 %v547
        %v716 = vunpack.c.h.b16 %v547
        %v717 = vunpack.c.l.b16 %v548
        %v718 = vunpack.c.h.b16 %v548
        %v719 = vunpack.c.l.b16 %v549
        %v720 = vunpack.c.h.b16 %v549
        %v721 = vunpack.c.l.b16 %v550
        %v722 = vunpack.c.h.b16 %v550
        %v723 = vunpack.c.l.b16 %v551
        %v724 = vunpack.c.h.b16 %v551
        %v725 = vunpack.c.l.b16 %v552
        %v726 = vunpack.c.h.b16 %v552
        %v727 = vunpack.c.l.b16 %v553
        %v728 = vunpack.c.h.b16 %v553
        %v729 = vunpack.c.l.b16 %v554
        %v730 = vunpack.c.h.b16 %v554
        %v731 = vunpack.c.l.b16 %v555
        %v732 = vunpack.c.h.b16 %v555
        %v733 = vunpack.c.l.b16 %v556
        %v734 = vunpack.c.h.b16 %v556
        %v735 = vunpack.c.l.b16 %v557
        %v736 = vunpack.c.h.b16 %v557
        %v737 = vunpack.c.l.b16 %v558
        %v738 = vunpack.c.h.b16 %v558
        %v739 = vunpack.c.l.b16 %v559
        %v740 = vunpack.c.h.b16 %v559
        %v741 = vunpack.c.l.b16 %v560
        %v742 = vunpack.c.h.b16 %v560
        %v743 = vunpack.c.l.b16 %v561
        %v744 = vunpack.c.h.b16 %v561
        %v745 = vunpack.c.l.b16 %v562
        %v746 = vunpack.c.h.b16 %v562
        %v747 = vunpack.c.l.b16 %v563
        %v748 = vunpack.c.h.b16 %v563
        %v749 = vunpack.c.l.b16 %v564
        %v750 = vunpack.c.h.b16 %v564
        %v751 = vunpack.c.l.b16 %v565
        %v752 = vunpack.c.h.b16 %v565
        %v753 = vunpack.c.l.b16 %v566
        %v754 = vunpack.c.h.b16 %v566
        %v755 = vunpack.c.l.b16 %v567
        %v756 = vunpack.c.h.b16 %v567
        %v757 = vunpack.c.l.b16 %v568
        %v758 = vunpack.c.h.b16 %v568
        %v759 = vunpack.c.l.b16 %v569
        %v760 = vunpack.c.h.b16 %v569
        %v761 = vunpack.c.l.b16 %v570
        %v762 = vunpack.c.h.b16 %v570
        %v763 = vpack.c.b16 %v643, %v635
        %v764 = vpack.c.b16 %v644, %v636
        %v765 = vpack.c.b16 %v645, %v637
        %v766 = vpack.c.b16 %v646, %v638
        %v767 = vpack.c.b16 %v647, %v639
        %v768 = vpack.c.b16 %v648, %v640
        %v769 = vpack.c.b16 %v649, %v641
        %v770 = vpack.c.b16 %v650, %v642
        %v771 = vpack.c.b16 %v659, %v651
        %v772 = vpack.c.b16 %v660, %v652
        %v773 = vpack.c.b16 %v661, %v653
        %v774 = vpack.c.b16 %v662, %v654
        %v775 = vpack.c.b16 %v663, %v655
        %v776 = vpack.c.b16 %v664, %v656
        %v777 = vpack.c.b16 %v665, %v657
        %v778 = vpack.c.b16 %v666, %v658
        %v779 = vpack.c.b16 %v675, %v667
        %v780 = vpack.c.b16 %v676, %v668
        %v781 = vpack.c.b16 %v677, %v669
        %v782 = vpack.c.b16 %v678, %v670
        %v783 = vpack.c.b16 %v679, %v671
        %v784 = vpack.c.b16 %v680, %v672
        %v785 = vpack.c.b16 %v681, %v673
        %v786 = vpack.c.b16 %v682, %v674
        %v787 = vpack.c.b16 %v691, %v683
        %v788 = vpack.c.b16 %v692, %v684
        %v789 = vpack.c.b16 %v693, %v685
        %v790 = vpack.c.b16 %v694, %v686
        %v791 = vpack.c.b16 %v695, %v687
        %v792 = vpack.c.b16 %v696, %v688
        %v793 = vpack.c.b16 %v697, %v689
        %v794 = vpack.c.b16 %v698, %v690
        %v795 = vpack.c.b16 %v707, %v699
        %v796 = vpack.c.b16 %v708, %v700
        %v797 = vpack.c.b16 %v709, %v701
        %v798 = vpack.c.b16 %v710, %v702
        %v799 = vpack.c.b16 %v711, %v703
        %v800 = vpack.c.b16 %v712, %v704
        %v801 = vpack.c.b16 %v713, %v705
        %v802 = vpack.c.b16 %v714, %v706
        %v803 = vpack.c.b16 %v723, %v715
        %v804 = vpack.c.b16 %v724, %v716
        %v805 = vpack.c.b16 %v725, %v717
        %v806 = vpack.c.b16 %v726, %v718
        %v807 = vpack.c.b16 %v727, %v719
        %v808 = vpack.c.b16 %v728, %v720
        %v809 = vpack.c.b16 %v729, %v721
        %v810 = vpack.c.b16 %v730, %v722
        %v811 = vpack.c.b16 %v739, %v731
        %v812 = vpack.c.b16 %v740, %v732
        %v813 = vpack.c.b16 %v741, %v733
        %v814 = vpack.c.b16 %v742, %v734
        %v815 = vpack.c.b16 %v743, %v735
        %v816 = vpack.c.b16 %v744, %v736
        %v817 = vpack.c.b16 %v745, %v737
        %v818 = vpack.c.b16 %v746, %v738
        %v819 = vpack.c.b16 %v755, %v747
        %v820 = vpack.c.b16 %v756, %v748
        %v821 = vpack.c.b16 %v757, %v749
        %v822 = vpack.c.b16 %v758, %v750
        %v823 = vpack.c.b16 %v759, %v751
        %v824 = vpack.c.b16 %v760, %v752
        %v825 = vpack.c.b16 %v761, %v753
        %v826 = vpack.c.b16 %v762, %v754
        %891 = vmatprep.subr.bf16.mxu0 %v820
        %892 = vmatpush1.bf16.msra.mxu0 %v819
        %893 = vmatprep.subr.bf16.mxu0 %v812
        %894 = vmatpush1.bf16.msra.mxu0 %v811
        %895 = vmatprep.subr.bf16.mxu0 %v804
        %896 = vmatpush1.bf16.msra.mxu0 %v803
        %897 = vmatprep.subr.bf16.mxu0 %v796
        %898 = vmatpush1.bf16.msra.mxu0 %v795
        %899 = vmatprep.subr.bf16.mxu0 %v788
        %900 = vmatpush1.bf16.msra.mxu0 %v787
        %901 = vmatprep.subr.bf16.mxu0 %v780
        %902 = vmatpush1.bf16.msra.mxu0 %v779
        %903 = vmatprep.subr.bf16.mxu0 %v772
        %904 = vmatpush1.bf16.msra.mxu0 %v771
        %905 = vmatprep.subr.bf16.mxu0 %v764
        %906 = vmatpush1.bf16.msra.mxu0 %v763
        %907 = vmatprep.subr.bf16.mxu0 0
        %908 = vmatpush2.bf16.msra.mxu0 0
        %909 = vmatprep.subr.bf16.mxu0 0
        %910 = vmatpush2.bf16.msra.mxu0 0
        %911 = vmatprep.subr.bf16.mxu0 0
        %912 = vmatpush2.bf16.msra.mxu0 0
        %913 = vmatprep.subr.bf16.mxu0 0
        %914 = vmatpush2.bf16.msra.mxu0 0
        %915 = vmatprep.subr.bf16.mxu0 0
        %916 = vmatpush2.bf16.msra.mxu0 0
        %917 = vmatprep.subr.bf16.mxu0 0
        %918 = vmatpush2.bf16.msra.mxu0 0
        %919 = vmatprep.subr.bf16.mxu0 0
        %920 = vmatpush2.bf16.msra.mxu0 0
        %921 = vmatprep.subr.bf16.mxu0 0
        %922 = vmatpush2.bf16.msra.mxu0 0
        %923 = vmatprep.mubr.bf16.mxu0 0
        %924 = vmatmul.mubr.bf16.gmra.mxu0 %v506
        %v925 = vpop.f32.mrf.mxu0
        %v926 = vadd.f32 0.0, %v925
        %v927 = vpop.f32.mrf.mxu0
        %v928 = vadd.f32 0.0, %v927
        %v929 = vpop.f32.mrf.mxu0
        %v930 = vadd.f32 0.0, %v929
        %v931 = vpop.f32.mrf.mxu0
        %v932 = vadd.f32 0.0, %v931
        %933 = vdwg.mxu0
        %934 = vmatprep.subr.bf16.mxu0 %v822
        %935 = vmatpush1.bf16.msra.mxu0 %v821
        %936 = vmatprep.subr.bf16.mxu0 %v814
        %937 = vmatpush1.bf16.msra.mxu0 %v813
        %938 = vmatprep.subr.bf16.mxu0 %v806
        %939 = vmatpush1.bf16.msra.mxu0 %v805
        %940 = vmatprep.subr.bf16.mxu0 %v798
        %941 = vmatpush1.bf16.msra.mxu0 %v797
        %942 = vmatprep.subr.bf16.mxu0 %v790
        %943 = vmatpush1.bf16.msra.mxu0 %v789
        %944 = vmatprep.subr.bf16.mxu0 %v782
        %945 = vmatpush1.bf16.msra.mxu0 %v781
        %946 = vmatprep.subr.bf16.mxu0 %v774
        %947 = vmatpush1.bf16.msra.mxu0 %v773
        %948 = vmatprep.subr.bf16.mxu0 %v766
        %949 = vmatpush1.bf16.msra.mxu0 %v765
        %950 = vmatprep.subr.bf16.mxu0 0
        %951 = vmatpush2.bf16.msra.mxu0 0
        %952 = vmatprep.subr.bf16.mxu0 0
        %953 = vmatpush2.bf16.msra.mxu0 0
        %954 = vmatprep.subr.bf16.mxu0 0
        %955 = vmatpush2.bf16.msra.mxu0 0
        %956 = vmatprep.subr.bf16.mxu0 0
        %957 = vmatpush2.bf16.msra.mxu0 0
        %958 = vmatprep.subr.bf16.mxu0 0
        %959 = vmatpush2.bf16.msra.mxu0 0
        %960 = vmatprep.subr.bf16.mxu0 0
        %961 = vmatpush2.bf16.msra.mxu0 0
        %962 = vmatprep.subr.bf16.mxu0 0
        %963 = vmatpush2.bf16.msra.mxu0 0
        %964 = vmatprep.subr.bf16.mxu0 0
        %965 = vmatpush2.bf16.msra.mxu0 0
        %966 = vmatprep.mubr.bf16.mxu0 0
        %967 = vmatmul.mubr.bf16.gmra.mxu0 %v506
        %v968 = vpop.f32.mrf.mxu0
        %v969 = vadd.f32 0.0, %v968
        %v970 = vpop.f32.mrf.mxu0
        %v971 = vadd.f32 0.0, %v970
        %v972 = vpop.f32.mrf.mxu0
        %v973 = vadd.f32 0.0, %v972
        %v974 = vpop.f32.mrf.mxu0
        %v975 = vadd.f32 0.0, %v974
        %976 = vdwg.mxu0
        %977 = vmatprep.subr.bf16.mxu0 %v824
        %978 = vmatpush1.bf16.msra.mxu0 %v823
        %979 = vmatprep.subr.bf16.mxu0 %v816
        %980 = vmatpush1.bf16.msra.mxu0 %v815
        %981 = vmatprep.subr.bf16.mxu0 %v808
        %982 = vmatpush1.bf16.msra.mxu0 %v807
        %983 = vmatprep.subr.bf16.mxu0 %v800
        %984 = vmatpush1.bf16.msra.mxu0 %v799
        %985 = vmatprep.subr.bf16.mxu0 %v792
        %986 = vmatpush1.bf16.msra.mxu0 %v791
        %987 = vmatprep.subr.bf16.mxu0 %v784
        %988 = vmatpush1.bf16.msra.mxu0 %v783
        %989 = vmatprep.subr.bf16.mxu0 %v776
        %990 = vmatpush1.bf16.msra.mxu0 %v775
        %991 = vmatprep.subr.bf16.mxu0 %v768
        %992 = vmatpush1.bf16.msra.mxu0 %v767
        %993 = vmatprep.subr.bf16.mxu0 0
        %994 = vmatpush2.bf16.msra.mxu0 0
        %995 = vmatprep.subr.bf16.mxu0 0
        %996 = vmatpush2.bf16.msra.mxu0 0
        %997 = vmatprep.subr.bf16.mxu0 0
        %998 = vmatpush2.bf16.msra.mxu0 0
        %999 = vmatprep.subr.bf16.mxu0 0
        %1000 = vmatpush2.bf16.msra.mxu0 0
        %1001 = vmatprep.subr.bf16.mxu0 0
        %1002 = vmatpush2.bf16.msra.mxu0 0
        %1003 = vmatprep.subr.bf16.mxu0 0
        %1004 = vmatpush2.bf16.msra.mxu0 0
        %1005 = vmatprep.subr.bf16.mxu0 0
        %1006 = vmatpush2.bf16.msra.mxu0 0
        %1007 = vmatprep.subr.bf16.mxu0 0
        %1008 = vmatpush2.bf16.msra.mxu0 0
        %1009 = vmatprep.mubr.bf16.mxu0 0
        %1010 = vmatmul.mubr.bf16.gmra.mxu0 %v506
        %v1011 = vpop.f32.mrf.mxu0
        %v1012 = vadd.f32 0.0, %v1011
        %v1013 = vpop.f32.mrf.mxu0
        %v1014 = vadd.f32 0.0, %v1013
        %v1015 = vpop.f32.mrf.mxu0
        %v1016 = vadd.f32 0.0, %v1015
        %v1017 = vpop.f32.mrf.mxu0
        %v1018 = vadd.f32 0.0, %v1017
        %1019 = vdwg.mxu0
        %1020 = vmatprep.subr.bf16.mxu0 %v826
        %1021 = vmatpush1.bf16.msra.mxu0 %v825
        %1022 = vmatprep.subr.bf16.mxu0 %v818
        %1023 = vmatpush1.bf16.msra.mxu0 %v817
        %1024 = vmatprep.subr.bf16.mxu0 %v810
        %1025 = vmatpush1.bf16.msra.mxu0 %v809
        %1026 = vmatprep.subr.bf16.mxu0 %v802
        %1027 = vmatpush1.bf16.msra.mxu0 %v801
        %1028 = vmatprep.subr.bf16.mxu0 %v794
        %1029 = vmatpush1.bf16.msra.mxu0 %v793
        %1030 = vmatprep.subr.bf16.mxu0 %v786
        %1031 = vmatpush1.bf16.msra.mxu0 %v785
        %1032 = vmatprep.subr.bf16.mxu0 %v778
        %1033 = vmatpush1.bf16.msra.mxu0 %v777
        %1034 = vmatprep.subr.bf16.mxu0 %v770
        %1035 = vmatpush1.bf16.msra.mxu0 %v769
        %1036 = vmatprep.subr.bf16.mxu0 0
        %1037 = vmatpush2.bf16.msra.mxu0 0
        %1038 = vmatprep.subr.bf16.mxu0 0
        %1039 = vmatpush2.bf16.msra.mxu0 0
        %1040 = vmatprep.subr.bf16.mxu0 0
        %1041 = vmatpush2.bf16.msra.mxu0 0
        %1042 = vmatprep.subr.bf16.mxu0 0
        %1043 = vmatpush2.bf16.msra.mxu0 0
        %1044 = vmatprep.subr.bf16.mxu0 0
        %1045 = vmatpush2.bf16.msra.mxu0 0
        %1046 = vmatprep.subr.bf16.mxu0 0
        %1047 = vmatpush2.bf16.msra.mxu0 0
        %1048 = vmatprep.subr.bf16.mxu0 0
        %1049 = vmatpush2.bf16.msra.mxu0 0
        %1050 = vmatprep.subr.bf16.mxu0 0
        %1051 = vmatpush2.bf16.msra.mxu0 0
        %1052 = vmatprep.mubr.bf16.mxu0 0
        %1053 = vmatmul.mubr.bf16.gmra.mxu0 %v506
        %v1054 = vpop.f32.mrf.mxu0
        %v1055 = vadd.f32 0.0, %v1054
        %v1056 = vpop.f32.mrf.mxu0
        %v1057 = vadd.f32 0.0, %v1056
        %v1058 = vpop.f32.mrf.mxu0
        %v1059 = vadd.f32 0.0, %v1058
        %v1060 = vpop.f32.mrf.mxu0
        %v1061 = vadd.f32 0.0, %v1060
        %1062 = vdwg.mxu0
        %v1063 = vmax.f32 %v926, %v930
        %v1064 = vmax.f32 %v928, %v932
        %v1065 = vmax.f32 %v969, %v973
        %v1066 = vmax.f32 %v971, %v975
        %v1067 = vmax.f32 %v1012, %v1016
        %v1068 = vmax.f32 %v1014, %v1018
        %v1069 = vmax.f32 %v1055, %v1059
        %v1070 = vmax.f32 %v1057, %v1061
        %p1071 = scmp.eq.s32.totalorder %s26, 0
        // Predicated region
        $region65: #{pointnet_encoder_forward.3} parent=47 // pred_check
          %p1072 = pneg %p1071
        $region66: #{pointnet_encoder_forward.3} parent=47 // pred_check_branch
          %1074 = sbr.rel (%p1072) target = $region68
        $region67: #{pointnet_encoder_forward.3} parent=47 // pred_region
          %1075 = vst [vmem:[#allocation2] sm:$0xff] %v1063
          %1076 = vst [vmem:[#allocation2 + $0x8] sm:$0xff] %v1064
          %1077 = vst [vmem:[#allocation2 + $0x10] sm:$0xff] %v1065
          %1078 = vst [vmem:[#allocation2 + $0x18] sm:$0xff] %v1066
          %1079 = vst [vmem:[#allocation2 + $0x20] sm:$0xff] %v1067
          %1080 = vst [vmem:[#allocation2 + $0x28] sm:$0xff] %v1068
          %1081 = vst [vmem:[#allocation2 + $0x30] sm:$0xff] %v1069
          %1082 = vst [vmem:[#allocation2 + $0x38] sm:$0xff] %v1070
        $region68: #{pointnet_encoder_forward.3} parent=47 // pred_fallthru
          _
        %p1083 = scmp.ne.s32.totalorder %s26, 0
        // Predicated region
        $region69: #{pointnet_encoder_forward.3} parent=47 // pred_check
          %p1084 = pneg %p1083
        $region70: #{pointnet_encoder_forward.3} parent=47 // pred_check_branch
          %1086 = sbr.rel (%p1084) target = $region72
        $region71: #{pointnet_encoder_forward.3} parent=47 // pred_region
          %v1087 = vld [vmem:[#allocation2] sm:$0xff]
          %v1088 = vld [vmem:[#allocation2 + $0x8] sm:$0xff]
          %v1089 = vld [vmem:[#allocation2 + $0x10] sm:$0xff]
          %v1090 = vld [vmem:[#allocation2 + $0x18] sm:$0xff]
          %v1091 = vld [vmem:[#allocation2 + $0x20] sm:$0xff]
          %v1092 = vld [vmem:[#allocation2 + $0x28] sm:$0xff]
          %v1093 = vld [vmem:[#allocation2 + $0x30] sm:$0xff]
          %v1094 = vld [vmem:[#allocation2 + $0x38] sm:$0xff]
          %v1095 = vmax.f32 %v1087, %v1063
          %v1096 = vmax.f32 %v1088, %v1064
          %v1097 = vmax.f32 %v1089, %v1065
          %v1098 = vmax.f32 %v1090, %v1066
          %v1099 = vmax.f32 %v1091, %v1067
          %v1100 = vmax.f32 %v1092, %v1068
          %v1101 = vmax.f32 %v1093, %v1069
          %v1102 = vmax.f32 %v1094, %v1070
          %1103 = vst [vmem:[#allocation2] sm:$0xff] %v1095
          %1104 = vst [vmem:[#allocation2 + $0x8] sm:$0xff] %v1096
          %1105 = vst [vmem:[#allocation2 + $0x10] sm:$0xff] %v1097
          %1106 = vst [vmem:[#allocation2 + $0x18] sm:$0xff] %v1098
          %1107 = vst [vmem:[#allocation2 + $0x20] sm:$0xff] %v1099
          %1108 = vst [vmem:[#allocation2 + $0x28] sm:$0xff] %v1100
          %1109 = vst [vmem:[#allocation2 + $0x30] sm:$0xff] %v1101
          %1110 = vst [vmem:[#allocation2 + $0x38] sm:$0xff] %v1102
        $region72: #{pointnet_encoder_forward.3} parent=47 // pred_fallthru
          _
        // Predicated region
        $region73: #{pointnet_encoder_forward.3} parent=47 // pred_check
          %p1111 = pneg %p1071
        $region74: #{pointnet_encoder_forward.3} parent=47 // pred_check_branch
          %1113 = sbr.rel (%p1111) target = $region76
        $region75: #{pointnet_encoder_forward.3} parent=47 // pred_region
          %v1114 = vld [vmem:[#allocation2] sm:$0xff]
          %v1115 = vld [vmem:[#allocation2 + $0x8] sm:$0xff]
          %v1116 = vld [vmem:[#allocation2 + $0x10] sm:$0xff]
          %v1117 = vld [vmem:[#allocation2 + $0x18] sm:$0xff]
          %v1118 = vld [vmem:[#allocation2 + $0x20] sm:$0xff]
          %v1119 = vld [vmem:[#allocation2 + $0x28] sm:$0xff]
          %v1120 = vld [vmem:[#allocation2 + $0x30] sm:$0xff]
          %v1121 = vld [vmem:[#allocation2 + $0x38] sm:$0xff]
          %v1122 = vrot.slane %v1114, 4
          %v1123 = vmax.f32 %v1114, %v1122
          %v1124 = vrot.slane %v1123, 2
          %v1125 = vmax.f32 %v1123, %v1124
          %v1126 = vrot.slane %v1125, 1
          %v1127 = vmax.f32 %v1125, %v1126
          %v1128 = vrot.slane %v1115, 4
          %v1129 = vmax.f32 %v1115, %v1128
          %v1130 = vrot.slane %v1129, 2
          %v1131 = vmax.f32 %v1129, %v1130
          %v1132 = vrot.slane %v1131, 1
          %v1133 = vmax.f32 %v1131, %v1132
          %v1134 = vrot.slane %v1116, 4
          %v1135 = vmax.f32 %v1116, %v1134
          %v1136 = vrot.slane %v1135, 2
          %v1137 = vmax.f32 %v1135, %v1136
          %v1138 = vrot.slane %v1137, 1
          %v1139 = vmax.f32 %v1137, %v1138
          %v1140 = vrot.slane %v1117, 4
          %v1141 = vmax.f32 %v1117, %v1140
          %v1142 = vrot.slane %v1141, 2
          %v1143 = vmax.f32 %v1141, %v1142
          %v1144 = vrot.slane %v1143, 1
          %v1145 = vmax.f32 %v1143, %v1144
          %v1146 = vrot.slane %v1118, 4
          %v1147 = vmax.f32 %v1118, %v1146
          %v1148 = vrot.slane %v1147, 2
          %v1149 = vmax.f32 %v1147, %v1148
          %v1150 = vrot.slane %v1149, 1
          %v1151 = vmax.f32 %v1149, %v1150
          %v1152 = vrot.slane %v1119, 4
          %v1153 = vmax.f32 %v1119, %v1152
          %v1154 = vrot.slane %v1153, 2
          %v1155 = vmax.f32 %v1153, %v1154
          %v1156 = vrot.slane %v1155, 1
          %v1157 = vmax.f32 %v1155, %v1156
          %v1158 = vrot.slane %v1120, 4
          %v1159 = vmax.f32 %v1120, %v1158
          %v1160 = vrot.slane %v1159, 2
          %v1161 = vmax.f32 %v1159, %v1160
          %v1162 = vrot.slane %v1161, 1
          %v1163 = vmax.f32 %v1161, %v1162
          %v1164 = vrot.slane %v1121, 4
          %v1165 = vmax.f32 %v1121, %v1164
          %v1166 = vrot.slane %v1165, 2
          %v1167 = vmax.f32 %v1165, %v1166
          %v1168 = vrot.slane %v1167, 1
          %v1169 = vmax.f32 %v1167, %v1168
          %v1170 = vld [vmem:[#allocation8] sm:$0xff]
          %v1172 = vlaneseq
          %v1173 = vshrl.u32 %v1172, 7
          %v1174 = vsub.s32 0, %v1173
          %v1175 = vrot.slane %v1170, %v1174
          %v1176 = vlaneseq
          %v1177 = vshrl.u32 %v1176, 7
          %v1178 = vsub.s32 1, %v1177
          %v1179 = vrot.slane %v1170, %v1178
          %v1180 = vlaneseq
          %v1181 = vshrl.u32 %v1180, 7
          %v1182 = vsub.s32 2, %v1181
          %v1183 = vrot.slane %v1170, %v1182
          %v1184 = vlaneseq
          %v1185 = vshrl.u32 %v1184, 7
          %v1186 = vsub.s32 3, %v1185
          %v1187 = vrot.slane %v1170, %v1186
          %v1188 = vlaneseq
          %v1189 = vshrl.u32 %v1188, 7
          %v1190 = vsub.s32 4, %v1189
          %v1191 = vrot.slane %v1170, %v1190
          %v1192 = vlaneseq
          %v1193 = vshrl.u32 %v1192, 7
          %v1194 = vsub.s32 5, %v1193
          %v1195 = vrot.slane %v1170, %v1194
          %v1196 = vlaneseq
          %v1197 = vshrl.u32 %v1196, 7
          %v1198 = vsub.s32 6, %v1197
          %v1199 = vrot.slane %v1170, %v1198
          %v1200 = vlaneseq
          %v1201 = vshrl.u32 %v1200, 7
          %v1202 = vsub.s32 7, %v1201
          %v1203 = vrot.slane %v1170, %v1202
          %v1212 = vadd.f32 %v1127, %v1175
          %v1213 = vadd.f32 %v1133, %v1179
          %v1214 = vadd.f32 %v1139, %v1183
          %v1215 = vadd.f32 %v1145, %v1187
          %v1216 = vadd.f32 %v1151, %v1191
          %v1217 = vadd.f32 %v1157, %v1195
          %v1218 = vadd.f32 %v1163, %v1199
          %v1219 = vadd.f32 %v1169, %v1203
          %v1220 = vmax.f32 %v1212, 0.0
          %v1221 = vmax.f32 %v1213, 0.0
          %v1222 = vmax.f32 %v1214, 0.0
          %v1223 = vmax.f32 %v1215, 0.0
          %v1224 = vmax.f32 %v1216, 0.0
          %v1225 = vmax.f32 %v1217, 0.0
          %v1226 = vmax.f32 %v1218, 0.0
          %v1227 = vmax.f32 %v1219, 0.0
          %v1236 = vcombine.low %v1220, %v1221
          %v1237 = vcombine.low %v1222, %v1223
          %v1238 = vcombine.low %v1224, %v1225
          %v1239 = vcombine.low %v1226, %v1227
          %v1241 = vunpack.c.l.s4 1966171168
          %v1242 = vunpack.c.0.s8 %v1241
          %v1243 = vlaneseq
          %v1244 = vshrl.u32 %v1243, 7
          %v1245 = vsub.s32 %v1242, %v1244
          %v1246 = vrot.slane %v1236, %v1245
          %v1248 = vunpack.c.l.s4 1966171168
          %v1249 = vunpack.c.0.s8 %v1248
          %v1250 = vlaneseq
          %v1251 = vshrl.u32 %v1250, 7
          %v1252 = vsub.s32 %v1249, %v1251
          %v1253 = vrot.slane %v1237, %v1252
          %v1255 = vunpack.c.l.s4 1966171168
          %v1256 = vunpack.c.0.s8 %v1255
          %v1257 = vlaneseq
          %v1258 = vshrl.u32 %v1257, 7
          %v1259 = vsub.s32 %v1256, %v1258
          %v1260 = vrot.slane %v1238, %v1259
          %v1262 = vunpack.c.l.s4 1966171168
          %v1263 = vunpack.c.0.s8 %v1262
          %v1264 = vlaneseq
          %v1265 = vshrl.u32 %v1264, 7
          %v1266 = vsub.s32 %v1263, %v1265
          %v1267 = vrot.slane %v1239, %v1266
          %v1268 = vcombine.low %v1246, %v1253
          %v1269 = vcombine.low %v1260, %v1267
          %v1271 = vunpack.c.l.s4 1966171168
          %v1272 = vunpack.c.0.s8 %v1271
          %v1273 = vlaneseq
          %v1274 = vshrl.u32 %v1273, 7
          %v1275 = vsub.s32 %v1272, %v1274
          %v1276 = vrot.slane %v1268, %v1275
          %v1278 = vunpack.c.l.s4 1966171168
          %v1279 = vunpack.c.0.s8 %v1278
          %v1280 = vlaneseq
          %v1281 = vshrl.u32 %v1280, 7
          %v1282 = vsub.s32 %v1279, %v1281
          %v1283 = vrot.slane %v1269, %v1282
          %v1284 = vcombine.low %v1276, %v1283
          %1286 = vst [vmem:[%s355] sm:$0xff] %v1284
        $region76: #{pointnet_encoder_forward.3} parent=47 // pred_fallthru
          _
        %p1287 = scmp.lt.s32.totalorder %s25, 1
        %s1288 = scalar_select %p1287, %s25, 1
        %s1289 = smul.addr %s1288, 8
        %s1290 = scalar_lea.vmem %s7, %s1289
        // Predicated region
        $region77: #{pointnet_encoder_forward.3} parent=47 // pred_check
          %p1291 = pneg %p205
        $region78: #{pointnet_encoder_forward.3} parent=47 // pred_check_branch
          %1293 = sbr.rel (%p1291) target = $region80
        $region79: #{pointnet_encoder_forward.3} parent=47 // pred_region
          _
        $region80: #{pointnet_encoder_forward.3} parent=47 // pred_fallthru
          _
      $region48: #{pointnet_encoder_forward.3} parent=5 // pred_fallthru
        _
      %p1294 = scmp.le.s32.totalorder 2, %s16
      // Predicated region
      $region81: #{pointnet_encoder_forward.3} parent=5 // pred_check
        %p1295 = pneg %p1294
      $region82: #{pointnet_encoder_forward.3} parent=5 // pred_check_branch
        %1297 = sbr.rel (%p1295) target = $region84
      $region83: #{pointnet_encoder_forward.3} parent=5 // pred_region
        %s1298 = ssub.s32 %s16, 2
        // Predicated region
        $region85: #{pointnet_encoder_forward.3} parent=83 // pred_check
          %p1299 = pneg %p211
        $region86: #{pointnet_encoder_forward.3} parent=83 // pred_check_branch
          %1301 = sbr.rel (%p1299) target = $region88
        $region87: #{pointnet_encoder_forward.3} parent=83 // pred_region
          %p1302 = scmp.lt.s32.totalorder %s27, 1
          %s1303 = scalar_select %p1302, %s27, 1
          %s1304 = smul.addr %s1303, 8
          %s1305 = scalar_lea.vmem %s7, %s1304
        $region88: #{pointnet_encoder_forward.3} parent=83 // pred_fallthru
          _
      $region84: #{pointnet_encoder_forward.3} parent=5 // pred_fallthru
        _
    $region6: #{pointnet_encoder_forward.3} parent=1 // loop_footer
      %s20 = sadd.s32 1, %s16
    $region7: #{pointnet_encoder_forward.3} parent=1 // loop_footer_branch
      %15 = sbr.rel target = $region3
    $region8: #{pointnet_encoder_forward.3} parent=1 // loop_exit
      _
    %1306 = vsyncpa [#allocation4], 1
    %s1307 = scalar_lea.sflag [#allocation4], 1
    %1308 = vsyncpa %s1307, 1
    %1309 = vsyncpa [#allocation6], 1
    %1310 = vsyncpa [#allocation9], 1

// kernel: pointnet_encoder_forward.5
$region0: #{pointnet_encoder_forward.5}
  #allocation0 [shape = 'u32[]', space=smem, size = 0x4, offset = 0x4, fixed_abs, tag = 'smem constant byte address 0x4 - core index']
  #allocation1 [shape = 'u32[144,128]{1,0:T(1,128)}', space=vmem, size = 0x12000, scoped, tag = 'internal scratch']
  #allocation2 [shape = 'f32[8,1024]{1,0:T(8,128)}', space=vmem, size = 0x8000, scoped, tag = 'scratch operand']
  %s0 = inlined_call_operand.vmem [shape: f32[2,16,3], index: 0, kind: input, shape index: {}]
  %s1 = inlined_call_operand.vmem [shape: f32[2,3,64], index: 1, kind: input, shape index: {}]
  %s2 = inlined_call_operand.vmem [shape: f32[1,64], index: 2, kind: input, shape index: {}]
  %s3 = inlined_call_operand.vmem [shape: bf16[64,128], index: 3, kind: input, shape index: {}]
  %s4 = inlined_call_operand.vmem [shape: f32[1,128], index: 4, kind: input, shape index: {}]
  %s5 = inlined_call_operand.vmem [shape: bf16[128,1024], index: 5, kind: input, shape index: {}]
  %s6 = inlined_call_operand.vmem [shape: f32[1,1024], index: 6, kind: input, shape index: {}]
  %s7 = inlined_call_operand.vmem [shape: f32[2,1,1024], index: 7, kind: output, shape index: {}]
  %s8 = sld [smem:[#allocation0]]
  $region73: #{pointnet_encoder_forward.5} parent=0
    _
  %s10 = ssub.s32 1, %s8
  %s11 = scalar_select 0, %s10, %s8
  loop: start=0, step=1, limit=4
  $region2: #{pointnet_encoder_forward.5} parent=0 // loop_pre_header
    _
  $region3: #{pointnet_encoder_forward.5} parent=0 // loop_header
    %s13 = sphi 0, %s17
    %p14 = scmp.ge.s32.totalorder %s13, 4
    %s20 = sphi 0, %s32
    %s21 = sphi 0, %s28
    %s22 = sphi 0, %s20
    %s23 = sphi 0, %s21
    %s24 = sphi 0, %s22
    %s25 = sphi 0, %s23
    %s37 = sphi 0, %s39
    %s40 = sphi 0, %s37
    %s41 = sphi 0, %s40
    %s57 = sphi 0, %s41
    %s63 = sphi 0, %s65
    %s66 = sphi 0, %s63
    %s67 = sphi 0, %s66
    %s83 = sphi 0, %s67
    %s87 = sphi 0, %s87
    %s89 = sphi 0, %s87
    %s90 = sphi 0, %s89
    %s104 = sphi 0, %s90
    %s108 = sphi 0, %s108
    %s110 = sphi 0, %s108
    %s111 = sphi 0, %s110
    %s125 = sphi 0, %s111
    %s129 = sphi 0, %s129
    %s131 = sphi 0, %s129
    %s132 = sphi 0, %s131
    %s146 = sphi 0, %s132
    %s150 = sphi 0, %s150
    %s152 = sphi 0, %s150
    %s153 = sphi 0, %s152
    %s167 = sphi 0, %s153
    %s171 = sphi 0, %s171
    %s173 = sphi 0, %s171
    %s174 = sphi 0, %s173
    %s188 = sphi 0, %s174
    %s194 = sphi 0, %s196
    %s197 = sphi 0, %s194
    %s198 = sphi 0, %s197
    %s214 = sphi 0, %s198
  $region4: #{pointnet_encoder_forward.5} parent=0 // loop_header_branch
    %16 = sbr.rel (%p14) target = $region8
  $region5: #{pointnet_encoder_forward.5} parent=0 // loop_body
    %s18 = ssub.s32 %s13, 1
    %s19 = ssub.s32 %s13, 2
    %s26 = sadd.s32 1, %s21
    %p27 = scmp.ge.s32.totalorder %s26, 1
    %s28 = scalar_select %p27, 0, %s26
    %s29 = sadd.s32 1, %s20
    %s30 = scalar_select %p27, %s29, %s20
    %p31 = scmp.ge.s32.totalorder %s30, 2
    %s32 = scalar_select %p31, 0, %s30
    %s33 = ssub.s32 %s20, %s32
    %s34 = ssub.s32 %s21, %s28
    %s35 = sor.u32 %s33, %s34
    %p36 = scmp.eq.s32.totalorder %s35, 0
    %s38 = sadd.s32 %s37, 1
    %s39 = scalar_select %p36, %s37, %s38
    %p42 = pneg %p36
    %p43 = scmp.eq.s32.totalorder %s13, 1
    %p44 = por %p42, %p43
    %p45 = scmp.ne.s32.totalorder %s37, %s40
    %p46 = scmp.eq.s32.totalorder %s13, 0
    %p47 = por %p45, %p46
    %p48 = scmp.ne.s32.totalorder %s37, %s40
    %p49 = scmp.eq.s32.totalorder %s18, 1
    %p50 = por %p48, %p49
    %p51 = scmp.ne.s32.totalorder %s40, %s41
    %p52 = scmp.eq.s32.totalorder %s18, 0
    %p53 = por %p51, %p52
    %p54 = scmp.ne.s32.totalorder %s40, %s41
    %p55 = scmp.eq.s32.totalorder %s19, 1
    %p56 = por %p54, %p55
    %p58 = scmp.ne.s32.totalorder %s41, %s57
    %p59 = scmp.eq.s32.totalorder %s19, 0
    %p60 = por %p58, %p59
    %s61 = ssub.s32 %s20, %s32
    %p62 = scmp.eq.s32.totalorder %s61, 0
    %s64 = sadd.s32 %s63, 1
    %s65 = scalar_select %p62, %s63, %s64
    %p68 = pneg %p62
    %p69 = scmp.eq.s32.totalorder %s13, 1
    %p70 = por %p68, %p69
    %p71 = scmp.ne.s32.totalorder %s63, %s66
    %p72 = scmp.eq.s32.totalorder %s13, 0
    %p73 = por %p71, %p72
    %p74 = scmp.ne.s32.totalorder %s63, %s66
    %p75 = scmp.eq.s32.totalorder %s18, 1
    %p76 = por %p74, %p75
    %p77 = scmp.ne.s32.totalorder %s66, %s67
    %p78 = scmp.eq.s32.totalorder %s18, 0
    %p79 = por %p77, %p78
    %p80 = scmp.ne.s32.totalorder %s66, %s67
    %p81 = scmp.eq.s32.totalorder %s19, 1
    %p82 = por %p80, %p81
    %p84 = scmp.ne.s32.totalorder %s67, %s83
    %p85 = scmp.eq.s32.totalorder %s19, 0
    %p86 = por %p84, %p85
    %s88 = sadd.s32 %s87, 1
    %p91 = scmp.eq.s32.totalorder %s13, 1
    %p92 = scmp.ne.s32.totalorder %s87, %s89
    %p93 = scmp.eq.s32.totalorder %s13, 0
    %p94 = por %p92, %p93
    %p95 = scmp.ne.s32.totalorder %s87, %s89
    %p96 = scmp.eq.s32.totalorder %s18, 1
    %p97 = por %p95, %p96
    %p98 = scmp.ne.s32.totalorder %s89, %s90
    %p99 = scmp.eq.s32.totalorder %s18, 0
    %p100 = por %p98, %p99
    %p101 = scmp.ne.s32.totalorder %s89, %s90
    %p102 = scmp.eq.s32.totalorder %s19, 1
    %p103 = por %p101, %p102
    %p105 = scmp.ne.s32.totalorder %s90, %s104
    %p106 = scmp.eq.s32.totalorder %s19, 0
    %p107 = por %p105, %p106
    %s109 = sadd.s32 %s108, 1
    %p112 = scmp.eq.s32.totalorder %s13, 1
    %p113 = scmp.ne.s32.totalorder %s108, %s110
    %p114 = scmp.eq.s32.totalorder %s13, 0
    %p115 = por %p113, %p114
    %p116 = scmp.ne.s32.totalorder %s108, %s110
    %p117 = scmp.eq.s32.totalorder %s18, 1
    %p118 = por %p116, %p117
    %p119 = scmp.ne.s32.totalorder %s110, %s111
    %p120 = scmp.eq.s32.totalorder %s18, 0
    %p121 = por %p119, %p120
    %p122 = scmp.ne.s32.totalorder %s110, %s111
    %p123 = scmp.eq.s32.totalorder %s19, 1
    %p124 = por %p122, %p123
    %p126 = scmp.ne.s32.totalorder %s111, %s125
    %p127 = scmp.eq.s32.totalorder %s19, 0
    %p128 = por %p126, %p127
    %s130 = sadd.s32 %s129, 1
    %p133 = scmp.eq.s32.totalorder %s13, 1
    %p134 = scmp.ne.s32.totalorder %s129, %s131
    %p135 = scmp.eq.s32.totalorder %s13, 0
    %p136 = por %p134, %p135
    %p137 = scmp.ne.s32.totalorder %s129, %s131
    %p138 = scmp.eq.s32.totalorder %s18, 1
    %p139 = por %p137, %p138
    %p140 = scmp.ne.s32.totalorder %s131, %s132
    %p141 = scmp.eq.s32.totalorder %s18, 0
    %p142 = por %p140, %p141
    %p143 = scmp.ne.s32.totalorder %s131, %s132
    %p144 = scmp.eq.s32.totalorder %s19, 1
    %p145 = por %p143, %p144
    %p147 = scmp.ne.s32.totalorder %s132, %s146
    %p148 = scmp.eq.s32.totalorder %s19, 0
    %p149 = por %p147, %p148
    %s151 = sadd.s32 %s150, 1
    %p154 = scmp.eq.s32.totalorder %s13, 1
    %p155 = scmp.ne.s32.totalorder %s150, %s152
    %p156 = scmp.eq.s32.totalorder %s13, 0
    %p157 = por %p155, %p156
    %p158 = scmp.ne.s32.totalorder %s150, %s152
    %p159 = scmp.eq.s32.totalorder %s18, 1
    %p160 = por %p158, %p159
    %p161 = scmp.ne.s32.totalorder %s152, %s153
    %p162 = scmp.eq.s32.totalorder %s18, 0
    %p163 = por %p161, %p162
    %p164 = scmp.ne.s32.totalorder %s152, %s153
    %p165 = scmp.eq.s32.totalorder %s19, 1
    %p166 = por %p164, %p165
    %p168 = scmp.ne.s32.totalorder %s153, %s167
    %p169 = scmp.eq.s32.totalorder %s19, 0
    %p170 = por %p168, %p169
    %s172 = sadd.s32 %s171, 1
    %p175 = scmp.eq.s32.totalorder %s13, 1
    %p176 = scmp.ne.s32.totalorder %s171, %s173
    %p177 = scmp.eq.s32.totalorder %s13, 0
    %p178 = por %p176, %p177
    %p179 = scmp.ne.s32.totalorder %s171, %s173
    %p180 = scmp.eq.s32.totalorder %s18, 1
    %p181 = por %p179, %p180
    %p182 = scmp.ne.s32.totalorder %s173, %s174
    %p183 = scmp.eq.s32.totalorder %s18, 0
    %p184 = por %p182, %p183
    %p185 = scmp.ne.s32.totalorder %s173, %s174
    %p186 = scmp.eq.s32.totalorder %s19, 1
    %p187 = por %p185, %p186
    %p189 = scmp.ne.s32.totalorder %s174, %s188
    %p190 = scmp.eq.s32.totalorder %s19, 0
    %p191 = por %p189, %p190
    %s192 = ssub.s32 %s20, %s32
    %p193 = scmp.eq.s32.totalorder %s192, 0
    %s195 = sadd.s32 %s194, 1
    %s196 = scalar_select %p193, %s194, %s195
    %p199 = pneg %p193
    %p200 = scmp.eq.s32.totalorder %s13, 1
    %p201 = por %p199, %p200
    %p202 = scmp.ne.s32.totalorder %s194, %s197
    %p203 = scmp.eq.s32.totalorder %s13, 0
    %p204 = por %p202, %p203
    %p205 = scmp.ne.s32.totalorder %s194, %s197
    %p206 = scmp.eq.s32.totalorder %s18, 1
    %p207 = por %p205, %p206
    %p208 = scmp.ne.s32.totalorder %s197, %s198
    %p209 = scmp.eq.s32.totalorder %s18, 0
    %p210 = por %p208, %p209
    %p211 = scmp.ne.s32.totalorder %s197, %s198
    %p212 = scmp.eq.s32.totalorder %s19, 1
    %p213 = por %p211, %p212
    %p215 = scmp.ne.s32.totalorder %s198, %s214
    %p216 = scmp.eq.s32.totalorder %s19, 0
    %p217 = por %p215, %p216
    %p218 = scmp.le.s32.totalorder 1, %s13
    %p219 = scmp.lt.s32.totalorder %s13, 3
    %p220 = pnand %p218, %p219
    %p221 = pneg %p220
    // Predicated region
    $region9: #{pointnet_encoder_forward.5} parent=5 // pred_check
      _
    $region10: #{pointnet_encoder_forward.5} parent=5 // pred_check_branch
      %223 = sbr.rel (%p220) target = $region12
    $region11: #{pointnet_encoder_forward.5} parent=5 // pred_region
      %s224 = ssub.s32 %s13, 1
      // Predicated region
      $region13: #{pointnet_encoder_forward.5} parent=11 // pred_check
        %p225 = pneg %p100
      $region14: #{pointnet_encoder_forward.5} parent=11 // pred_check_branch
        %227 = sbr.rel (%p225) target = $region16
      $region15: #{pointnet_encoder_forward.5} parent=11 // pred_region
        _
      $region16: #{pointnet_encoder_forward.5} parent=11 // pred_fallthru
        _
      // Predicated region
      $region17: #{pointnet_encoder_forward.5} parent=11 // pred_check
        %p228 = pneg %p121
      $region18: #{pointnet_encoder_forward.5} parent=11 // pred_check_branch
        %230 = sbr.rel (%p228) target = $region20
      $region19: #{pointnet_encoder_forward.5} parent=11 // pred_region
        _
      $region20: #{pointnet_encoder_forward.5} parent=11 // pred_fallthru
        _
      // Predicated region
      $region21: #{pointnet_encoder_forward.5} parent=11 // pred_check
        %p231 = pneg %p142
      $region22: #{pointnet_encoder_forward.5} parent=11 // pred_check_branch
        %233 = sbr.rel (%p231) target = $region24
      $region23: #{pointnet_encoder_forward.5} parent=11 // pred_region
        _
      $region24: #{pointnet_encoder_forward.5} parent=11 // pred_fallthru
        _
      // Predicated region
      $region25: #{pointnet_encoder_forward.5} parent=11 // pred_check
        %p234 = pneg %p163
      $region26: #{pointnet_encoder_forward.5} parent=11 // pred_check_branch
        %236 = sbr.rel (%p234) target = $region28
      $region27: #{pointnet_encoder_forward.5} parent=11 // pred_region
        _
      $region28: #{pointnet_encoder_forward.5} parent=11 // pred_fallthru
        _
      // Predicated region
      $region29: #{pointnet_encoder_forward.5} parent=11 // pred_check
        %p237 = pneg %p184
      $region30: #{pointnet_encoder_forward.5} parent=11 // pred_check_branch
        %239 = sbr.rel (%p237) target = $region32
      $region31: #{pointnet_encoder_forward.5} parent=11 // pred_region
        _
      $region32: #{pointnet_encoder_forward.5} parent=11 // pred_fallthru
        _
    $region12: #{pointnet_encoder_forward.5} parent=5 // pred_fallthru
      _
    %p240 = scmp.lt.s32.totalorder %s13, 2
    // Predicated region
    $region33: #{pointnet_encoder_forward.5} parent=5 // pred_check
      %p241 = pneg %p240
    $region34: #{pointnet_encoder_forward.5} parent=5 // pred_check_branch
      %243 = sbr.rel (%p241) target = $region36
    $region35: #{pointnet_encoder_forward.5} parent=5 // pred_region
      // Predicated region
      $region37: #{pointnet_encoder_forward.5} parent=35 // pred_check
        %p244 = pneg %p47
      $region38: #{pointnet_encoder_forward.5} parent=35 // pred_check_branch
        %246 = sbr.rel (%p244) target = $region40
      $region39: #{pointnet_encoder_forward.5} parent=35 // pred_region
        %s247 = smul.u32 2, %s21
        %p248 = scmp.lt.s32.totalorder %s20, 1
        %s249 = scalar_select %p248, %s20, 1
        %p250 = scmp.lt.s32.totalorder %s247, 1
        %s251 = scalar_select %p250, %s247, 1
        %s252 = smul.addr %s249, 2
        %s253 = sadd.s32 %s251, %s252
        %s254 = smul.addr %s253, 8
        %s255 = scalar_lea.vmem %s0, %s254
        %s256 = smul.u32 2, %s21
      $region40: #{pointnet_encoder_forward.5} parent=35 // pred_fallthru
        _
      // Predicated region
      $region41: #{pointnet_encoder_forward.5} parent=35 // pred_check
        %p257 = pneg %p73
      $region42: #{pointnet_encoder_forward.5} parent=35 // pred_check_branch
        %259 = sbr.rel (%p257) target = $region44
      $region43: #{pointnet_encoder_forward.5} parent=35 // pred_region
        %p260 = scmp.lt.s32.totalorder %s20, 1
        %s261 = scalar_select %p260, %s20, 1
        %s262 = smul.addr %s261, 4
        %s263 = scalar_lea.vmem %s1, %s262
      $region44: #{pointnet_encoder_forward.5} parent=35 // pred_fallthru
        _
    $region36: #{pointnet_encoder_forward.5} parent=5 // pred_fallthru
      _
    %p264 = scmp.le.s32.totalorder 1, %s13
    %p265 = scmp.lt.s32.totalorder %s13, 3
    %p266 = pnand %p264, %p265
    %p267 = pneg %p266
    // Predicated region
    $region45: #{pointnet_encoder_forward.5} parent=5 // pred_check
      _
    $region46: #{pointnet_encoder_forward.5} parent=5 // pred_check_branch
      %269 = sbr.rel (%p266) target = $region48
    $region47: #{pointnet_encoder_forward.5} parent=5 // pred_region
      %s270 = ssub.s32 %s13, 1
      %s271 = smul.u32 2, %s23
      %p272 = scmp.lt.s32.totalorder %s22, 1
      %s273 = scalar_select %p272, %s22, 1
      %p274 = scmp.lt.s32.totalorder %s271, 1
      %s275 = scalar_select %p274, %s271, 1
      %s276 = smul.addr %s273, 2
      %s277 = sadd.s32 %s275, %s276
      %s278 = smul.addr %s277, 8
      %s279 = scalar_lea.vmem %s0, %s278
      %p280 = pneg %p53
      %p281 = pneg %p50
      %p282 = scmp.lt.s32.totalorder %s22, 1
      %s283 = scalar_select %p282, %s22, 1
      %s284 = smul.addr %s283, 4
      %s285 = scalar_lea.vmem %s1, %s284
      %p286 = pneg %p79
      %p287 = pneg %p76
      %p288 = pneg %p100
      %p289 = pneg %p97
      %p290 = pneg %p121
      %p291 = pneg %p118
      %p292 = pneg %p142
      %p293 = pneg %p139
      %p294 = pneg %p163
      %p295 = pneg %p160
      %p296 = pneg %p184
      %p297 = pneg %p181
      %p298 = pneg %p210
      %p299 = pneg %p207
      %p300 = scmp.lt.s32.totalorder %s22, 1
      %s301 = scalar_select %p300, %s22, 1
      %s302 = smul.addr %s301, 8
      %s303 = scalar_lea.vmem %s7, %s302
      %s304 = smul.u32 2, %s23
      %p305 = scmp.lt.s32.totalorder %s22, 1
      %s306 = scalar_select %p305, %s22, 1
      %p307 = scmp.lt.s32.totalorder %s304, 1
      %s308 = scalar_select %p307, %s304, 1
      %s309 = smul.addr %s306, 2
      %s310 = sadd.s32 %s308, %s309
      %s311 = smul.addr %s310, 8
      %s312 = scalar_lea.vmem %s0, %s311
      %s313 = smul.u32 2, %s23
      %p314 = scmp.lt.s32.totalorder %s22, 1
      %s315 = scalar_select %p314, %s22, 1
      %s316 = smul.addr %s315, 4
      %s317 = scalar_lea.vmem %s1, %s316
      %p318 = scmp.lt.s32.totalorder %s22, 1
      %s319 = scalar_select %p318, %s22, 1
      %s320 = smul.addr %s319, 8
      %s321 = scalar_lea.vmem %s7, %s320
      %v323 = vld [vmem:[%s312] sm:$0xff]
      %v324 = vld [vmem:[%s312 + $0x8] sm:$0xff]
      %v325 = vld [vmem:[%s317] sm:$0x7]
      %327 = vset.pattern.permute.xlu0 0
      %328 = vperm.xlu0 %327, %v323
      %v329 = vpop.permute.xlu0 %328
      %332 = vset.pattern.permute.xlu0 0
      %333 = vperm.xlu0 %332, %v324
      %v334 = vpop.permute.xlu0 %333
      %v336 = vlaneseq
      %v337 = vshrl.u32 %v336, 7
      %v338 = vsub.s32 0, %v337
      %v339 = vrot.slane %v325, %v338
      %v340 = vmul.f32 %v329, %v339
      %v341 = vmul.f32 %v334, %v339
      %342 = vset.pattern.permute.xlu0 1
      %343 = vperm.xlu0 %342, %v323
      %v344 = vpop.permute.xlu0 %343
      %346 = vset.pattern.permute.xlu0 1
      %347 = vperm.xlu0 %346, %v324
      %v348 = vpop.permute.xlu0 %347
      %v350 = vlaneseq
      %v351 = vshrl.u32 %v350, 7
      %v352 = vsub.s32 1, %v351
      %v353 = vrot.slane %v325, %v352
      %v354 = vmul.f32 %v344, %v353
      %v355 = vmul.f32 %v348, %v353
      %v356 = vadd.f32 %v340, %v354
      %v357 = vadd.f32 %v341, %v355
      %358 = vset.pattern.permute.xlu0 2
      %359 = vperm.xlu0 %358, %v323
      %v360 = vpop.permute.xlu0 %359
      %362 = vset.pattern.permute.xlu0 2
      %363 = vperm.xlu0 %362, %v324
      %v364 = vpop.permute.xlu0 %363
      %v366 = vlaneseq
      %v367 = vshrl.u32 %v366, 7
      %v368 = vsub.s32 2, %v367
      %v369 = vrot.slane %v325, %v368
      %v370 = vmul.f32 %v360, %v369
      %v371 = vmul.f32 %v364, %v369
      %v372 = vadd.f32 %v356, %v370
      %v373 = vadd.f32 %v357, %v371
      %v374 = vld [vmem:[%s2] sm:$0x1]
      %v376 = vlaneseq
      %v377 = vshrl.u32 %v376, 7
      %v378 = vsub.s32 0, %v377
      %v379 = vrot.slane %v374, %v378
      %v381 = vadd.f32 %v372, %v379
      %v382 = vadd.f32 %v373, %v379
      %v383 = vmax.f32 %v381, 0.0
      %v384 = vmax.f32 %v382, 0.0
      %v385 = vpack.c.bf16 %v384, %v383
      %v386 = vld [vmem:[%s3] sm:$0xf]
      %v387 = vld [vmem:[%s3 + $0x4] sm:$0xf]
      %v388 = vld [vmem:[%s3 + $0x8] sm:$0xf]
      %v389 = vld [vmem:[%s3 + $0xc] sm:$0xf]
      %v390 = vld [vmem:[%s3 + $0x10] sm:$0xf]
      %v391 = vld [vmem:[%s3 + $0x14] sm:$0xf]
      %v392 = vld [vmem:[%s3 + $0x18] sm:$0xf]
      %v393 = vld [vmem:[%s3 + $0x1c] sm:$0xf]
      %v394 = vld [vmem:[%s4] sm:$0x1]
      %v396 = vlaneseq
      %v397 = vshrl.u32 %v396, 7
      %v398 = vsub.s32 0, %v397
      %v399 = vrot.slane %v394, %v398
      %v409 = vunpack.c.l.b16 %v386
      %v410 = vunpack.c.l.b16 %v387
      %v411 = vunpack.c.l.b16 %v388
      %v412 = vunpack.c.l.b16 %v389
      %v413 = vunpack.c.l.b16 %v390
      %v414 = vunpack.c.l.b16 %v391
      %v415 = vunpack.c.l.b16 %v392
      %v416 = vunpack.c.l.b16 %v393
      %v417 = vpack.c.b16 %v410, %v409
      %v418 = vpack.c.b16 %v412, %v411
      %v419 = vpack.c.b16 %v414, %v413
      %v420 = vpack.c.b16 %v416, %v415
      %vm425 = vcmask 523264
      %v427 = vsel %vm425, %v385, 0
      %429 = vmatprep.subr.bf16.mxu0 0
      %430 = vmatpush1.bf16.msra.mxu0 0
      %431 = vmatprep.subr.bf16.mxu0 0
      %432 = vmatpush1.bf16.msra.mxu0 0
      %433 = vmatprep.subr.bf16.mxu0 0
      %434 = vmatpush1.bf16.msra.mxu0 0
      %435 = vmatprep.subr.bf16.mxu0 0
      %436 = vmatpush1.bf16.msra.mxu0 0
      %437 = vmatprep.subr.bf16.mxu0 0
      %438 = vmatpush1.bf16.msra.mxu0 %v420
      %439 = vmatprep.subr.bf16.mxu0 0
      %440 = vmatpush1.bf16.msra.mxu0 %v419
      %441 = vmatprep.subr.bf16.mxu0 0
      %442 = vmatpush1.bf16.msra.mxu0 %v418
      %443 = vmatprep.subr.bf16.mxu0 0
      %444 = vmatpush1.bf16.msra.mxu0 %v417
      %445 = vmatprep.subr.bf16.mxu0 0
      %446 = vmatpush2.bf16.msra.mxu0 0
      %447 = vmatprep.subr.bf16.mxu0 0
      %448 = vmatpush2.bf16.msra.mxu0 0
      %449 = vmatprep.subr.bf16.mxu0 0
      %450 = vmatpush2.bf16.msra.mxu0 0
      %451 = vmatprep.subr.bf16.mxu0 0
      %452 = vmatpush2.bf16.msra.mxu0 0
      %453 = vmatprep.subr.bf16.mxu0 0
      %454 = vmatpush2.bf16.msra.mxu0 0
      %455 = vmatprep.subr.bf16.mxu0 0
      %456 = vmatpush2.bf16.msra.mxu0 0
      %457 = vmatprep.subr.bf16.mxu0 0
      %458 = vmatpush2.bf16.msra.mxu0 0
      %459 = vmatprep.subr.bf16.mxu0 0
      %460 = vmatpush2.bf16.msra.mxu0 0
      %461 = vmatprep.mubr.bf16.mxu0 0
      %462 = vmatmul.mubr.bf16.gmra.mxu0 %v427
      %v463 = vpop.f32.mrf.mxu0
      %v464 = vadd.f32 %v399, %v463
      %v465 = vpop.f32.mrf.mxu0
      %v466 = vpop.f32.mrf.mxu0
      %v467 = vadd.f32 %v399, %v466
      %v468 = vpop.f32.mrf.mxu0
      %469 = vdwg.mxu0
      %v470 = vmax.f32 %v464, 0.0
      %v471 = vmax.f32 %v467, 0.0
      %v472 = vpack.c.bf16 %v471, %v470
      %v473 = vld [vmem:[%s5] sm:$0xff]
      %v474 = vld [vmem:[%s5 + $0x8] sm:$0xff]
      %v475 = vld [vmem:[%s5 + $0x10] sm:$0xff]
      %v476 = vld [vmem:[%s5 + $0x18] sm:$0xff]
      %v477 = vld [vmem:[%s5 + $0x20] sm:$0xff]
      %v478 = vld [vmem:[%s5 + $0x28] sm:$0xff]
      %v479 = vld [vmem:[%s5 + $0x30] sm:$0xff]
      %v480 = vld [vmem:[%s5 + $0x38] sm:$0xff]
      %v481 = vld [vmem:[%s5 + $0x40] sm:$0xff]
      %v482 = vld [vmem:[%s5 + $0x48] sm:$0xff]
      %v483 = vld [vmem:[%s5 + $0x50] sm:$0xff]
      %v484 = vld [vmem:[%s5 + $0x58] sm:$0xff]
      %v485 = vld [vmem:[%s5 + $0x60] sm:$0xff]
      %v486 = vld [vmem:[%s5 + $0x68] sm:$0xff]
      %v487 = vld [vmem:[%s5 + $0x70] sm:$0xff]
      %v488 = vld [vmem:[%s5 + $0x78] sm:$0xff]
      %v489 = vld [vmem:[%s5 + $0x80] sm:$0xff]
      %v490 = vld [vmem:[%s5 + $0x88] sm:$0xff]
      %v491 = vld [vmem:[%s5 + $0x90] sm:$0xff]
      %v492 = vld [vmem:[%s5 + $0x98] sm:$0xff]
      %v493 = vld [vmem:[%s5 + $0xa0] sm:$0xff]
      %v494 = vld [vmem:[%s5 + $0xa8] sm:$0xff]
      %v495 = vld [vmem:[%s5 + $0xb0] sm:$0xff]
      %v496 = vld [vmem:[%s5 + $0xb8] sm:$0xff]
      %v497 = vld [vmem:[%s5 + $0xc0] sm:$0xff]
      %v498 = vld [vmem:[%s5 + $0xc8] sm:$0xff]
      %v499 = vld [vmem:[%s5 + $0xd0] sm:$0xff]
      %v500 = vld [vmem:[%s5 + $0xd8] sm:$0xff]
      %v501 = vld [vmem:[%s5 + $0xe0] sm:$0xff]
      %v502 = vld [vmem:[%s5 + $0xe8] sm:$0xff]
      %v503 = vld [vmem:[%s5 + $0xf0] sm:$0xff]
      %v504 = vld [vmem:[%s5 + $0xf8] sm:$0xff]
      %v505 = vld [vmem:[%s5 + $0x100] sm:$0xff]
      %v506 = vld [vmem:[%s5 + $0x108] sm:$0xff]
      %v507 = vld [vmem:[%s5 + $0x110] sm:$0xff]
      %v508 = vld [vmem:[%s5 + $0x118] sm:$0xff]
      %v509 = vld [vmem:[%s5 + $0x120] sm:$0xff]
      %v510 = vld [vmem:[%s5 + $0x128] sm:$0xff]
      %v511 = vld [vmem:[%s5 + $0x130] sm:$0xff]
      %v512 = vld [vmem:[%s5 + $0x138] sm:$0xff]
      %v513 = vld [vmem:[%s5 + $0x140] sm:$0xff]
      %v514 = vld [vmem:[%s5 + $0x148] sm:$0xff]
      %v515 = vld [vmem:[%s5 + $0x150] sm:$0xff]
      %v516 = vld [vmem:[%s5 + $0x158] sm:$0xff]
      %v517 = vld [vmem:[%s5 + $0x160] sm:$0xff]
      %v518 = vld [vmem:[%s5 + $0x168] sm:$0xff]
      %v519 = vld [vmem:[%s5 + $0x170] sm:$0xff]
      %v520 = vld [vmem:[%s5 + $0x178] sm:$0xff]
      %v521 = vld [vmem:[%s5 + $0x180] sm:$0xff]
      %v522 = vld [vmem:[%s5 + $0x188] sm:$0xff]
      %v523 = vld [vmem:[%s5 + $0x190] sm:$0xff]
      %v524 = vld [vmem:[%s5 + $0x198] sm:$0xff]
      %v525 = vld [vmem:[%s5 + $0x1a0] sm:$0xff]
      %v526 = vld [vmem:[%s5 + $0x1a8] sm:$0xff]
      %v527 = vld [vmem:[%s5 + $0x1b0] sm:$0xff]
      %v528 = vld [vmem:[%s5 + $0x1b8] sm:$0xff]
      %v529 = vld [vmem:[%s5 + $0x1c0] sm:$0xff]
      %v530 = vld [vmem:[%s5 + $0x1c8] sm:$0xff]
      %v531 = vld [vmem:[%s5 + $0x1d0] sm:$0xff]
      %v532 = vld [vmem:[%s5 + $0x1d8] sm:$0xff]
      %v533 = vld [vmem:[%s5 + $0x1e0] sm:$0xff]
      %v534 = vld [vmem:[%s5 + $0x1e8] sm:$0xff]
      %v535 = vld [vmem:[%s5 + $0x1f0] sm:$0xff]
      %v536 = vld [vmem:[%s5 + $0x1f8] sm:$0xff]
      %v601 = vunpack.c.l.b16 %v473
      %v602 = vunpack.c.h.b16 %v473
      %v603 = vunpack.c.l.b16 %v474
      %v604 = vunpack.c.h.b16 %v474
      %v605 = vunpack.c.l.b16 %v475
      %v606 = vunpack.c.h.b16 %v475
      %v607 = vunpack.c.l.b16 %v476
      %v608 = vunpack.c.h.b16 %v476
      %v609 = vunpack.c.l.b16 %v477
      %v610 = vunpack.c.h.b16 %v477
      %v611 = vunpack.c.l.b16 %v478
      %v612 = vunpack.c.h.b16 %v478
      %v613 = vunpack.c.l.b16 %v479
      %v614 = vunpack.c.h.b16 %v479
      %v615 = vunpack.c.l.b16 %v480
      %v616 = vunpack.c.h.b16 %v480
      %v617 = vunpack.c.l.b16 %v481
      %v618 = vunpack.c.h.b16 %v481
      %v619 = vunpack.c.l.b16 %v482
      %v620 = vunpack.c.h.b16 %v482
      %v621 = vunpack.c.l.b16 %v483
      %v622 = vunpack.c.h.b16 %v483
      %v623 = vunpack.c.l.b16 %v484
      %v624 = vunpack.c.h.b16 %v484
      %v625 = vunpack.c.l.b16 %v485
      %v626 = vunpack.c.h.b16 %v485
      %v627 = vunpack.c.l.b16 %v486
      %v628 = vunpack.c.h.b16 %v486
      %v629 = vunpack.c.l.b16 %v487
      %v630 = vunpack.c.h.b16 %v487
      %v631 = vunpack.c.l.b16 %v488
      %v632 = vunpack.c.h.b16 %v488
      %v633 = vunpack.c.l.b16 %v489
      %v634 = vunpack.c.h.b16 %v489
      %v635 = vunpack.c.l.b16 %v490
      %v636 = vunpack.c.h.b16 %v490
      %v637 = vunpack.c.l.b16 %v491
      %v638 = vunpack.c.h.b16 %v491
      %v639 = vunpack.c.l.b16 %v492
      %v640 = vunpack.c.h.b16 %v492
      %v641 = vunpack.c.l.b16 %v493
      %v642 = vunpack.c.h.b16 %v493
      %v643 = vunpack.c.l.b16 %v494
      %v644 = vunpack.c.h.b16 %v494
      %v645 = vunpack.c.l.b16 %v495
      %v646 = vunpack.c.h.b16 %v495
      %v647 = vunpack.c.l.b16 %v496
      %v648 = vunpack.c.h.b16 %v496
      %v649 = vunpack.c.l.b16 %v497
      %v650 = vunpack.c.h.b16 %v497
      %v651 = vunpack.c.l.b16 %v498
      %v652 = vunpack.c.h.b16 %v498
      %v653 = vunpack.c.l.b16 %v499
      %v654 = vunpack.c.h.b16 %v499
      %v655 = vunpack.c.l.b16 %v500
      %v656 = vunpack.c.h.b16 %v500
      %v657 = vunpack.c.l.b16 %v501
      %v658 = vunpack.c.h.b16 %v501
      %v659 = vunpack.c.l.b16 %v502
      %v660 = vunpack.c.h.b16 %v502
      %v661 = vunpack.c.l.b16 %v503
      %v662 = vunpack.c.h.b16 %v503
      %v663 = vunpack.c.l.b16 %v504
      %v664 = vunpack.c.h.b16 %v504
      %v665 = vunpack.c.l.b16 %v505
      %v666 = vunpack.c.h.b16 %v505
      %v667 = vunpack.c.l.b16 %v506
      %v668 = vunpack.c.h.b16 %v506
      %v669 = vunpack.c.l.b16 %v507
      %v670 = vunpack.c.h.b16 %v507
      %v671 = vunpack.c.l.b16 %v508
      %v672 = vunpack.c.h.b16 %v508
      %v673 = vunpack.c.l.b16 %v509
      %v674 = vunpack.c.h.b16 %v509
      %v675 = vunpack.c.l.b16 %v510
      %v676 = vunpack.c.h.b16 %v510
      %v677 = vunpack.c.l.b16 %v511
      %v678 = vunpack.c.h.b16 %v511
      %v679 = vunpack.c.l.b16 %v512
      %v680 = vunpack.c.h.b16 %v512
      %v681 = vunpack.c.l.b16 %v513
      %v682 = vunpack.c.h.b16 %v513
      %v683 = vunpack.c.l.b16 %v514
      %v684 = vunpack.c.h.b16 %v514
      %v685 = vunpack.c.l.b16 %v515
      %v686 = vunpack.c.h.b16 %v515
      %v687 = vunpack.c.l.b16 %v516
      %v688 = vunpack.c.h.b16 %v516
      %v689 = vunpack.c.l.b16 %v517
      %v690 = vunpack.c.h.b16 %v517
      %v691 = vunpack.c.l.b16 %v518
      %v692 = vunpack.c.h.b16 %v518
      %v693 = vunpack.c.l.b16 %v519
      %v694 = vunpack.c.h.b16 %v519
      %v695 = vunpack.c.l.b16 %v520
      %v696 = vunpack.c.h.b16 %v520
      %v697 = vunpack.c.l.b16 %v521
      %v698 = vunpack.c.h.b16 %v521
      %v699 = vunpack.c.l.b16 %v522
      %v700 = vunpack.c.h.b16 %v522
      %v701 = vunpack.c.l.b16 %v523
      %v702 = vunpack.c.h.b16 %v523
      %v703 = vunpack.c.l.b16 %v524
      %v704 = vunpack.c.h.b16 %v524
      %v705 = vunpack.c.l.b16 %v525
      %v706 = vunpack.c.h.b16 %v525
      %v707 = vunpack.c.l.b16 %v526
      %v708 = vunpack.c.h.b16 %v526
      %v709 = vunpack.c.l.b16 %v527
      %v710 = vunpack.c.h.b16 %v527
      %v711 = vunpack.c.l.b16 %v528
      %v712 = vunpack.c.h.b16 %v528
      %v713 = vunpack.c.l.b16 %v529
      %v714 = vunpack.c.h.b16 %v529
      %v715 = vunpack.c.l.b16 %v530
      %v716 = vunpack.c.h.b16 %v530
      %v717 = vunpack.c.l.b16 %v531
      %v718 = vunpack.c.h.b16 %v531
      %v719 = vunpack.c.l.b16 %v532
      %v720 = vunpack.c.h.b16 %v532
      %v721 = vunpack.c.l.b16 %v533
      %v722 = vunpack.c.h.b16 %v533
      %v723 = vunpack.c.l.b16 %v534
      %v724 = vunpack.c.h.b16 %v534
      %v725 = vunpack.c.l.b16 %v535
      %v726 = vunpack.c.h.b16 %v535
      %v727 = vunpack.c.l.b16 %v536
      %v728 = vunpack.c.h.b16 %v536
      %v729 = vpack.c.b16 %v609, %v601
      %v730 = vpack.c.b16 %v610, %v602
      %v731 = vpack.c.b16 %v611, %v603
      %v732 = vpack.c.b16 %v612, %v604
      %v733 = vpack.c.b16 %v613, %v605
      %v734 = vpack.c.b16 %v614, %v606
      %v735 = vpack.c.b16 %v615, %v607
      %v736 = vpack.c.b16 %v616, %v608
      %v737 = vpack.c.b16 %v625, %v617
      %v738 = vpack.c.b16 %v626, %v618
      %v739 = vpack.c.b16 %v627, %v619
      %v740 = vpack.c.b16 %v628, %v620
      %v741 = vpack.c.b16 %v629, %v621
      %v742 = vpack.c.b16 %v630, %v622
      %v743 = vpack.c.b16 %v631, %v623
      %v744 = vpack.c.b16 %v632, %v624
      %v745 = vpack.c.b16 %v641, %v633
      %v746 = vpack.c.b16 %v642, %v634
      %v747 = vpack.c.b16 %v643, %v635
      %v748 = vpack.c.b16 %v644, %v636
      %v749 = vpack.c.b16 %v645, %v637
      %v750 = vpack.c.b16 %v646, %v638
      %v751 = vpack.c.b16 %v647, %v639
      %v752 = vpack.c.b16 %v648, %v640
      %v753 = vpack.c.b16 %v657, %v649
      %v754 = vpack.c.b16 %v658, %v650
      %v755 = vpack.c.b16 %v659, %v651
      %v756 = vpack.c.b16 %v660, %v652
      %v757 = vpack.c.b16 %v661, %v653
      %v758 = vpack.c.b16 %v662, %v654
      %v759 = vpack.c.b16 %v663, %v655
      %v760 = vpack.c.b16 %v664, %v656
      %v761 = vpack.c.b16 %v673, %v665
      %v762 = vpack.c.b16 %v674, %v666
      %v763 = vpack.c.b16 %v675, %v667
      %v764 = vpack.c.b16 %v676, %v668
      %v765 = vpack.c.b16 %v677, %v669
      %v766 = vpack.c.b16 %v678, %v670
      %v767 = vpack.c.b16 %v679, %v671
      %v768 = vpack.c.b16 %v680, %v672
      %v769 = vpack.c.b16 %v689, %v681
      %v770 = vpack.c.b16 %v690, %v682
      %v771 = vpack.c.b16 %v691, %v683
      %v772 = vpack.c.b16 %v692, %v684
      %v773 = vpack.c.b16 %v693, %v685
      %v774 = vpack.c.b16 %v694, %v686
      %v775 = vpack.c.b16 %v695, %v687
      %v776 = vpack.c.b16 %v696, %v688
      %v777 = vpack.c.b16 %v705, %v697
      %v778 = vpack.c.b16 %v706, %v698
      %v779 = vpack.c.b16 %v707, %v699
      %v780 = vpack.c.b16 %v708, %v700
      %v781 = vpack.c.b16 %v709, %v701
      %v782 = vpack.c.b16 %v710, %v702
      %v783 = vpack.c.b16 %v711, %v703
      %v784 = vpack.c.b16 %v712, %v704
      %v785 = vpack.c.b16 %v721, %v713
      %v786 = vpack.c.b16 %v722, %v714
      %v787 = vpack.c.b16 %v723, %v715
      %v788 = vpack.c.b16 %v724, %v716
      %v789 = vpack.c.b16 %v725, %v717
      %v790 = vpack.c.b16 %v726, %v718
      %v791 = vpack.c.b16 %v727, %v719
      %v792 = vpack.c.b16 %v728, %v720
      %857 = vmatprep.subr.bf16.mxu0 %v786
      %858 = vmatpush1.bf16.msra.mxu0 %v785
      %859 = vmatprep.subr.bf16.mxu0 %v778
      %860 = vmatpush1.bf16.msra.mxu0 %v777
      %861 = vmatprep.subr.bf16.mxu0 %v770
      %862 = vmatpush1.bf16.msra.mxu0 %v769
      %863 = vmatprep.subr.bf16.mxu0 %v762
      %864 = vmatpush1.bf16.msra.mxu0 %v761
      %865 = vmatprep.subr.bf16.mxu0 %v754
      %866 = vmatpush1.bf16.msra.mxu0 %v753
      %867 = vmatprep.subr.bf16.mxu0 %v746
      %868 = vmatpush1.bf16.msra.mxu0 %v745
      %869 = vmatprep.subr.bf16.mxu0 %v738
      %870 = vmatpush1.bf16.msra.mxu0 %v737
      %871 = vmatprep.subr.bf16.mxu0 %v730
      %872 = vmatpush1.bf16.msra.mxu0 %v729
      %873 = vmatprep.subr.bf16.mxu0 0
      %874 = vmatpush2.bf16.msra.mxu0 0
      %875 = vmatprep.subr.bf16.mxu0 0
      %876 = vmatpush2.bf16.msra.mxu0 0
      %877 = vmatprep.subr.bf16.mxu0 0
      %878 = vmatpush2.bf16.msra.mxu0 0
      %879 = vmatprep.subr.bf16.mxu0 0
      %880 = vmatpush2.bf16.msra.mxu0 0
      %881 = vmatprep.subr.bf16.mxu0 0
      %882 = vmatpush2.bf16.msra.mxu0 0
      %883 = vmatprep.subr.bf16.mxu0 0
      %884 = vmatpush2.bf16.msra.mxu0 0
      %885 = vmatprep.subr.bf16.mxu0 0
      %886 = vmatpush2.bf16.msra.mxu0 0
      %887 = vmatprep.subr.bf16.mxu0 0
      %888 = vmatpush2.bf16.msra.mxu0 0
      %889 = vmatprep.mubr.bf16.mxu0 0
      %890 = vmatmul.mubr.bf16.gmra.mxu0 %v472
      %v891 = vpop.f32.mrf.mxu0
      %v892 = vadd.f32 0.0, %v891
      %v893 = vpop.f32.mrf.mxu0
      %v894 = vadd.f32 0.0, %v893
      %v895 = vpop.f32.mrf.mxu0
      %v896 = vadd.f32 0.0, %v895
      %v897 = vpop.f32.mrf.mxu0
      %v898 = vadd.f32 0.0, %v897
      %899 = vdwg.mxu0
      %900 = vmatprep.subr.bf16.mxu0 %v788
      %901 = vmatpush1.bf16.msra.mxu0 %v787
      %902 = vmatprep.subr.bf16.mxu0 %v780
      %903 = vmatpush1.bf16.msra.mxu0 %v779
      %904 = vmatprep.subr.bf16.mxu0 %v772
      %905 = vmatpush1.bf16.msra.mxu0 %v771
      %906 = vmatprep.subr.bf16.mxu0 %v764
      %907 = vmatpush1.bf16.msra.mxu0 %v763
      %908 = vmatprep.subr.bf16.mxu0 %v756
      %909 = vmatpush1.bf16.msra.mxu0 %v755
      %910 = vmatprep.subr.bf16.mxu0 %v748
      %911 = vmatpush1.bf16.msra.mxu0 %v747
      %912 = vmatprep.subr.bf16.mxu0 %v740
      %913 = vmatpush1.bf16.msra.mxu0 %v739
      %914 = vmatprep.subr.bf16.mxu0 %v732
      %915 = vmatpush1.bf16.msra.mxu0 %v731
      %916 = vmatprep.subr.bf16.mxu0 0
      %917 = vmatpush2.bf16.msra.mxu0 0
      %918 = vmatprep.subr.bf16.mxu0 0
      %919 = vmatpush2.bf16.msra.mxu0 0
      %920 = vmatprep.subr.bf16.mxu0 0
      %921 = vmatpush2.bf16.msra.mxu0 0
      %922 = vmatprep.subr.bf16.mxu0 0
      %923 = vmatpush2.bf16.msra.mxu0 0
      %924 = vmatprep.subr.bf16.mxu0 0
      %925 = vmatpush2.bf16.msra.mxu0 0
      %926 = vmatprep.subr.bf16.mxu0 0
      %927 = vmatpush2.bf16.msra.mxu0 0
      %928 = vmatprep.subr.bf16.mxu0 0
      %929 = vmatpush2.bf16.msra.mxu0 0
      %930 = vmatprep.subr.bf16.mxu0 0
      %931 = vmatpush2.bf16.msra.mxu0 0
      %932 = vmatprep.mubr.bf16.mxu0 0
      %933 = vmatmul.mubr.bf16.gmra.mxu0 %v472
      %v934 = vpop.f32.mrf.mxu0
      %v935 = vadd.f32 0.0, %v934
      %v936 = vpop.f32.mrf.mxu0
      %v937 = vadd.f32 0.0, %v936
      %v938 = vpop.f32.mrf.mxu0
      %v939 = vadd.f32 0.0, %v938
      %v940 = vpop.f32.mrf.mxu0
      %v941 = vadd.f32 0.0, %v940
      %942 = vdwg.mxu0
      %943 = vmatprep.subr.bf16.mxu0 %v790
      %944 = vmatpush1.bf16.msra.mxu0 %v789
      %945 = vmatprep.subr.bf16.mxu0 %v782
      %946 = vmatpush1.bf16.msra.mxu0 %v781
      %947 = vmatprep.subr.bf16.mxu0 %v774
      %948 = vmatpush1.bf16.msra.mxu0 %v773
      %949 = vmatprep.subr.bf16.mxu0 %v766
      %950 = vmatpush1.bf16.msra.mxu0 %v765
      %951 = vmatprep.subr.bf16.mxu0 %v758
      %952 = vmatpush1.bf16.msra.mxu0 %v757
      %953 = vmatprep.subr.bf16.mxu0 %v750
      %954 = vmatpush1.bf16.msra.mxu0 %v749
      %955 = vmatprep.subr.bf16.mxu0 %v742
      %956 = vmatpush1.bf16.msra.mxu0 %v741
      %957 = vmatprep.subr.bf16.mxu0 %v734
      %958 = vmatpush1.bf16.msra.mxu0 %v733
      %959 = vmatprep.subr.bf16.mxu0 0
      %960 = vmatpush2.bf16.msra.mxu0 0
      %961 = vmatprep.subr.bf16.mxu0 0
      %962 = vmatpush2.bf16.msra.mxu0 0
      %963 = vmatprep.subr.bf16.mxu0 0
      %964 = vmatpush2.bf16.msra.mxu0 0
      %965 = vmatprep.subr.bf16.mxu0 0
      %966 = vmatpush2.bf16.msra.mxu0 0
      %967 = vmatprep.subr.bf16.mxu0 0
      %968 = vmatpush2.bf16.msra.mxu0 0
      %969 = vmatprep.subr.bf16.mxu0 0
      %970 = vmatpush2.bf16.msra.mxu0 0
      %971 = vmatprep.subr.bf16.mxu0 0
      %972 = vmatpush2.bf16.msra.mxu0 0
      %973 = vmatprep.subr.bf16.mxu0 0
      %974 = vmatpush2.bf16.msra.mxu0 0
      %975 = vmatprep.mubr.bf16.mxu0 0
      %976 = vmatmul.mubr.bf16.gmra.mxu0 %v472
      %v977 = vpop.f32.mrf.mxu0
      %v978 = vadd.f32 0.0, %v977
      %v979 = vpop.f32.mrf.mxu0
      %v980 = vadd.f32 0.0, %v979
      %v981 = vpop.f32.mrf.mxu0
      %v982 = vadd.f32 0.0, %v981
      %v983 = vpop.f32.mrf.mxu0
      %v984 = vadd.f32 0.0, %v983
      %985 = vdwg.mxu0
      %986 = vmatprep.subr.bf16.mxu0 %v792
      %987 = vmatpush1.bf16.msra.mxu0 %v791
      %988 = vmatprep.subr.bf16.mxu0 %v784
      %989 = vmatpush1.bf16.msra.mxu0 %v783
      %990 = vmatprep.subr.bf16.mxu0 %v776
      %991 = vmatpush1.bf16.msra.mxu0 %v775
      %992 = vmatprep.subr.bf16.mxu0 %v768
      %993 = vmatpush1.bf16.msra.mxu0 %v767
      %994 = vmatprep.subr.bf16.mxu0 %v760
      %995 = vmatpush1.bf16.msra.mxu0 %v759
      %996 = vmatprep.subr.bf16.mxu0 %v752
      %997 = vmatpush1.bf16.msra.mxu0 %v751
      %998 = vmatprep.subr.bf16.mxu0 %v744
      %999 = vmatpush1.bf16.msra.mxu0 %v743
      %1000 = vmatprep.subr.bf16.mxu0 %v736
      %1001 = vmatpush1.bf16.msra.mxu0 %v735
      %1002 = vmatprep.subr.bf16.mxu0 0
      %1003 = vmatpush2.bf16.msra.mxu0 0
      %1004 = vmatprep.subr.bf16.mxu0 0
      %1005 = vmatpush2.bf16.msra.mxu0 0
      %1006 = vmatprep.subr.bf16.mxu0 0
      %1007 = vmatpush2.bf16.msra.mxu0 0
      %1008 = vmatprep.subr.bf16.mxu0 0
      %1009 = vmatpush2.bf16.msra.mxu0 0
      %1010 = vmatprep.subr.bf16.mxu0 0
      %1011 = vmatpush2.bf16.msra.mxu0 0
      %1012 = vmatprep.subr.bf16.mxu0 0
      %1013 = vmatpush2.bf16.msra.mxu0 0
      %1014 = vmatprep.subr.bf16.mxu0 0
      %1015 = vmatpush2.bf16.msra.mxu0 0
      %1016 = vmatprep.subr.bf16.mxu0 0
      %1017 = vmatpush2.bf16.msra.mxu0 0
      %1018 = vmatprep.mubr.bf16.mxu0 0
      %1019 = vmatmul.mubr.bf16.gmra.mxu0 %v472
      %v1020 = vpop.f32.mrf.mxu0
      %v1021 = vadd.f32 0.0, %v1020
      %v1022 = vpop.f32.mrf.mxu0
      %v1023 = vadd.f32 0.0, %v1022
      %v1024 = vpop.f32.mrf.mxu0
      %v1025 = vadd.f32 0.0, %v1024
      %v1026 = vpop.f32.mrf.mxu0
      %v1027 = vadd.f32 0.0, %v1026
      %1028 = vdwg.mxu0
      %v1029 = vmax.f32 %v892, %v896
      %v1030 = vmax.f32 %v894, %v898
      %v1031 = vmax.f32 %v935, %v939
      %v1032 = vmax.f32 %v937, %v941
      %v1033 = vmax.f32 %v978, %v982
      %v1034 = vmax.f32 %v980, %v984
      %v1035 = vmax.f32 %v1021, %v1025
      %v1036 = vmax.f32 %v1023, %v1027
      %p1037 = scmp.eq.s32.totalorder %s23, 0
      // Predicated region
      $region49: #{pointnet_encoder_forward.5} parent=47 // pred_check
        %p1038 = pneg %p1037
      $region50: #{pointnet_encoder_forward.5} parent=47 // pred_check_branch
        %1040 = sbr.rel (%p1038) target = $region52
      $region51: #{pointnet_encoder_forward.5} parent=47 // pred_region
        %1041 = vst [vmem:[#allocation2] sm:$0xff] %v1029
        %1042 = vst [vmem:[#allocation2 + $0x8] sm:$0xff] %v1030
        %1043 = vst [vmem:[#allocation2 + $0x10] sm:$0xff] %v1031
        %1044 = vst [vmem:[#allocation2 + $0x18] sm:$0xff] %v1032
        %1045 = vst [vmem:[#allocation2 + $0x20] sm:$0xff] %v1033
        %1046 = vst [vmem:[#allocation2 + $0x28] sm:$0xff] %v1034
        %1047 = vst [vmem:[#allocation2 + $0x30] sm:$0xff] %v1035
        %1048 = vst [vmem:[#allocation2 + $0x38] sm:$0xff] %v1036
      $region52: #{pointnet_encoder_forward.5} parent=47 // pred_fallthru
        _
      %p1049 = scmp.ne.s32.totalorder %s23, 0
      // Predicated region
      $region53: #{pointnet_encoder_forward.5} parent=47 // pred_check
        %p1050 = pneg %p1049
      $region54: #{pointnet_encoder_forward.5} parent=47 // pred_check_branch
        %1052 = sbr.rel (%p1050) target = $region56
      $region55: #{pointnet_encoder_forward.5} parent=47 // pred_region
        %v1053 = vld [vmem:[#allocation2] sm:$0xff]
        %v1054 = vld [vmem:[#allocation2 + $0x8] sm:$0xff]
        %v1055 = vld [vmem:[#allocation2 + $0x10] sm:$0xff]
        %v1056 = vld [vmem:[#allocation2 + $0x18] sm:$0xff]
        %v1057 = vld [vmem:[#allocation2 + $0x20] sm:$0xff]
        %v1058 = vld [vmem:[#allocation2 + $0x28] sm:$0xff]
        %v1059 = vld [vmem:[#allocation2 + $0x30] sm:$0xff]
        %v1060 = vld [vmem:[#allocation2 + $0x38] sm:$0xff]
        %v1061 = vmax.f32 %v1053, %v1029
        %v1062 = vmax.f32 %v1054, %v1030
        %v1063 = vmax.f32 %v1055, %v1031
        %v1064 = vmax.f32 %v1056, %v1032
        %v1065 = vmax.f32 %v1057, %v1033
        %v1066 = vmax.f32 %v1058, %v1034
        %v1067 = vmax.f32 %v1059, %v1035
        %v1068 = vmax.f32 %v1060, %v1036
        %1069 = vst [vmem:[#allocation2] sm:$0xff] %v1061
        %1070 = vst [vmem:[#allocation2 + $0x8] sm:$0xff] %v1062
        %1071 = vst [vmem:[#allocation2 + $0x10] sm:$0xff] %v1063
        %1072 = vst [vmem:[#allocation2 + $0x18] sm:$0xff] %v1064
        %1073 = vst [vmem:[#allocation2 + $0x20] sm:$0xff] %v1065
        %1074 = vst [vmem:[#allocation2 + $0x28] sm:$0xff] %v1066
        %1075 = vst [vmem:[#allocation2 + $0x30] sm:$0xff] %v1067
        %1076 = vst [vmem:[#allocation2 + $0x38] sm:$0xff] %v1068
      $region56: #{pointnet_encoder_forward.5} parent=47 // pred_fallthru
        _
      // Predicated region
      $region57: #{pointnet_encoder_forward.5} parent=47 // pred_check
        %p1077 = pneg %p1037
      $region58: #{pointnet_encoder_forward.5} parent=47 // pred_check_branch
        %1079 = sbr.rel (%p1077) target = $region60
      $region59: #{pointnet_encoder_forward.5} parent=47 // pred_region
        %v1080 = vld [vmem:[#allocation2] sm:$0xff]
        %v1081 = vld [vmem:[#allocation2 + $0x8] sm:$0xff]
        %v1082 = vld [vmem:[#allocation2 + $0x10] sm:$0xff]
        %v1083 = vld [vmem:[#allocation2 + $0x18] sm:$0xff]
        %v1084 = vld [vmem:[#allocation2 + $0x20] sm:$0xff]
        %v1085 = vld [vmem:[#allocation2 + $0x28] sm:$0xff]
        %v1086 = vld [vmem:[#allocation2 + $0x30] sm:$0xff]
        %v1087 = vld [vmem:[#allocation2 + $0x38] sm:$0xff]
        %v1088 = vrot.slane %v1080, 4
        %v1089 = vmax.f32 %v1080, %v1088
        %v1090 = vrot.slane %v1089, 2
        %v1091 = vmax.f32 %v1089, %v1090
        %v1092 = vrot.slane %v1091, 1
        %v1093 = vmax.f32 %v1091, %v1092
        %v1094 = vrot.slane %v1081, 4
        %v1095 = vmax.f32 %v1081, %v1094
        %v1096 = vrot.slane %v1095, 2
        %v1097 = vmax.f32 %v1095, %v1096
        %v1098 = vrot.slane %v1097, 1
        %v1099 = vmax.f32 %v1097, %v1098
        %v1100 = vrot.slane %v1082, 4
        %v1101 = vmax.f32 %v1082, %v1100
        %v1102 = vrot.slane %v1101, 2
        %v1103 = vmax.f32 %v1101, %v1102
        %v1104 = vrot.slane %v1103, 1
        %v1105 = vmax.f32 %v1103, %v1104
        %v1106 = vrot.slane %v1083, 4
        %v1107 = vmax.f32 %v1083, %v1106
        %v1108 = vrot.slane %v1107, 2
        %v1109 = vmax.f32 %v1107, %v1108
        %v1110 = vrot.slane %v1109, 1
        %v1111 = vmax.f32 %v1109, %v1110
        %v1112 = vrot.slane %v1084, 4
        %v1113 = vmax.f32 %v1084, %v1112
        %v1114 = vrot.slane %v1113, 2
        %v1115 = vmax.f32 %v1113, %v1114
        %v1116 = vrot.slane %v1115, 1
        %v1117 = vmax.f32 %v1115, %v1116
        %v1118 = vrot.slane %v1085, 4
        %v1119 = vmax.f32 %v1085, %v1118
        %v1120 = vrot.slane %v1119, 2
        %v1121 = vmax.f32 %v1119, %v1120
        %v1122 = vrot.slane %v1121, 1
        %v1123 = vmax.f32 %v1121, %v1122
        %v1124 = vrot.slane %v1086, 4
        %v1125 = vmax.f32 %v1086, %v1124
        %v1126 = vrot.slane %v1125, 2
        %v1127 = vmax.f32 %v1125, %v1126
        %v1128 = vrot.slane %v1127, 1
        %v1129 = vmax.f32 %v1127, %v1128
        %v1130 = vrot.slane %v1087, 4
        %v1131 = vmax.f32 %v1087, %v1130
        %v1132 = vrot.slane %v1131, 2
        %v1133 = vmax.f32 %v1131, %v1132
        %v1134 = vrot.slane %v1133, 1
        %v1135 = vmax.f32 %v1133, %v1134
        %v1136 = vld [vmem:[%s6] sm:$0xff]
        %v1138 = vlaneseq
        %v1139 = vshrl.u32 %v1138, 7
        %v1140 = vsub.s32 0, %v1139
        %v1141 = vrot.slane %v1136, %v1140
        %v1142 = vlaneseq
        %v1143 = vshrl.u32 %v1142, 7
        %v1144 = vsub.s32 1, %v1143
        %v1145 = vrot.slane %v1136, %v1144
        %v1146 = vlaneseq
        %v1147 = vshrl.u32 %v1146, 7
        %v1148 = vsub.s32 2, %v1147
        %v1149 = vrot.slane %v1136, %v1148
        %v1150 = vlaneseq
        %v1151 = vshrl.u32 %v1150, 7
        %v1152 = vsub.s32 3, %v1151
        %v1153 = vrot.slane %v1136, %v1152
        %v1154 = vlaneseq
        %v1155 = vshrl.u32 %v1154, 7
        %v1156 = vsub.s32 4, %v1155
        %v1157 = vrot.slane %v1136, %v1156
        %v1158 = vlaneseq
        %v1159 = vshrl.u32 %v1158, 7
        %v1160 = vsub.s32 5, %v1159
        %v1161 = vrot.slane %v1136, %v1160
        %v1162 = vlaneseq
        %v1163 = vshrl.u32 %v1162, 7
        %v1164 = vsub.s32 6, %v1163
        %v1165 = vrot.slane %v1136, %v1164
        %v1166 = vlaneseq
        %v1167 = vshrl.u32 %v1166, 7
        %v1168 = vsub.s32 7, %v1167
        %v1169 = vrot.slane %v1136, %v1168
        %v1178 = vadd.f32 %v1093, %v1141
        %v1179 = vadd.f32 %v1099, %v1145
        %v1180 = vadd.f32 %v1105, %v1149
        %v1181 = vadd.f32 %v1111, %v1153
        %v1182 = vadd.f32 %v1117, %v1157
        %v1183 = vadd.f32 %v1123, %v1161
        %v1184 = vadd.f32 %v1129, %v1165
        %v1185 = vadd.f32 %v1135, %v1169
        %v1194 = vcombine.low %v1178, %v1179
        %v1195 = vcombine.low %v1180, %v1181
        %v1196 = vcombine.low %v1182, %v1183
        %v1197 = vcombine.low %v1184, %v1185
        %v1199 = vunpack.c.l.s4 1966171168
        %v1200 = vunpack.c.0.s8 %v1199
        %v1201 = vlaneseq
        %v1202 = vshrl.u32 %v1201, 7
        %v1203 = vsub.s32 %v1200, %v1202
        %v1204 = vrot.slane %v1194, %v1203
        %v1206 = vunpack.c.l.s4 1966171168
        %v1207 = vunpack.c.0.s8 %v1206
        %v1208 = vlaneseq
        %v1209 = vshrl.u32 %v1208, 7
        %v1210 = vsub.s32 %v1207, %v1209
        %v1211 = vrot.slane %v1195, %v1210
        %v1213 = vunpack.c.l.s4 1966171168
        %v1214 = vunpack.c.0.s8 %v1213
        %v1215 = vlaneseq
        %v1216 = vshrl.u32 %v1215, 7
        %v1217 = vsub.s32 %v1214, %v1216
        %v1218 = vrot.slane %v1196, %v1217
        %v1220 = vunpack.c.l.s4 1966171168
        %v1221 = vunpack.c.0.s8 %v1220
        %v1222 = vlaneseq
        %v1223 = vshrl.u32 %v1222, 7
        %v1224 = vsub.s32 %v1221, %v1223
        %v1225 = vrot.slane %v1197, %v1224
        %v1226 = vcombine.low %v1204, %v1211
        %v1227 = vcombine.low %v1218, %v1225
        %v1229 = vunpack.c.l.s4 1966171168
        %v1230 = vunpack.c.0.s8 %v1229
        %v1231 = vlaneseq
        %v1232 = vshrl.u32 %v1231, 7
        %v1233 = vsub.s32 %v1230, %v1232
        %v1234 = vrot.slane %v1226, %v1233
        %v1236 = vunpack.c.l.s4 1966171168
        %v1237 = vunpack.c.0.s8 %v1236
        %v1238 = vlaneseq
        %v1239 = vshrl.u32 %v1238, 7
        %v1240 = vsub.s32 %v1237, %v1239
        %v1241 = vrot.slane %v1227, %v1240
        %v1242 = vcombine.low %v1234, %v1241
        %1244 = vst [vmem:[%s321] sm:$0xff] %v1242
      $region60: #{pointnet_encoder_forward.5} parent=47 // pred_fallthru
        _
      %p1245 = scmp.lt.s32.totalorder %s22, 1
      %s1246 = scalar_select %p1245, %s22, 1
      %s1247 = smul.addr %s1246, 8
      %s1248 = scalar_lea.vmem %s7, %s1247
      // Predicated region
      $region61: #{pointnet_encoder_forward.5} parent=47 // pred_check
        %p1249 = pneg %p207
      $region62: #{pointnet_encoder_forward.5} parent=47 // pred_check_branch
        %1251 = sbr.rel (%p1249) target = $region64
      $region63: #{pointnet_encoder_forward.5} parent=47 // pred_region
        _
      $region64: #{pointnet_encoder_forward.5} parent=47 // pred_fallthru
        _
    $region48: #{pointnet_encoder_forward.5} parent=5 // pred_fallthru
      _
    %p1252 = scmp.le.s32.totalorder 2, %s13
    // Predicated region
    $region65: #{pointnet_encoder_forward.5} parent=5 // pred_check
      %p1253 = pneg %p1252
    $region66: #{pointnet_encoder_forward.5} parent=5 // pred_check_branch
      %1255 = sbr.rel (%p1253) target = $region68
    $region67: #{pointnet_encoder_forward.5} parent=5 // pred_region
      %s1256 = ssub.s32 %s13, 2
      // Predicated region
      $region69: #{pointnet_encoder_forward.5} parent=67 // pred_check
        %p1257 = pneg %p213
      $region70: #{pointnet_encoder_forward.5} parent=67 // pred_check_branch
        %1259 = sbr.rel (%p1257) target = $region72
      $region71: #{pointnet_encoder_forward.5} parent=67 // pred_region
        %p1260 = scmp.lt.s32.totalorder %s24, 1
        %s1261 = scalar_select %p1260, %s24, 1
        %s1262 = smul.addr %s1261, 8
        %s1263 = scalar_lea.vmem %s7, %s1262
      $region72: #{pointnet_encoder_forward.5} parent=67 // pred_fallthru
        _
    $region68: #{pointnet_encoder_forward.5} parent=5 // pred_fallthru
      _
  $region6: #{pointnet_encoder_forward.5} parent=0 // loop_footer
    %s17 = sadd.s32 1, %s13
  $region7: #{pointnet_encoder_forward.5} parent=0 // loop_footer_branch
    %12 = sbr.rel target = $region3
  $region8: #{pointnet_encoder_forward.5} parent=0 // loop_exit
    _

// kernel: pointnet_encoder_forward.4
$region0: #{pointnet_encoder_forward.4}
  #allocation0 [shape = 'u32[]', space=smem, size = 0x4, offset = 0x4, fixed_abs, tag = 'smem constant byte address 0x4 - core index']
  #allocation1 [shape = 'u32[144,128]{1,0:T(1,128)}', space=vmem, size = 0x12000, scoped, tag = 'internal scratch']
  %s0 = inlined_call_operand.vmem [shape: f32[2,1024], index: 0, kind: input, shape index: {}]
  %s1 = inlined_call_operand.vmem [shape: bf16[1024,512], index: 1, kind: input, shape index: {}]
  %s2 = inlined_call_operand.vmem [shape: f32[1,512], index: 2, kind: input, shape index: {}]
  %s3 = inlined_call_operand.vmem [shape: bf16[512,256], index: 3, kind: input, shape index: {}]
  %s4 = inlined_call_operand.vmem [shape: f32[1,256], index: 4, kind: input, shape index: {}]
  %s5 = inlined_call_operand.vmem [shape: f32[256,9], index: 5, kind: input, shape index: {}]
  %s6 = inlined_call_operand.vmem [shape: f32[1,9], index: 6, kind: input, shape index: {}]
  %s7 = inlined_call_operand.vmem [shape: f32[2,9], index: 7, kind: output, shape index: {}]
  %s8 = sld [smem:[#allocation0]]
  $region38: #{pointnet_encoder_forward.4} parent=0
    _
  %s10 = ssub.s32 1, %s8
  %s11 = scalar_select 0, %s10, %s8
  // Predicated region
  $region2: #{pointnet_encoder_forward.4} parent=0 // pred_check
    _
  $region3: #{pointnet_encoder_forward.4} parent=0 // pred_check_branch
    %13 = sbr.rel (0) target = $region5
  $region4: #{pointnet_encoder_forward.4} parent=0 // pred_region
    _
  $region5: #{pointnet_encoder_forward.4} parent=0 // pred_fallthru
    _
  // Predicated region
  $region6: #{pointnet_encoder_forward.4} parent=0 // pred_check
    _
  $region7: #{pointnet_encoder_forward.4} parent=0 // pred_check_branch
    %15 = sbr.rel (0) target = $region9
  $region8: #{pointnet_encoder_forward.4} parent=0 // pred_region
    _
  $region9: #{pointnet_encoder_forward.4} parent=0 // pred_fallthru
    _
  // Predicated region
  $region10: #{pointnet_encoder_forward.4} parent=0 // pred_check
    _
  $region11: #{pointnet_encoder_forward.4} parent=0 // pred_check_branch
    %17 = sbr.rel (0) target = $region13
  $region12: #{pointnet_encoder_forward.4} parent=0 // pred_region
    _
  $region13: #{pointnet_encoder_forward.4} parent=0 // pred_fallthru
    _
  // Predicated region
  $region14: #{pointnet_encoder_forward.4} parent=0 // pred_check
    _
  $region15: #{pointnet_encoder_forward.4} parent=0 // pred_check_branch
    %19 = sbr.rel (0) target = $region17
  $region16: #{pointnet_encoder_forward.4} parent=0 // pred_region
    _
  $region17: #{pointnet_encoder_forward.4} parent=0 // pred_fallthru
    _
  // Predicated region
  $region18: #{pointnet_encoder_forward.4} parent=0 // pred_check
    _
  $region19: #{pointnet_encoder_forward.4} parent=0 // pred_check_branch
    %21 = sbr.rel (0) target = $region21
  $region20: #{pointnet_encoder_forward.4} parent=0 // pred_region
    _
  $region21: #{pointnet_encoder_forward.4} parent=0 // pred_fallthru
    _
  // Predicated region
  $region22: #{pointnet_encoder_forward.4} parent=0 // pred_check
    _
  $region23: #{pointnet_encoder_forward.4} parent=0 // pred_check_branch
    %23 = sbr.rel (0) target = $region25
  $region24: #{pointnet_encoder_forward.4} parent=0 // pred_region
    _
  $region25: #{pointnet_encoder_forward.4} parent=0 // pred_fallthru
    _
  // Predicated region
  $region26: #{pointnet_encoder_forward.4} parent=0 // pred_check
    _
  $region27: #{pointnet_encoder_forward.4} parent=0 // pred_check_branch
    %25 = sbr.rel (0) target = $region29
  $region28: #{pointnet_encoder_forward.4} parent=0 // pred_region
    _
  $region29: #{pointnet_encoder_forward.4} parent=0 // pred_fallthru
    _
  %v26 = vld [vmem:[%s0] sm:$0xff]
  %v27 = vld [vmem:[%s0 + $0x8] sm:$0xff]
  %v30 = vcombine.high %v26, %v26
  %v32 = vunpack.c.l.s4 1983009808
  %v33 = vunpack.c.0.s8 %v32
  %v34 = vlaneseq
  %v35 = vshrl.u32 %v34, 7
  %v36 = vsub.s32 %v33, %v35
  %v37 = vrot.slane %v26, %v36
  %v39 = vunpack.c.l.s4 1983009808
  %v40 = vunpack.c.0.s8 %v39
  %v41 = vlaneseq
  %v42 = vshrl.u32 %v41, 7
  %v43 = vsub.s32 %v40, %v42
  %v44 = vrot.slane %v30, %v43
  %v45 = vcombine.high %v37, %v37
  %v46 = vcombine.high %v44, %v44
  %v47 = vcombine.high %v27, %v27
  %v49 = vunpack.c.l.s4 1983009808
  %v50 = vunpack.c.0.s8 %v49
  %v51 = vlaneseq
  %v52 = vshrl.u32 %v51, 7
  %v53 = vsub.s32 %v50, %v52
  %v54 = vrot.slane %v27, %v53
  %v56 = vunpack.c.l.s4 1983009808
  %v57 = vunpack.c.0.s8 %v56
  %v58 = vlaneseq
  %v59 = vshrl.u32 %v58, 7
  %v60 = vsub.s32 %v57, %v59
  %v61 = vrot.slane %v47, %v60
  %v62 = vcombine.high %v54, %v54
  %v63 = vcombine.high %v61, %v61
  %v72 = vpack.c.bf16 %v37, %v37
  %v73 = vpack.c.bf16 %v45, %v45
  %v74 = vpack.c.bf16 %v44, %v44
  %v75 = vpack.c.bf16 %v46, %v46
  %v76 = vpack.c.bf16 %v54, %v54
  %v77 = vpack.c.bf16 %v62, %v62
  %v78 = vpack.c.bf16 %v61, %v61
  %v79 = vpack.c.bf16 %v63, %v63
  %v80 = vld [vmem:[%s1] sm:$0xff]
  %v81 = vld [vmem:[%s1 + $0x8] sm:$0xff]
  %v82 = vld [vmem:[%s1 + $0x10] sm:$0xff]
  %v83 = vld [vmem:[%s1 + $0x18] sm:$0xff]
  %v84 = vld [vmem:[%s1 + $0x20] sm:$0xff]
  %v85 = vld [vmem:[%s1 + $0x28] sm:$0xff]
  %v86 = vld [vmem:[%s1 + $0x30] sm:$0xff]
  %v87 = vld [vmem:[%s1 + $0x38] sm:$0xff]
  %v88 = vld [vmem:[%s1 + $0x40] sm:$0xff]
  %v89 = vld [vmem:[%s1 + $0x48] sm:$0xff]
  %v90 = vld [vmem:[%s1 + $0x50] sm:$0xff]
  %v91 = vld [vmem:[%s1 + $0x58] sm:$0xff]
  %v92 = vld [vmem:[%s1 + $0x60] sm:$0xff]
  %v93 = vld [vmem:[%s1 + $0x68] sm:$0xff]
  %v94 = vld [vmem:[%s1 + $0x70] sm:$0xff]
  %v95 = vld [vmem:[%s1 + $0x78] sm:$0xff]
  %v96 = vld [vmem:[%s1 + $0x80] sm:$0xff]
  %v97 = vld [vmem:[%s1 + $0x88] sm:$0xff]
  %v98 = vld [vmem:[%s1 + $0x90] sm:$0xff]
  %v99 = vld [vmem:[%s1 + $0x98] sm:$0xff]
  %v100 = vld [vmem:[%s1 + $0xa0] sm:$0xff]
  %v101 = vld [vmem:[%s1 + $0xa8] sm:$0xff]
  %v102 = vld [vmem:[%s1 + $0xb0] sm:$0xff]
  %v103 = vld [vmem:[%s1 + $0xb8] sm:$0xff]
  %v104 = vld [vmem:[%s1 + $0xc0] sm:$0xff]
  %v105 = vld [vmem:[%s1 + $0xc8] sm:$0xff]
  %v106 = vld [vmem:[%s1 + $0xd0] sm:$0xff]
  %v107 = vld [vmem:[%s1 + $0xd8] sm:$0xff]
  %v108 = vld [vmem:[%s1 + $0xe0] sm:$0xff]
  %v109 = vld [vmem:[%s1 + $0xe8] sm:$0xff]
  %v110 = vld [vmem:[%s1 + $0xf0] sm:$0xff]
  %v111 = vld [vmem:[%s1 + $0xf8] sm:$0xff]
  %v112 = vld [vmem:[%s1 + $0x100] sm:$0xff]
  %v113 = vld [vmem:[%s1 + $0x108] sm:$0xff]
  %v114 = vld [vmem:[%s1 + $0x110] sm:$0xff]
  %v115 = vld [vmem:[%s1 + $0x118] sm:$0xff]
  %v116 = vld [vmem:[%s1 + $0x120] sm:$0xff]
  %v117 = vld [vmem:[%s1 + $0x128] sm:$0xff]
  %v118 = vld [vmem:[%s1 + $0x130] sm:$0xff]
  %v119 = vld [vmem:[%s1 + $0x138] sm:$0xff]
  %v120 = vld [vmem:[%s1 + $0x140] sm:$0xff]
  %v121 = vld [vmem:[%s1 + $0x148] sm:$0xff]
  %v122 = vld [vmem:[%s1 + $0x150] sm:$0xff]
  %v123 = vld [vmem:[%s1 + $0x158] sm:$0xff]
  %v124 = vld [vmem:[%s1 + $0x160] sm:$0xff]
  %v125 = vld [vmem:[%s1 + $0x168] sm:$0xff]
  %v126 = vld [vmem:[%s1 + $0x170] sm:$0xff]
  %v127 = vld [vmem:[%s1 + $0x178] sm:$0xff]
  %v128 = vld [vmem:[%s1 + $0x180] sm:$0xff]
  %v129 = vld [vmem:[%s1 + $0x188] sm:$0xff]
  %v130 = vld [vmem:[%s1 + $0x190] sm:$0xff]
  %v131 = vld [vmem:[%s1 + $0x198] sm:$0xff]
  %v132 = vld [vmem:[%s1 + $0x1a0] sm:$0xff]
  %v133 = vld [vmem:[%s1 + $0x1a8] sm:$0xff]
  %v134 = vld [vmem:[%s1 + $0x1b0] sm:$0xff]
  %v135 = vld [vmem:[%s1 + $0x1b8] sm:$0xff]
  %v136 = vld [vmem:[%s1 + $0x1c0] sm:$0xff]
  %v137 = vld [vmem:[%s1 + $0x1c8] sm:$0xff]
  %v138 = vld [vmem:[%s1 + $0x1d0] sm:$0xff]
  %v139 = vld [vmem:[%s1 + $0x1d8] sm:$0xff]
  %v140 = vld [vmem:[%s1 + $0x1e0] sm:$0xff]
  %v141 = vld [vmem:[%s1 + $0x1e8] sm:$0xff]
  %v142 = vld [vmem:[%s1 + $0x1f0] sm:$0xff]
  %v143 = vld [vmem:[%s1 + $0x1f8] sm:$0xff]
  %v144 = vld [vmem:[%s1 + $0x200] sm:$0xff]
  %v145 = vld [vmem:[%s1 + $0x208] sm:$0xff]
  %v146 = vld [vmem:[%s1 + $0x210] sm:$0xff]
  %v147 = vld [vmem:[%s1 + $0x218] sm:$0xff]
  %v148 = vld [vmem:[%s1 + $0x220] sm:$0xff]
  %v149 = vld [vmem:[%s1 + $0x228] sm:$0xff]
  %v150 = vld [vmem:[%s1 + $0x230] sm:$0xff]
  %v151 = vld [vmem:[%s1 + $0x238] sm:$0xff]
  %v152 = vld [vmem:[%s1 + $0x240] sm:$0xff]
  %v153 = vld [vmem:[%s1 + $0x248] sm:$0xff]
  %v154 = vld [vmem:[%s1 + $0x250] sm:$0xff]
  %v155 = vld [vmem:[%s1 + $0x258] sm:$0xff]
  %v156 = vld [vmem:[%s1 + $0x260] sm:$0xff]
  %v157 = vld [vmem:[%s1 + $0x268] sm:$0xff]
  %v158 = vld [vmem:[%s1 + $0x270] sm:$0xff]
  %v159 = vld [vmem:[%s1 + $0x278] sm:$0xff]
  %v160 = vld [vmem:[%s1 + $0x280] sm:$0xff]
  %v161 = vld [vmem:[%s1 + $0x288] sm:$0xff]
  %v162 = vld [vmem:[%s1 + $0x290] sm:$0xff]
  %v163 = vld [vmem:[%s1 + $0x298] sm:$0xff]
  %v164 = vld [vmem:[%s1 + $0x2a0] sm:$0xff]
  %v165 = vld [vmem:[%s1 + $0x2a8] sm:$0xff]
  %v166 = vld [vmem:[%s1 + $0x2b0] sm:$0xff]
  %v167 = vld [vmem:[%s1 + $0x2b8] sm:$0xff]
  %v168 = vld [vmem:[%s1 + $0x2c0] sm:$0xff]
  %v169 = vld [vmem:[%s1 + $0x2c8] sm:$0xff]
  %v170 = vld [vmem:[%s1 + $0x2d0] sm:$0xff]
  %v171 = vld [vmem:[%s1 + $0x2d8] sm:$0xff]
  %v172 = vld [vmem:[%s1 + $0x2e0] sm:$0xff]
  %v173 = vld [vmem:[%s1 + $0x2e8] sm:$0xff]
  %v174 = vld [vmem:[%s1 + $0x2f0] sm:$0xff]
  %v175 = vld [vmem:[%s1 + $0x2f8] sm:$0xff]
  %v176 = vld [vmem:[%s1 + $0x300] sm:$0xff]
  %v177 = vld [vmem:[%s1 + $0x308] sm:$0xff]
  %v178 = vld [vmem:[%s1 + $0x310] sm:$0xff]
  %v179 = vld [vmem:[%s1 + $0x318] sm:$0xff]
  %v180 = vld [vmem:[%s1 + $0x320] sm:$0xff]
  %v181 = vld [vmem:[%s1 + $0x328] sm:$0xff]
  %v182 = vld [vmem:[%s1 + $0x330] sm:$0xff]
  %v183 = vld [vmem:[%s1 + $0x338] sm:$0xff]
  %v184 = vld [vmem:[%s1 + $0x340] sm:$0xff]
  %v185 = vld [vmem:[%s1 + $0x348] sm:$0xff]
  %v186 = vld [vmem:[%s1 + $0x350] sm:$0xff]
  %v187 = vld [vmem:[%s1 + $0x358] sm:$0xff]
  %v188 = vld [vmem:[%s1 + $0x360] sm:$0xff]
  %v189 = vld [vmem:[%s1 + $0x368] sm:$0xff]
  %v190 = vld [vmem:[%s1 + $0x370] sm:$0xff]
  %v191 = vld [vmem:[%s1 + $0x378] sm:$0xff]
  %v192 = vld [vmem:[%s1 + $0x380] sm:$0xff]
  %v193 = vld [vmem:[%s1 + $0x388] sm:$0xff]
  %v194 = vld [vmem:[%s1 + $0x390] sm:$0xff]
  %v195 = vld [vmem:[%s1 + $0x398] sm:$0xff]
  %v196 = vld [vmem:[%s1 + $0x3a0] sm:$0xff]
  %v197 = vld [vmem:[%s1 + $0x3a8] sm:$0xff]
  %v198 = vld [vmem:[%s1 + $0x3b0] sm:$0xff]
  %v199 = vld [vmem:[%s1 + $0x3b8] sm:$0xff]
  %v200 = vld [vmem:[%s1 + $0x3c0] sm:$0xff]
  %v201 = vld [vmem:[%s1 + $0x3c8] sm:$0xff]
  %v202 = vld [vmem:[%s1 + $0x3d0] sm:$0xff]
  %v203 = vld [vmem:[%s1 + $0x3d8] sm:$0xff]
  %v204 = vld [vmem:[%s1 + $0x3e0] sm:$0xff]
  %v205 = vld [vmem:[%s1 + $0x3e8] sm:$0xff]
  %v206 = vld [vmem:[%s1 + $0x3f0] sm:$0xff]
  %v207 = vld [vmem:[%s1 + $0x3f8] sm:$0xff]
  %v208 = vld [vmem:[%s1 + $0x400] sm:$0xff]
  %v209 = vld [vmem:[%s1 + $0x408] sm:$0xff]
  %v210 = vld [vmem:[%s1 + $0x410] sm:$0xff]
  %v211 = vld [vmem:[%s1 + $0x418] sm:$0xff]
  %v212 = vld [vmem:[%s1 + $0x420] sm:$0xff]
  %v213 = vld [vmem:[%s1 + $0x428] sm:$0xff]
  %v214 = vld [vmem:[%s1 + $0x430] sm:$0xff]
  %v215 = vld [vmem:[%s1 + $0x438] sm:$0xff]
  %v216 = vld [vmem:[%s1 + $0x440] sm:$0xff]
  %v217 = vld [vmem:[%s1 + $0x448] sm:$0xff]
  %v218 = vld [vmem:[%s1 + $0x450] sm:$0xff]
  %v219 = vld [vmem:[%s1 + $0x458] sm:$0xff]
  %v220 = vld [vmem:[%s1 + $0x460] sm:$0xff]
  %v221 = vld [vmem:[%s1 + $0x468] sm:$0xff]
  %v222 = vld [vmem:[%s1 + $0x470] sm:$0xff]
  %v223 = vld [vmem:[%s1 + $0x478] sm:$0xff]
  %v224 = vld [vmem:[%s1 + $0x480] sm:$0xff]
  %v225 = vld [vmem:[%s1 + $0x488] sm:$0xff]
  %v226 = vld [vmem:[%s1 + $0x490] sm:$0xff]
  %v227 = vld [vmem:[%s1 + $0x498] sm:$0xff]
  %v228 = vld [vmem:[%s1 + $0x4a0] sm:$0xff]
  %v229 = vld [vmem:[%s1 + $0x4a8] sm:$0xff]
  %v230 = vld [vmem:[%s1 + $0x4b0] sm:$0xff]
  %v231 = vld [vmem:[%s1 + $0x4b8] sm:$0xff]
  %v232 = vld [vmem:[%s1 + $0x4c0] sm:$0xff]
  %v233 = vld [vmem:[%s1 + $0x4c8] sm:$0xff]
  %v234 = vld [vmem:[%s1 + $0x4d0] sm:$0xff]
  %v235 = vld [vmem:[%s1 + $0x4d8] sm:$0xff]
  %v236 = vld [vmem:[%s1 + $0x4e0] sm:$0xff]
  %v237 = vld [vmem:[%s1 + $0x4e8] sm:$0xff]
  %v238 = vld [vmem:[%s1 + $0x4f0] sm:$0xff]
  %v239 = vld [vmem:[%s1 + $0x4f8] sm:$0xff]
  %v240 = vld [vmem:[%s1 + $0x500] sm:$0xff]
  %v241 = vld [vmem:[%s1 + $0x508] sm:$0xff]
  %v242 = vld [vmem:[%s1 + $0x510] sm:$0xff]
  %v243 = vld [vmem:[%s1 + $0x518] sm:$0xff]
  %v244 = vld [vmem:[%s1 + $0x520] sm:$0xff]
  %v245 = vld [vmem:[%s1 + $0x528] sm:$0xff]
  %v246 = vld [vmem:[%s1 + $0x530] sm:$0xff]
  %v247 = vld [vmem:[%s1 + $0x538] sm:$0xff]
  %v248 = vld [vmem:[%s1 + $0x540] sm:$0xff]
  %v249 = vld [vmem:[%s1 + $0x548] sm:$0xff]
  %v250 = vld [vmem:[%s1 + $0x550] sm:$0xff]
  %v251 = vld [vmem:[%s1 + $0x558] sm:$0xff]
  %v252 = vld [vmem:[%s1 + $0x560] sm:$0xff]
  %v253 = vld [vmem:[%s1 + $0x568] sm:$0xff]
  %v254 = vld [vmem:[%s1 + $0x570] sm:$0xff]
  %v255 = vld [vmem:[%s1 + $0x578] sm:$0xff]
  %v256 = vld [vmem:[%s1 + $0x580] sm:$0xff]
  %v257 = vld [vmem:[%s1 + $0x588] sm:$0xff]
  %v258 = vld [vmem:[%s1 + $0x590] sm:$0xff]
  %v259 = vld [vmem:[%s1 + $0x598] sm:$0xff]
  %v260 = vld [vmem:[%s1 + $0x5a0] sm:$0xff]
  %v261 = vld [vmem:[%s1 + $0x5a8] sm:$0xff]
  %v262 = vld [vmem:[%s1 + $0x5b0] sm:$0xff]
  %v263 = vld [vmem:[%s1 + $0x5b8] sm:$0xff]
  %v264 = vld [vmem:[%s1 + $0x5c0] sm:$0xff]
  %v265 = vld [vmem:[%s1 + $0x5c8] sm:$0xff]
  %v266 = vld [vmem:[%s1 + $0x5d0] sm:$0xff]
  %v267 = vld [vmem:[%s1 + $0x5d8] sm:$0xff]
  %v268 = vld [vmem:[%s1 + $0x5e0] sm:$0xff]
  %v269 = vld [vmem:[%s1 + $0x5e8] sm:$0xff]
  %v270 = vld [vmem:[%s1 + $0x5f0] sm:$0xff]
  %v271 = vld [vmem:[%s1 + $0x5f8] sm:$0xff]
  %v272 = vld [vmem:[%s1 + $0x600] sm:$0xff]
  %v273 = vld [vmem:[%s1 + $0x608] sm:$0xff]
  %v274 = vld [vmem:[%s1 + $0x610] sm:$0xff]
  %v275 = vld [vmem:[%s1 + $0x618] sm:$0xff]
  %v276 = vld [vmem:[%s1 + $0x620] sm:$0xff]
  %v277 = vld [vmem:[%s1 + $0x628] sm:$0xff]
  %v278 = vld [vmem:[%s1 + $0x630] sm:$0xff]
  %v279 = vld [vmem:[%s1 + $0x638] sm:$0xff]
  %v280 = vld [vmem:[%s1 + $0x640] sm:$0xff]
  %v281 = vld [vmem:[%s1 + $0x648] sm:$0xff]
  %v282 = vld [vmem:[%s1 + $0x650] sm:$0xff]
  %v283 = vld [vmem:[%s1 + $0x658] sm:$0xff]
  %v284 = vld [vmem:[%s1 + $0x660] sm:$0xff]
  %v285 = vld [vmem:[%s1 + $0x668] sm:$0xff]
  %v286 = vld [vmem:[%s1 + $0x670] sm:$0xff]
  %v287 = vld [vmem:[%s1 + $0x678] sm:$0xff]
  %v288 = vld [vmem:[%s1 + $0x680] sm:$0xff]
  %v289 = vld [vmem:[%s1 + $0x688] sm:$0xff]
  %v290 = vld [vmem:[%s1 + $0x690] sm:$0xff]
  %v291 = vld [vmem:[%s1 + $0x698] sm:$0xff]
  %v292 = vld [vmem:[%s1 + $0x6a0] sm:$0xff]
  %v293 = vld [vmem:[%s1 + $0x6a8] sm:$0xff]
  %v294 = vld [vmem:[%s1 + $0x6b0] sm:$0xff]
  %v295 = vld [vmem:[%s1 + $0x6b8] sm:$0xff]
  %v296 = vld [vmem:[%s1 + $0x6c0] sm:$0xff]
  %v297 = vld [vmem:[%s1 + $0x6c8] sm:$0xff]
  %v298 = vld [vmem:[%s1 + $0x6d0] sm:$0xff]
  %v299 = vld [vmem:[%s1 + $0x6d8] sm:$0xff]
  %v300 = vld [vmem:[%s1 + $0x6e0] sm:$0xff]
  %v301 = vld [vmem:[%s1 + $0x6e8] sm:$0xff]
  %v302 = vld [vmem:[%s1 + $0x6f0] sm:$0xff]
  %v303 = vld [vmem:[%s1 + $0x6f8] sm:$0xff]
  %v304 = vld [vmem:[%s1 + $0x700] sm:$0xff]
  %v305 = vld [vmem:[%s1 + $0x708] sm:$0xff]
  %v306 = vld [vmem:[%s1 + $0x710] sm:$0xff]
  %v307 = vld [vmem:[%s1 + $0x718] sm:$0xff]
  %v308 = vld [vmem:[%s1 + $0x720] sm:$0xff]
  %v309 = vld [vmem:[%s1 + $0x728] sm:$0xff]
  %v310 = vld [vmem:[%s1 + $0x730] sm:$0xff]
  %v311 = vld [vmem:[%s1 + $0x738] sm:$0xff]
  %v312 = vld [vmem:[%s1 + $0x740] sm:$0xff]
  %v313 = vld [vmem:[%s1 + $0x748] sm:$0xff]
  %v314 = vld [vmem:[%s1 + $0x750] sm:$0xff]
  %v315 = vld [vmem:[%s1 + $0x758] sm:$0xff]
  %v316 = vld [vmem:[%s1 + $0x760] sm:$0xff]
  %v317 = vld [vmem:[%s1 + $0x768] sm:$0xff]
  %v318 = vld [vmem:[%s1 + $0x770] sm:$0xff]
  %v319 = vld [vmem:[%s1 + $0x778] sm:$0xff]
  %v320 = vld [vmem:[%s1 + $0x780] sm:$0xff]
  %v321 = vld [vmem:[%s1 + $0x788] sm:$0xff]
  %v322 = vld [vmem:[%s1 + $0x790] sm:$0xff]
  %v323 = vld [vmem:[%s1 + $0x798] sm:$0xff]
  %v324 = vld [vmem:[%s1 + $0x7a0] sm:$0xff]
  %v325 = vld [vmem:[%s1 + $0x7a8] sm:$0xff]
  %v326 = vld [vmem:[%s1 + $0x7b0] sm:$0xff]
  %v327 = vld [vmem:[%s1 + $0x7b8] sm:$0xff]
  %v328 = vld [vmem:[%s1 + $0x7c0] sm:$0xff]
  %v329 = vld [vmem:[%s1 + $0x7c8] sm:$0xff]
  %v330 = vld [vmem:[%s1 + $0x7d0] sm:$0xff]
  %v331 = vld [vmem:[%s1 + $0x7d8] sm:$0xff]
  %v332 = vld [vmem:[%s1 + $0x7e0] sm:$0xff]
  %v333 = vld [vmem:[%s1 + $0x7e8] sm:$0xff]
  %v334 = vld [vmem:[%s1 + $0x7f0] sm:$0xff]
  %v335 = vld [vmem:[%s1 + $0x7f8] sm:$0xff]
  %v336 = vld [vmem:[%s2] sm:$0xf]
  %v338 = vlaneseq
  %v339 = vshrl.u32 %v338, 7
  %v340 = vsub.s32 0, %v339
  %v341 = vrot.slane %v336, %v340
  %v342 = vlaneseq
  %v343 = vshrl.u32 %v342, 7
  %v344 = vsub.s32 1, %v343
  %v345 = vrot.slane %v336, %v344
  %v346 = vlaneseq
  %v347 = vshrl.u32 %v346, 7
  %v348 = vsub.s32 2, %v347
  %v349 = vrot.slane %v336, %v348
  %v350 = vlaneseq
  %v351 = vshrl.u32 %v350, 7
  %v352 = vsub.s32 3, %v351
  %v353 = vrot.slane %v336, %v352
  %v614 = vunpack.c.l.b16 %v80
  %v615 = vunpack.c.h.b16 %v80
  %v616 = vunpack.c.l.b16 %v81
  %v617 = vunpack.c.h.b16 %v81
  %v618 = vunpack.c.l.b16 %v82
  %v619 = vunpack.c.h.b16 %v82
  %v620 = vunpack.c.l.b16 %v83
  %v621 = vunpack.c.h.b16 %v83
  %v622 = vunpack.c.l.b16 %v84
  %v623 = vunpack.c.h.b16 %v84
  %v624 = vunpack.c.l.b16 %v85
  %v625 = vunpack.c.h.b16 %v85
  %v626 = vunpack.c.l.b16 %v86
  %v627 = vunpack.c.h.b16 %v86
  %v628 = vunpack.c.l.b16 %v87
  %v629 = vunpack.c.h.b16 %v87
  %v630 = vunpack.c.l.b16 %v88
  %v631 = vunpack.c.h.b16 %v88
  %v632 = vunpack.c.l.b16 %v89
  %v633 = vunpack.c.h.b16 %v89
  %v634 = vunpack.c.l.b16 %v90
  %v635 = vunpack.c.h.b16 %v90
  %v636 = vunpack.c.l.b16 %v91
  %v637 = vunpack.c.h.b16 %v91
  %v638 = vunpack.c.l.b16 %v92
  %v639 = vunpack.c.h.b16 %v92
  %v640 = vunpack.c.l.b16 %v93
  %v641 = vunpack.c.h.b16 %v93
  %v642 = vunpack.c.l.b16 %v94
  %v643 = vunpack.c.h.b16 %v94
  %v644 = vunpack.c.l.b16 %v95
  %v645 = vunpack.c.h.b16 %v95
  %v646 = vunpack.c.l.b16 %v96
  %v647 = vunpack.c.h.b16 %v96
  %v648 = vunpack.c.l.b16 %v97
  %v649 = vunpack.c.h.b16 %v97
  %v650 = vunpack.c.l.b16 %v98
  %v651 = vunpack.c.h.b16 %v98
  %v652 = vunpack.c.l.b16 %v99
  %v653 = vunpack.c.h.b16 %v99
  %v654 = vunpack.c.l.b16 %v100
  %v655 = vunpack.c.h.b16 %v100
  %v656 = vunpack.c.l.b16 %v101
  %v657 = vunpack.c.h.b16 %v101
  %v658 = vunpack.c.l.b16 %v102
  %v659 = vunpack.c.h.b16 %v102
  %v660 = vunpack.c.l.b16 %v103
  %v661 = vunpack.c.h.b16 %v103
  %v662 = vunpack.c.l.b16 %v104
  %v663 = vunpack.c.h.b16 %v104
  %v664 = vunpack.c.l.b16 %v105
  %v665 = vunpack.c.h.b16 %v105
  %v666 = vunpack.c.l.b16 %v106
  %v667 = vunpack.c.h.b16 %v106
  %v668 = vunpack.c.l.b16 %v107
  %v669 = vunpack.c.h.b16 %v107
  %v670 = vunpack.c.l.b16 %v108
  %v671 = vunpack.c.h.b16 %v108
  %v672 = vunpack.c.l.b16 %v109
  %v673 = vunpack.c.h.b16 %v109
  %v674 = vunpack.c.l.b16 %v110
  %v675 = vunpack.c.h.b16 %v110
  %v676 = vunpack.c.l.b16 %v111
  %v677 = vunpack.c.h.b16 %v111
  %v678 = vunpack.c.l.b16 %v112
  %v679 = vunpack.c.h.b16 %v112
  %v680 = vunpack.c.l.b16 %v113
  %v681 = vunpack.c.h.b16 %v113
  %v682 = vunpack.c.l.b16 %v114
  %v683 = vunpack.c.h.b16 %v114
  %v684 = vunpack.c.l.b16 %v115
  %v685 = vunpack.c.h.b16 %v115
  %v686 = vunpack.c.l.b16 %v116
  %v687 = vunpack.c.h.b16 %v116
  %v688 = vunpack.c.l.b16 %v117
  %v689 = vunpack.c.h.b16 %v117
  %v690 = vunpack.c.l.b16 %v118
  %v691 = vunpack.c.h.b16 %v118
  %v692 = vunpack.c.l.b16 %v119
  %v693 = vunpack.c.h.b16 %v119
  %v694 = vunpack.c.l.b16 %v120
  %v695 = vunpack.c.h.b16 %v120
  %v696 = vunpack.c.l.b16 %v121
  %v697 = vunpack.c.h.b16 %v121
  %v698 = vunpack.c.l.b16 %v122
  %v699 = vunpack.c.h.b16 %v122
  %v700 = vunpack.c.l.b16 %v123
  %v701 = vunpack.c.h.b16 %v123
  %v702 = vunpack.c.l.b16 %v124
  %v703 = vunpack.c.h.b16 %v124
  %v704 = vunpack.c.l.b16 %v125
  %v705 = vunpack.c.h.b16 %v125
  %v706 = vunpack.c.l.b16 %v126
  %v707 = vunpack.c.h.b16 %v126
  %v708 = vunpack.c.l.b16 %v127
  %v709 = vunpack.c.h.b16 %v127
  %v710 = vunpack.c.l.b16 %v128
  %v711 = vunpack.c.h.b16 %v128
  %v712 = vunpack.c.l.b16 %v129
  %v713 = vunpack.c.h.b16 %v129
  %v714 = vunpack.c.l.b16 %v130
  %v715 = vunpack.c.h.b16 %v130
  %v716 = vunpack.c.l.b16 %v131
  %v717 = vunpack.c.h.b16 %v131
  %v718 = vunpack.c.l.b16 %v132
  %v719 = vunpack.c.h.b16 %v132
  %v720 = vunpack.c.l.b16 %v133
  %v721 = vunpack.c.h.b16 %v133
  %v722 = vunpack.c.l.b16 %v134
  %v723 = vunpack.c.h.b16 %v134
  %v724 = vunpack.c.l.b16 %v135
  %v725 = vunpack.c.h.b16 %v135
  %v726 = vunpack.c.l.b16 %v136
  %v727 = vunpack.c.h.b16 %v136
  %v728 = vunpack.c.l.b16 %v137
  %v729 = vunpack.c.h.b16 %v137
  %v730 = vunpack.c.l.b16 %v138
  %v731 = vunpack.c.h.b16 %v138
  %v732 = vunpack.c.l.b16 %v139
  %v733 = vunpack.c.h.b16 %v139
  %v734 = vunpack.c.l.b16 %v140
  %v735 = vunpack.c.h.b16 %v140
  %v736 = vunpack.c.l.b16 %v141
  %v737 = vunpack.c.h.b16 %v141
  %v738 = vunpack.c.l.b16 %v142
  %v739 = vunpack.c.h.b16 %v142
  %v740 = vunpack.c.l.b16 %v143
  %v741 = vunpack.c.h.b16 %v143
  %v742 = vunpack.c.l.b16 %v144
  %v743 = vunpack.c.h.b16 %v144
  %v744 = vunpack.c.l.b16 %v145
  %v745 = vunpack.c.h.b16 %v145
  %v746 = vunpack.c.l.b16 %v146
  %v747 = vunpack.c.h.b16 %v146
  %v748 = vunpack.c.l.b16 %v147
  %v749 = vunpack.c.h.b16 %v147
  %v750 = vunpack.c.l.b16 %v148
  %v751 = vunpack.c.h.b16 %v148
  %v752 = vunpack.c.l.b16 %v149
  %v753 = vunpack.c.h.b16 %v149
  %v754 = vunpack.c.l.b16 %v150
  %v755 = vunpack.c.h.b16 %v150
  %v756 = vunpack.c.l.b16 %v151
  %v757 = vunpack.c.h.b16 %v151
  %v758 = vunpack.c.l.b16 %v152
  %v759 = vunpack.c.h.b16 %v152
  %v760 = vunpack.c.l.b16 %v153
  %v761 = vunpack.c.h.b16 %v153
  %v762 = vunpack.c.l.b16 %v154
  %v763 = vunpack.c.h.b16 %v154
  %v764 = vunpack.c.l.b16 %v155
  %v765 = vunpack.c.h.b16 %v155
  %v766 = vunpack.c.l.b16 %v156
  %v767 = vunpack.c.h.b16 %v156
  %v768 = vunpack.c.l.b16 %v157
  %v769 = vunpack.c.h.b16 %v157
  %v770 = vunpack.c.l.b16 %v158
  %v771 = vunpack.c.h.b16 %v158
  %v772 = vunpack.c.l.b16 %v159
  %v773 = vunpack.c.h.b16 %v159
  %v774 = vunpack.c.l.b16 %v160
  %v775 = vunpack.c.h.b16 %v160
  %v776 = vunpack.c.l.b16 %v161
  %v777 = vunpack.c.h.b16 %v161
  %v778 = vunpack.c.l.b16 %v162
  %v779 = vunpack.c.h.b16 %v162
  %v780 = vunpack.c.l.b16 %v163
  %v781 = vunpack.c.h.b16 %v163
  %v782 = vunpack.c.l.b16 %v164
  %v783 = vunpack.c.h.b16 %v164
  %v784 = vunpack.c.l.b16 %v165
  %v785 = vunpack.c.h.b16 %v165
  %v786 = vunpack.c.l.b16 %v166
  %v787 = vunpack.c.h.b16 %v166
  %v788 = vunpack.c.l.b16 %v167
  %v789 = vunpack.c.h.b16 %v167
  %v790 = vunpack.c.l.b16 %v168
  %v791 = vunpack.c.h.b16 %v168
  %v792 = vunpack.c.l.b16 %v169
  %v793 = vunpack.c.h.b16 %v169
  %v794 = vunpack.c.l.b16 %v170
  %v795 = vunpack.c.h.b16 %v170
  %v796 = vunpack.c.l.b16 %v171
  %v797 = vunpack.c.h.b16 %v171
  %v798 = vunpack.c.l.b16 %v172
  %v799 = vunpack.c.h.b16 %v172
  %v800 = vunpack.c.l.b16 %v173
  %v801 = vunpack.c.h.b16 %v173
  %v802 = vunpack.c.l.b16 %v174
  %v803 = vunpack.c.h.b16 %v174
  %v804 = vunpack.c.l.b16 %v175
  %v805 = vunpack.c.h.b16 %v175
  %v806 = vunpack.c.l.b16 %v176
  %v807 = vunpack.c.h.b16 %v176
  %v808 = vunpack.c.l.b16 %v177
  %v809 = vunpack.c.h.b16 %v177
  %v810 = vunpack.c.l.b16 %v178
  %v811 = vunpack.c.h.b16 %v178
  %v812 = vunpack.c.l.b16 %v179
  %v813 = vunpack.c.h.b16 %v179
  %v814 = vunpack.c.l.b16 %v180
  %v815 = vunpack.c.h.b16 %v180
  %v816 = vunpack.c.l.b16 %v181
  %v817 = vunpack.c.h.b16 %v181
  %v818 = vunpack.c.l.b16 %v182
  %v819 = vunpack.c.h.b16 %v182
  %v820 = vunpack.c.l.b16 %v183
  %v821 = vunpack.c.h.b16 %v183
  %v822 = vunpack.c.l.b16 %v184
  %v823 = vunpack.c.h.b16 %v184
  %v824 = vunpack.c.l.b16 %v185
  %v825 = vunpack.c.h.b16 %v185
  %v826 = vunpack.c.l.b16 %v186
  %v827 = vunpack.c.h.b16 %v186
  %v828 = vunpack.c.l.b16 %v187
  %v829 = vunpack.c.h.b16 %v187
  %v830 = vunpack.c.l.b16 %v188
  %v831 = vunpack.c.h.b16 %v188
  %v832 = vunpack.c.l.b16 %v189
  %v833 = vunpack.c.h.b16 %v189
  %v834 = vunpack.c.l.b16 %v190
  %v835 = vunpack.c.h.b16 %v190
  %v836 = vunpack.c.l.b16 %v191
  %v837 = vunpack.c.h.b16 %v191
  %v838 = vunpack.c.l.b16 %v192
  %v839 = vunpack.c.h.b16 %v192
  %v840 = vunpack.c.l.b16 %v193
  %v841 = vunpack.c.h.b16 %v193
  %v842 = vunpack.c.l.b16 %v194
  %v843 = vunpack.c.h.b16 %v194
  %v844 = vunpack.c.l.b16 %v195
  %v845 = vunpack.c.h.b16 %v195
  %v846 = vunpack.c.l.b16 %v196
  %v847 = vunpack.c.h.b16 %v196
  %v848 = vunpack.c.l.b16 %v197
  %v849 = vunpack.c.h.b16 %v197
  %v850 = vunpack.c.l.b16 %v198
  %v851 = vunpack.c.h.b16 %v198
  %v852 = vunpack.c.l.b16 %v199
  %v853 = vunpack.c.h.b16 %v199
  %v854 = vunpack.c.l.b16 %v200
  %v855 = vunpack.c.h.b16 %v200
  %v856 = vunpack.c.l.b16 %v201
  %v857 = vunpack.c.h.b16 %v201
  %v858 = vunpack.c.l.b16 %v202
  %v859 = vunpack.c.h.b16 %v202
  %v860 = vunpack.c.l.b16 %v203
  %v861 = vunpack.c.h.b16 %v203
  %v862 = vunpack.c.l.b16 %v204
  %v863 = vunpack.c.h.b16 %v204
  %v864 = vunpack.c.l.b16 %v205
  %v865 = vunpack.c.h.b16 %v205
  %v866 = vunpack.c.l.b16 %v206
  %v867 = vunpack.c.h.b16 %v206
  %v868 = vunpack.c.l.b16 %v207
  %v869 = vunpack.c.h.b16 %v207
  %v870 = vunpack.c.l.b16 %v208
  %v871 = vunpack.c.h.b16 %v208
  %v872 = vunpack.c.l.b16 %v209
  %v873 = vunpack.c.h.b16 %v209
  %v874 = vunpack.c.l.b16 %v210
  %v875 = vunpack.c.h.b16 %v210
  %v876 = vunpack.c.l.b16 %v211
  %v877 = vunpack.c.h.b16 %v211
  %v878 = vunpack.c.l.b16 %v212
  %v879 = vunpack.c.h.b16 %v212
  %v880 = vunpack.c.l.b16 %v213
  %v881 = vunpack.c.h.b16 %v213
  %v882 = vunpack.c.l.b16 %v214
  %v883 = vunpack.c.h.b16 %v214
  %v884 = vunpack.c.l.b16 %v215
  %v885 = vunpack.c.h.b16 %v215
  %v886 = vunpack.c.l.b16 %v216
  %v887 = vunpack.c.h.b16 %v216
  %v888 = vunpack.c.l.b16 %v217
  %v889 = vunpack.c.h.b16 %v217
  %v890 = vunpack.c.l.b16 %v218
  %v891 = vunpack.c.h.b16 %v218
  %v892 = vunpack.c.l.b16 %v219
  %v893 = vunpack.c.h.b16 %v219
  %v894 = vunpack.c.l.b16 %v220
  %v895 = vunpack.c.h.b16 %v220
  %v896 = vunpack.c.l.b16 %v221
  %v897 = vunpack.c.h.b16 %v221
  %v898 = vunpack.c.l.b16 %v222
  %v899 = vunpack.c.h.b16 %v222
  %v900 = vunpack.c.l.b16 %v223
  %v901 = vunpack.c.h.b16 %v223
  %v902 = vunpack.c.l.b16 %v224
  %v903 = vunpack.c.h.b16 %v224
  %v904 = vunpack.c.l.b16 %v225
  %v905 = vunpack.c.h.b16 %v225
  %v906 = vunpack.c.l.b16 %v226
  %v907 = vunpack.c.h.b16 %v226
  %v908 = vunpack.c.l.b16 %v227
  %v909 = vunpack.c.h.b16 %v227
  %v910 = vunpack.c.l.b16 %v228
  %v911 = vunpack.c.h.b16 %v228
  %v912 = vunpack.c.l.b16 %v229
  %v913 = vunpack.c.h.b16 %v229
  %v914 = vunpack.c.l.b16 %v230
  %v915 = vunpack.c.h.b16 %v230
  %v916 = vunpack.c.l.b16 %v231
  %v917 = vunpack.c.h.b16 %v231
  %v918 = vunpack.c.l.b16 %v232
  %v919 = vunpack.c.h.b16 %v232
  %v920 = vunpack.c.l.b16 %v233
  %v921 = vunpack.c.h.b16 %v233
  %v922 = vunpack.c.l.b16 %v234
  %v923 = vunpack.c.h.b16 %v234
  %v924 = vunpack.c.l.b16 %v235
  %v925 = vunpack.c.h.b16 %v235
  %v926 = vunpack.c.l.b16 %v236
  %v927 = vunpack.c.h.b16 %v236
  %v928 = vunpack.c.l.b16 %v237
  %v929 = vunpack.c.h.b16 %v237
  %v930 = vunpack.c.l.b16 %v238
  %v931 = vunpack.c.h.b16 %v238
  %v932 = vunpack.c.l.b16 %v239
  %v933 = vunpack.c.h.b16 %v239
  %v934 = vunpack.c.l.b16 %v240
  %v935 = vunpack.c.h.b16 %v240
  %v936 = vunpack.c.l.b16 %v241
  %v937 = vunpack.c.h.b16 %v241
  %v938 = vunpack.c.l.b16 %v242
  %v939 = vunpack.c.h.b16 %v242
  %v940 = vunpack.c.l.b16 %v243
  %v941 = vunpack.c.h.b16 %v243
  %v942 = vunpack.c.l.b16 %v244
  %v943 = vunpack.c.h.b16 %v244
  %v944 = vunpack.c.l.b16 %v245
  %v945 = vunpack.c.h.b16 %v245
  %v946 = vunpack.c.l.b16 %v246
  %v947 = vunpack.c.h.b16 %v246
  %v948 = vunpack.c.l.b16 %v247
  %v949 = vunpack.c.h.b16 %v247
  %v950 = vunpack.c.l.b16 %v248
  %v951 = vunpack.c.h.b16 %v248
  %v952 = vunpack.c.l.b16 %v249
  %v953 = vunpack.c.h.b16 %v249
  %v954 = vunpack.c.l.b16 %v250
  %v955 = vunpack.c.h.b16 %v250
  %v956 = vunpack.c.l.b16 %v251
  %v957 = vunpack.c.h.b16 %v251
  %v958 = vunpack.c.l.b16 %v252
  %v959 = vunpack.c.h.b16 %v252
  %v960 = vunpack.c.l.b16 %v253
  %v961 = vunpack.c.h.b16 %v253
  %v962 = vunpack.c.l.b16 %v254
  %v963 = vunpack.c.h.b16 %v254
  %v964 = vunpack.c.l.b16 %v255
  %v965 = vunpack.c.h.b16 %v255
  %v966 = vunpack.c.l.b16 %v256
  %v967 = vunpack.c.h.b16 %v256
  %v968 = vunpack.c.l.b16 %v257
  %v969 = vunpack.c.h.b16 %v257
  %v970 = vunpack.c.l.b16 %v258
  %v971 = vunpack.c.h.b16 %v258
  %v972 = vunpack.c.l.b16 %v259
  %v973 = vunpack.c.h.b16 %v259
  %v974 = vunpack.c.l.b16 %v260
  %v975 = vunpack.c.h.b16 %v260
  %v976 = vunpack.c.l.b16 %v261
  %v977 = vunpack.c.h.b16 %v261
  %v978 = vunpack.c.l.b16 %v262
  %v979 = vunpack.c.h.b16 %v262
  %v980 = vunpack.c.l.b16 %v263
  %v981 = vunpack.c.h.b16 %v263
  %v982 = vunpack.c.l.b16 %v264
  %v983 = vunpack.c.h.b16 %v264
  %v984 = vunpack.c.l.b16 %v265
  %v985 = vunpack.c.h.b16 %v265
  %v986 = vunpack.c.l.b16 %v266
  %v987 = vunpack.c.h.b16 %v266
  %v988 = vunpack.c.l.b16 %v267
  %v989 = vunpack.c.h.b16 %v267
  %v990 = vunpack.c.l.b16 %v268
  %v991 = vunpack.c.h.b16 %v268
  %v992 = vunpack.c.l.b16 %v269
  %v993 = vunpack.c.h.b16 %v269
  %v994 = vunpack.c.l.b16 %v270
  %v995 = vunpack.c.h.b16 %v270
  %v996 = vunpack.c.l.b16 %v271
  %v997 = vunpack.c.h.b16 %v271
  %v998 = vunpack.c.l.b16 %v272
  %v999 = vunpack.c.h.b16 %v272
  %v1000 = vunpack.c.l.b16 %v273
  %v1001 = vunpack.c.h.b16 %v273
  %v1002 = vunpack.c.l.b16 %v274
  %v1003 = vunpack.c.h.b16 %v274
  %v1004 = vunpack.c.l.b16 %v275
  %v1005 = vunpack.c.h.b16 %v275
  %v1006 = vunpack.c.l.b16 %v276
  %v1007 = vunpack.c.h.b16 %v276
  %v1008 = vunpack.c.l.b16 %v277
  %v1009 = vunpack.c.h.b16 %v277
  %v1010 = vunpack.c.l.b16 %v278
  %v1011 = vunpack.c.h.b16 %v278
  %v1012 = vunpack.c.l.b16 %v279
  %v1013 = vunpack.c.h.b16 %v279
  %v1014 = vunpack.c.l.b16 %v280
  %v1015 = vunpack.c.h.b16 %v280
  %v1016 = vunpack.c.l.b16 %v281
  %v1017 = vunpack.c.h.b16 %v281
  %v1018 = vunpack.c.l.b16 %v282
  %v1019 = vunpack.c.h.b16 %v282
  %v1020 = vunpack.c.l.b16 %v283
  %v1021 = vunpack.c.h.b16 %v283
  %v1022 = vunpack.c.l.b16 %v284
  %v1023 = vunpack.c.h.b16 %v284
  %v1024 = vunpack.c.l.b16 %v285
  %v1025 = vunpack.c.h.b16 %v285
  %v1026 = vunpack.c.l.b16 %v286
  %v1027 = vunpack.c.h.b16 %v286
  %v1028 = vunpack.c.l.b16 %v287
  %v1029 = vunpack.c.h.b16 %v287
  %v1030 = vunpack.c.l.b16 %v288
  %v1031 = vunpack.c.h.b16 %v288
  %v1032 = vunpack.c.l.b16 %v289
  %v1033 = vunpack.c.h.b16 %v289
  %v1034 = vunpack.c.l.b16 %v290
  %v1035 = vunpack.c.h.b16 %v290
  %v1036 = vunpack.c.l.b16 %v291
  %v1037 = vunpack.c.h.b16 %v291
  %v1038 = vunpack.c.l.b16 %v292
  %v1039 = vunpack.c.h.b16 %v292
  %v1040 = vunpack.c.l.b16 %v293
  %v1041 = vunpack.c.h.b16 %v293
  %v1042 = vunpack.c.l.b16 %v294
  %v1043 = vunpack.c.h.b16 %v294
  %v1044 = vunpack.c.l.b16 %v295
  %v1045 = vunpack.c.h.b16 %v295
  %v1046 = vunpack.c.l.b16 %v296
  %v1047 = vunpack.c.h.b16 %v296
  %v1048 = vunpack.c.l.b16 %v297
  %v1049 = vunpack.c.h.b16 %v297
  %v1050 = vunpack.c.l.b16 %v298
  %v1051 = vunpack.c.h.b16 %v298
  %v1052 = vunpack.c.l.b16 %v299
  %v1053 = vunpack.c.h.b16 %v299
  %v1054 = vunpack.c.l.b16 %v300
  %v1055 = vunpack.c.h.b16 %v300
  %v1056 = vunpack.c.l.b16 %v301
  %v1057 = vunpack.c.h.b16 %v301
  %v1058 = vunpack.c.l.b16 %v302
  %v1059 = vunpack.c.h.b16 %v302
  %v1060 = vunpack.c.l.b16 %v303
  %v1061 = vunpack.c.h.b16 %v303
  %v1062 = vunpack.c.l.b16 %v304
  %v1063 = vunpack.c.h.b16 %v304
  %v1064 = vunpack.c.l.b16 %v305
  %v1065 = vunpack.c.h.b16 %v305
  %v1066 = vunpack.c.l.b16 %v306
  %v1067 = vunpack.c.h.b16 %v306
  %v1068 = vunpack.c.l.b16 %v307
  %v1069 = vunpack.c.h.b16 %v307
  %v1070 = vunpack.c.l.b16 %v308
  %v1071 = vunpack.c.h.b16 %v308
  %v1072 = vunpack.c.l.b16 %v309
  %v1073 = vunpack.c.h.b16 %v309
  %v1074 = vunpack.c.l.b16 %v310
  %v1075 = vunpack.c.h.b16 %v310
  %v1076 = vunpack.c.l.b16 %v311
  %v1077 = vunpack.c.h.b16 %v311
  %v1078 = vunpack.c.l.b16 %v312
  %v1079 = vunpack.c.h.b16 %v312
  %v1080 = vunpack.c.l.b16 %v313
  %v1081 = vunpack.c.h.b16 %v313
  %v1082 = vunpack.c.l.b16 %v314
  %v1083 = vunpack.c.h.b16 %v314
  %v1084 = vunpack.c.l.b16 %v315
  %v1085 = vunpack.c.h.b16 %v315
  %v1086 = vunpack.c.l.b16 %v316
  %v1087 = vunpack.c.h.b16 %v316
  %v1088 = vunpack.c.l.b16 %v317
  %v1089 = vunpack.c.h.b16 %v317
  %v1090 = vunpack.c.l.b16 %v318
  %v1091 = vunpack.c.h.b16 %v318
  %v1092 = vunpack.c.l.b16 %v319
  %v1093 = vunpack.c.h.b16 %v319
  %v1094 = vunpack.c.l.b16 %v320
  %v1095 = vunpack.c.h.b16 %v320
  %v1096 = vunpack.c.l.b16 %v321
  %v1097 = vunpack.c.h.b16 %v321
  %v1098 = vunpack.c.l.b16 %v322
  %v1099 = vunpack.c.h.b16 %v322
  %v1100 = vunpack.c.l.b16 %v323
  %v1101 = vunpack.c.h.b16 %v323
  %v1102 = vunpack.c.l.b16 %v324
  %v1103 = vunpack.c.h.b16 %v324
  %v1104 = vunpack.c.l.b16 %v325
  %v1105 = vunpack.c.h.b16 %v325
  %v1106 = vunpack.c.l.b16 %v326
  %v1107 = vunpack.c.h.b16 %v326
  %v1108 = vunpack.c.l.b16 %v327
  %v1109 = vunpack.c.h.b16 %v327
  %v1110 = vunpack.c.l.b16 %v328
  %v1111 = vunpack.c.h.b16 %v328
  %v1112 = vunpack.c.l.b16 %v329
  %v1113 = vunpack.c.h.b16 %v329
  %v1114 = vunpack.c.l.b16 %v330
  %v1115 = vunpack.c.h.b16 %v330
  %v1116 = vunpack.c.l.b16 %v331
  %v1117 = vunpack.c.h.b16 %v331
  %v1118 = vunpack.c.l.b16 %v332
  %v1119 = vunpack.c.h.b16 %v332
  %v1120 = vunpack.c.l.b16 %v333
  %v1121 = vunpack.c.h.b16 %v333
  %v1122 = vunpack.c.l.b16 %v334
  %v1123 = vunpack.c.h.b16 %v334
  %v1124 = vunpack.c.l.b16 %v335
  %v1125 = vunpack.c.h.b16 %v335
  %v1126 = vpack.c.b16 %v618, %v614
  %v1127 = vpack.c.b16 %v619, %v615
  %v1128 = vpack.c.b16 %v620, %v616
  %v1129 = vpack.c.b16 %v621, %v617
  %v1130 = vpack.c.b16 %v626, %v622
  %v1131 = vpack.c.b16 %v627, %v623
  %v1132 = vpack.c.b16 %v628, %v624
  %v1133 = vpack.c.b16 %v629, %v625
  %v1134 = vpack.c.b16 %v634, %v630
  %v1135 = vpack.c.b16 %v635, %v631
  %v1136 = vpack.c.b16 %v636, %v632
  %v1137 = vpack.c.b16 %v637, %v633
  %v1138 = vpack.c.b16 %v642, %v638
  %v1139 = vpack.c.b16 %v643, %v639
  %v1140 = vpack.c.b16 %v644, %v640
  %v1141 = vpack.c.b16 %v645, %v641
  %v1142 = vpack.c.b16 %v650, %v646
  %v1143 = vpack.c.b16 %v651, %v647
  %v1144 = vpack.c.b16 %v652, %v648
  %v1145 = vpack.c.b16 %v653, %v649
  %v1146 = vpack.c.b16 %v658, %v654
  %v1147 = vpack.c.b16 %v659, %v655
  %v1148 = vpack.c.b16 %v660, %v656
  %v1149 = vpack.c.b16 %v661, %v657
  %v1150 = vpack.c.b16 %v666, %v662
  %v1151 = vpack.c.b16 %v667, %v663
  %v1152 = vpack.c.b16 %v668, %v664
  %v1153 = vpack.c.b16 %v669, %v665
  %v1154 = vpack.c.b16 %v674, %v670
  %v1155 = vpack.c.b16 %v675, %v671
  %v1156 = vpack.c.b16 %v676, %v672
  %v1157 = vpack.c.b16 %v677, %v673
  %v1158 = vpack.c.b16 %v682, %v678
  %v1159 = vpack.c.b16 %v683, %v679
  %v1160 = vpack.c.b16 %v684, %v680
  %v1161 = vpack.c.b16 %v685, %v681
  %v1162 = vpack.c.b16 %v690, %v686
  %v1163 = vpack.c.b16 %v691, %v687
  %v1164 = vpack.c.b16 %v692, %v688
  %v1165 = vpack.c.b16 %v693, %v689
  %v1166 = vpack.c.b16 %v698, %v694
  %v1167 = vpack.c.b16 %v699, %v695
  %v1168 = vpack.c.b16 %v700, %v696
  %v1169 = vpack.c.b16 %v701, %v697
  %v1170 = vpack.c.b16 %v706, %v702
  %v1171 = vpack.c.b16 %v707, %v703
  %v1172 = vpack.c.b16 %v708, %v704
  %v1173 = vpack.c.b16 %v709, %v705
  %v1174 = vpack.c.b16 %v714, %v710
  %v1175 = vpack.c.b16 %v715, %v711
  %v1176 = vpack.c.b16 %v716, %v712
  %v1177 = vpack.c.b16 %v717, %v713
  %v1178 = vpack.c.b16 %v722, %v718
  %v1179 = vpack.c.b16 %v723, %v719
  %v1180 = vpack.c.b16 %v724, %v720
  %v1181 = vpack.c.b16 %v725, %v721
  %v1182 = vpack.c.b16 %v730, %v726
  %v1183 = vpack.c.b16 %v731, %v727
  %v1184 = vpack.c.b16 %v732, %v728
  %v1185 = vpack.c.b16 %v733, %v729
  %v1186 = vpack.c.b16 %v738, %v734
  %v1187 = vpack.c.b16 %v739, %v735
  %v1188 = vpack.c.b16 %v740, %v736
  %v1189 = vpack.c.b16 %v741, %v737
  %v1190 = vpack.c.b16 %v746, %v742
  %v1191 = vpack.c.b16 %v747, %v743
  %v1192 = vpack.c.b16 %v748, %v744
  %v1193 = vpack.c.b16 %v749, %v745
  %v1194 = vpack.c.b16 %v754, %v750
  %v1195 = vpack.c.b16 %v755, %v751
  %v1196 = vpack.c.b16 %v756, %v752
  %v1197 = vpack.c.b16 %v757, %v753
  %v1198 = vpack.c.b16 %v762, %v758
  %v1199 = vpack.c.b16 %v763, %v759
  %v1200 = vpack.c.b16 %v764, %v760
  %v1201 = vpack.c.b16 %v765, %v761
  %v1202 = vpack.c.b16 %v770, %v766
  %v1203 = vpack.c.b16 %v771, %v767
  %v1204 = vpack.c.b16 %v772, %v768
  %v1205 = vpack.c.b16 %v773, %v769
  %v1206 = vpack.c.b16 %v778, %v774
  %v1207 = vpack.c.b16 %v779, %v775
  %v1208 = vpack.c.b16 %v780, %v776
  %v1209 = vpack.c.b16 %v781, %v777
  %v1210 = vpack.c.b16 %v786, %v782
  %v1211 = vpack.c.b16 %v787, %v783
  %v1212 = vpack.c.b16 %v788, %v784
  %v1213 = vpack.c.b16 %v789, %v785
  %v1214 = vpack.c.b16 %v794, %v790
  %v1215 = vpack.c.b16 %v795, %v791
  %v1216 = vpack.c.b16 %v796, %v792
  %v1217 = vpack.c.b16 %v797, %v793
  %v1218 = vpack.c.b16 %v802, %v798
  %v1219 = vpack.c.b16 %v803, %v799
  %v1220 = vpack.c.b16 %v804, %v800
  %v1221 = vpack.c.b16 %v805, %v801
  %v1222 = vpack.c.b16 %v810, %v806
  %v1223 = vpack.c.b16 %v811, %v807
  %v1224 = vpack.c.b16 %v812, %v808
  %v1225 = vpack.c.b16 %v813, %v809
  %v1226 = vpack.c.b16 %v818, %v814
  %v1227 = vpack.c.b16 %v819, %v815
  %v1228 = vpack.c.b16 %v820, %v816
  %v1229 = vpack.c.b16 %v821, %v817
  %v1230 = vpack.c.b16 %v826, %v822
  %v1231 = vpack.c.b16 %v827, %v823
  %v1232 = vpack.c.b16 %v828, %v824
  %v1233 = vpack.c.b16 %v829, %v825
  %v1234 = vpack.c.b16 %v834, %v830
  %v1235 = vpack.c.b16 %v835, %v831
  %v1236 = vpack.c.b16 %v836, %v832
  %v1237 = vpack.c.b16 %v837, %v833
  %v1238 = vpack.c.b16 %v842, %v838
  %v1239 = vpack.c.b16 %v843, %v839
  %v1240 = vpack.c.b16 %v844, %v840
  %v1241 = vpack.c.b16 %v845, %v841
  %v1242 = vpack.c.b16 %v850, %v846
  %v1243 = vpack.c.b16 %v851, %v847
  %v1244 = vpack.c.b16 %v852, %v848
  %v1245 = vpack.c.b16 %v853, %v849
  %v1246 = vpack.c.b16 %v858, %v854
  %v1247 = vpack.c.b16 %v859, %v855
  %v1248 = vpack.c.b16 %v860, %v856
  %v1249 = vpack.c.b16 %v861, %v857
  %v1250 = vpack.c.b16 %v866, %v862
  %v1251 = vpack.c.b16 %v867, %v863
  %v1252 = vpack.c.b16 %v868, %v864
  %v1253 = vpack.c.b16 %v869, %v865
  %v1254 = vpack.c.b16 %v874, %v870
  %v1255 = vpack.c.b16 %v875, %v871
  %v1256 = vpack.c.b16 %v876, %v872
  %v1257 = vpack.c.b16 %v877, %v873
  %v1258 = vpack.c.b16 %v882, %v878
  %v1259 = vpack.c.b16 %v883, %v879
  %v1260 = vpack.c.b16 %v884, %v880
  %v1261 = vpack.c.b16 %v885, %v881
  %v1262 = vpack.c.b16 %v890, %v886
  %v1263 = vpack.c.b16 %v891, %v887
  %v1264 = vpack.c.b16 %v892, %v888
  %v1265 = vpack.c.b16 %v893, %v889
  %v1266 = vpack.c.b16 %v898, %v894
  %v1267 = vpack.c.b16 %v899, %v895
  %v1268 = vpack.c.b16 %v900, %v896
  %v1269 = vpack.c.b16 %v901, %v897
  %v1270 = vpack.c.b16 %v906, %v902
  %v1271 = vpack.c.b16 %v907, %v903
  %v1272 = vpack.c.b16 %v908, %v904
  %v1273 = vpack.c.b16 %v909, %v905
  %v1274 = vpack.c.b16 %v914, %v910
  %v1275 = vpack.c.b16 %v915, %v911
  %v1276 = vpack.c.b16 %v916, %v912
  %v1277 = vpack.c.b16 %v917, %v913
  %v1278 = vpack.c.b16 %v922, %v918
  %v1279 = vpack.c.b16 %v923, %v919
  %v1280 = vpack.c.b16 %v924, %v920
  %v1281 = vpack.c.b16 %v925, %v921
  %v1282 = vpack.c.b16 %v930, %v926
  %v1283 = vpack.c.b16 %v931, %v927
  %v1284 = vpack.c.b16 %v932, %v928
  %v1285 = vpack.c.b16 %v933, %v929
  %v1286 = vpack.c.b16 %v938, %v934
  %v1287 = vpack.c.b16 %v939, %v935
  %v1288 = vpack.c.b16 %v940, %v936
  %v1289 = vpack.c.b16 %v941, %v937
  %v1290 = vpack.c.b16 %v946, %v942
  %v1291 = vpack.c.b16 %v947, %v943
  %v1292 = vpack.c.b16 %v948, %v944
  %v1293 = vpack.c.b16 %v949, %v945
  %v1294 = vpack.c.b16 %v954, %v950
  %v1295 = vpack.c.b16 %v955, %v951
  %v1296 = vpack.c.b16 %v956, %v952
  %v1297 = vpack.c.b16 %v957, %v953
  %v1298 = vpack.c.b16 %v962, %v958
  %v1299 = vpack.c.b16 %v963, %v959
  %v1300 = vpack.c.b16 %v964, %v960
  %v1301 = vpack.c.b16 %v965, %v961
  %v1302 = vpack.c.b16 %v970, %v966
  %v1303 = vpack.c.b16 %v971, %v967
  %v1304 = vpack.c.b16 %v972, %v968
  %v1305 = vpack.c.b16 %v973, %v969
  %v1306 = vpack.c.b16 %v978, %v974
  %v1307 = vpack.c.b16 %v979, %v975
  %v1308 = vpack.c.b16 %v980, %v976
  %v1309 = vpack.c.b16 %v981, %v977
  %v1310 = vpack.c.b16 %v986, %v982
  %v1311 = vpack.c.b16 %v987, %v983
  %v1312 = vpack.c.b16 %v988, %v984
  %v1313 = vpack.c.b16 %v989, %v985
  %v1314 = vpack.c.b16 %v994, %v990
  %v1315 = vpack.c.b16 %v995, %v991
  %v1316 = vpack.c.b16 %v996, %v992
  %v1317 = vpack.c.b16 %v997, %v993
  %v1318 = vpack.c.b16 %v1002, %v998
  %v1319 = vpack.c.b16 %v1003, %v999
  %v1320 = vpack.c.b16 %v1004, %v1000
  %v1321 = vpack.c.b16 %v1005, %v1001
  %v1322 = vpack.c.b16 %v1010, %v1006
  %v1323 = vpack.c.b16 %v1011, %v1007
  %v1324 = vpack.c.b16 %v1012, %v1008
  %v1325 = vpack.c.b16 %v1013, %v1009
  %v1326 = vpack.c.b16 %v1018, %v1014
  %v1327 = vpack.c.b16 %v1019, %v1015
  %v1328 = vpack.c.b16 %v1020, %v1016
  %v1329 = vpack.c.b16 %v1021, %v1017
  %v1330 = vpack.c.b16 %v1026, %v1022
  %v1331 = vpack.c.b16 %v1027, %v1023
  %v1332 = vpack.c.b16 %v1028, %v1024
  %v1333 = vpack.c.b16 %v1029, %v1025
  %v1334 = vpack.c.b16 %v1034, %v1030
  %v1335 = vpack.c.b16 %v1035, %v1031
  %v1336 = vpack.c.b16 %v1036, %v1032
  %v1337 = vpack.c.b16 %v1037, %v1033
  %v1338 = vpack.c.b16 %v1042, %v1038
  %v1339 = vpack.c.b16 %v1043, %v1039
  %v1340 = vpack.c.b16 %v1044, %v1040
  %v1341 = vpack.c.b16 %v1045, %v1041
  %v1342 = vpack.c.b16 %v1050, %v1046
  %v1343 = vpack.c.b16 %v1051, %v1047
  %v1344 = vpack.c.b16 %v1052, %v1048
  %v1345 = vpack.c.b16 %v1053, %v1049
  %v1346 = vpack.c.b16 %v1058, %v1054
  %v1347 = vpack.c.b16 %v1059, %v1055
  %v1348 = vpack.c.b16 %v1060, %v1056
  %v1349 = vpack.c.b16 %v1061, %v1057
  %v1350 = vpack.c.b16 %v1066, %v1062
  %v1351 = vpack.c.b16 %v1067, %v1063
  %v1352 = vpack.c.b16 %v1068, %v1064
  %v1353 = vpack.c.b16 %v1069, %v1065
  %v1354 = vpack.c.b16 %v1074, %v1070
  %v1355 = vpack.c.b16 %v1075, %v1071
  %v1356 = vpack.c.b16 %v1076, %v1072
  %v1357 = vpack.c.b16 %v1077, %v1073
  %v1358 = vpack.c.b16 %v1082, %v1078
  %v1359 = vpack.c.b16 %v1083, %v1079
  %v1360 = vpack.c.b16 %v1084, %v1080
  %v1361 = vpack.c.b16 %v1085, %v1081
  %v1362 = vpack.c.b16 %v1090, %v1086
  %v1363 = vpack.c.b16 %v1091, %v1087
  %v1364 = vpack.c.b16 %v1092, %v1088
  %v1365 = vpack.c.b16 %v1093, %v1089
  %v1366 = vpack.c.b16 %v1098, %v1094
  %v1367 = vpack.c.b16 %v1099, %v1095
  %v1368 = vpack.c.b16 %v1100, %v1096
  %v1369 = vpack.c.b16 %v1101, %v1097
  %v1370 = vpack.c.b16 %v1106, %v1102
  %v1371 = vpack.c.b16 %v1107, %v1103
  %v1372 = vpack.c.b16 %v1108, %v1104
  %v1373 = vpack.c.b16 %v1109, %v1105
  %v1374 = vpack.c.b16 %v1114, %v1110
  %v1375 = vpack.c.b16 %v1115, %v1111
  %v1376 = vpack.c.b16 %v1116, %v1112
  %v1377 = vpack.c.b16 %v1117, %v1113
  %v1378 = vpack.c.b16 %v1122, %v1118
  %v1379 = vpack.c.b16 %v1123, %v1119
  %v1380 = vpack.c.b16 %v1124, %v1120
  %v1381 = vpack.c.b16 %v1125, %v1121
  %1638 = vmatprep.subr.bf16.mxu0 %v1155
  %1639 = vmatpush1.bf16.msra.mxu0 %v1154
  %1640 = vmatprep.subr.bf16.mxu0 %v1151
  %1641 = vmatpush1.bf16.msra.mxu0 %v1150
  %1642 = vmatprep.subr.bf16.mxu0 %v1147
  %1643 = vmatpush1.bf16.msra.mxu0 %v1146
  %1644 = vmatprep.subr.bf16.mxu0 %v1143
  %1645 = vmatpush1.bf16.msra.mxu0 %v1142
  %1646 = vmatprep.subr.bf16.mxu0 %v1139
  %1647 = vmatpush1.bf16.msra.mxu0 %v1138
  %1648 = vmatprep.subr.bf16.mxu0 %v1135
  %1649 = vmatpush1.bf16.msra.mxu0 %v1134
  %1650 = vmatprep.subr.bf16.mxu0 %v1131
  %1651 = vmatpush1.bf16.msra.mxu0 %v1130
  %1652 = vmatprep.subr.bf16.mxu0 %v1127
  %1653 = vmatpush1.bf16.msra.mxu0 %v1126
  %1654 = vmatprep.subr.bf16.mxu0 %v1187
  %1655 = vmatpush2.bf16.msra.mxu0 %v1186
  %1656 = vmatprep.subr.bf16.mxu0 %v1183
  %1657 = vmatpush2.bf16.msra.mxu0 %v1182
  %1658 = vmatprep.subr.bf16.mxu0 %v1179
  %1659 = vmatpush2.bf16.msra.mxu0 %v1178
  %1660 = vmatprep.subr.bf16.mxu0 %v1175
  %1661 = vmatpush2.bf16.msra.mxu0 %v1174
  %1662 = vmatprep.subr.bf16.mxu0 %v1171
  %1663 = vmatpush2.bf16.msra.mxu0 %v1170
  %1664 = vmatprep.subr.bf16.mxu0 %v1167
  %1665 = vmatpush2.bf16.msra.mxu0 %v1166
  %1666 = vmatprep.subr.bf16.mxu0 %v1163
  %1667 = vmatpush2.bf16.msra.mxu0 %v1162
  %1668 = vmatprep.subr.bf16.mxu0 %v1159
  %1669 = vmatpush2.bf16.msra.mxu0 %v1158
  %1670 = vmatprep.mubr.bf16.mxu0 %v73
  %1671 = vmatmul.mubr.bf16.gmra.mxu0 %v72
  %v1672 = vpop.f32.mrf.mxu0
  %v1673 = vadd.f32 %v341, %v1672
  %v1674 = vpop.f32.mrf.mxu0
  %v1675 = vadd.f32 %v345, %v1674
  %v1676 = vpop.f32.mrf.mxu0
  %v1677 = vpop.f32.mrf.mxu0
  %1678 = vdwg.mxu0
  %1679 = vmatprep.subr.bf16.mxu0 %v1219
  %1680 = vmatpush1.bf16.msra.mxu0 %v1218
  %1681 = vmatprep.subr.bf16.mxu0 %v1215
  %1682 = vmatpush1.bf16.msra.mxu0 %v1214
  %1683 = vmatprep.subr.bf16.mxu0 %v1211
  %1684 = vmatpush1.bf16.msra.mxu0 %v1210
  %1685 = vmatprep.subr.bf16.mxu0 %v1207
  %1686 = vmatpush1.bf16.msra.mxu0 %v1206
  %1687 = vmatprep.subr.bf16.mxu0 %v1203
  %1688 = vmatpush1.bf16.msra.mxu0 %v1202
  %1689 = vmatprep.subr.bf16.mxu0 %v1199
  %1690 = vmatpush1.bf16.msra.mxu0 %v1198
  %1691 = vmatprep.subr.bf16.mxu0 %v1195
  %1692 = vmatpush1.bf16.msra.mxu0 %v1194
  %1693 = vmatprep.subr.bf16.mxu0 %v1191
  %1694 = vmatpush1.bf16.msra.mxu0 %v1190
  %1695 = vmatprep.subr.bf16.mxu0 %v1251
  %1696 = vmatpush2.bf16.msra.mxu0 %v1250
  %1697 = vmatprep.subr.bf16.mxu0 %v1247
  %1698 = vmatpush2.bf16.msra.mxu0 %v1246
  %1699 = vmatprep.subr.bf16.mxu0 %v1243
  %1700 = vmatpush2.bf16.msra.mxu0 %v1242
  %1701 = vmatprep.subr.bf16.mxu0 %v1239
  %1702 = vmatpush2.bf16.msra.mxu0 %v1238
  %1703 = vmatprep.subr.bf16.mxu0 %v1235
  %1704 = vmatpush2.bf16.msra.mxu0 %v1234
  %1705 = vmatprep.subr.bf16.mxu0 %v1231
  %1706 = vmatpush2.bf16.msra.mxu0 %v1230
  %1707 = vmatprep.subr.bf16.mxu0 %v1227
  %1708 = vmatpush2.bf16.msra.mxu0 %v1226
  %1709 = vmatprep.subr.bf16.mxu0 %v1223
  %1710 = vmatpush2.bf16.msra.mxu0 %v1222
  %1711 = vmatprep.mubr.bf16.mxu0 %v75
  %1712 = vmatmul.mubr.bf16.gmra.mxu0 %v74
  %v1713 = vpop.f32.mrf.mxu0
  %v1714 = vadd.f32 %v1673, %v1713
  %v1715 = vpop.f32.mrf.mxu0
  %v1716 = vadd.f32 %v1675, %v1715
  %v1717 = vpop.f32.mrf.mxu0
  %v1718 = vpop.f32.mrf.mxu0
  %1719 = vdwg.mxu0
  %1720 = vmatprep.subr.bf16.mxu0 %v1283
  %1721 = vmatpush1.bf16.msra.mxu0 %v1282
  %1722 = vmatprep.subr.bf16.mxu0 %v1279
  %1723 = vmatpush1.bf16.msra.mxu0 %v1278
  %1724 = vmatprep.subr.bf16.mxu0 %v1275
  %1725 = vmatpush1.bf16.msra.mxu0 %v1274
  %1726 = vmatprep.subr.bf16.mxu0 %v1271
  %1727 = vmatpush1.bf16.msra.mxu0 %v1270
  %1728 = vmatprep.subr.bf16.mxu0 %v1267
  %1729 = vmatpush1.bf16.msra.mxu0 %v1266
  %1730 = vmatprep.subr.bf16.mxu0 %v1263
  %1731 = vmatpush1.bf16.msra.mxu0 %v1262
  %1732 = vmatprep.subr.bf16.mxu0 %v1259
  %1733 = vmatpush1.bf16.msra.mxu0 %v1258
  %1734 = vmatprep.subr.bf16.mxu0 %v1255
  %1735 = vmatpush1.bf16.msra.mxu0 %v1254
  %1736 = vmatprep.subr.bf16.mxu0 %v1315
  %1737 = vmatpush2.bf16.msra.mxu0 %v1314
  %1738 = vmatprep.subr.bf16.mxu0 %v1311
  %1739 = vmatpush2.bf16.msra.mxu0 %v1310
  %1740 = vmatprep.subr.bf16.mxu0 %v1307
  %1741 = vmatpush2.bf16.msra.mxu0 %v1306
  %1742 = vmatprep.subr.bf16.mxu0 %v1303
  %1743 = vmatpush2.bf16.msra.mxu0 %v1302
  %1744 = vmatprep.subr.bf16.mxu0 %v1299
  %1745 = vmatpush2.bf16.msra.mxu0 %v1298
  %1746 = vmatprep.subr.bf16.mxu0 %v1295
  %1747 = vmatpush2.bf16.msra.mxu0 %v1294
  %1748 = vmatprep.subr.bf16.mxu0 %v1291
  %1749 = vmatpush2.bf16.msra.mxu0 %v1290
  %1750 = vmatprep.subr.bf16.mxu0 %v1287
  %1751 = vmatpush2.bf16.msra.mxu0 %v1286
  %1752 = vmatprep.mubr.bf16.mxu0 %v77
  %1753 = vmatmul.mubr.bf16.gmra.mxu0 %v76
  %v1754 = vpop.f32.mrf.mxu0
  %v1755 = vadd.f32 %v1714, %v1754
  %v1756 = vpop.f32.mrf.mxu0
  %v1757 = vadd.f32 %v1716, %v1756
  %v1758 = vpop.f32.mrf.mxu0
  %v1759 = vpop.f32.mrf.mxu0
  %1760 = vdwg.mxu0
  %1761 = vmatprep.subr.bf16.mxu0 %v1347
  %1762 = vmatpush1.bf16.msra.mxu0 %v1346
  %1763 = vmatprep.subr.bf16.mxu0 %v1343
  %1764 = vmatpush1.bf16.msra.mxu0 %v1342
  %1765 = vmatprep.subr.bf16.mxu0 %v1339
  %1766 = vmatpush1.bf16.msra.mxu0 %v1338
  %1767 = vmatprep.subr.bf16.mxu0 %v1335
  %1768 = vmatpush1.bf16.msra.mxu0 %v1334
  %1769 = vmatprep.subr.bf16.mxu0 %v1331
  %1770 = vmatpush1.bf16.msra.mxu0 %v1330
  %1771 = vmatprep.subr.bf16.mxu0 %v1327
  %1772 = vmatpush1.bf16.msra.mxu0 %v1326
  %1773 = vmatprep.subr.bf16.mxu0 %v1323
  %1774 = vmatpush1.bf16.msra.mxu0 %v1322
  %1775 = vmatprep.subr.bf16.mxu0 %v1319
  %1776 = vmatpush1.bf16.msra.mxu0 %v1318
  %1777 = vmatprep.subr.bf16.mxu0 %v1379
  %1778 = vmatpush2.bf16.msra.mxu0 %v1378
  %1779 = vmatprep.subr.bf16.mxu0 %v1375
  %1780 = vmatpush2.bf16.msra.mxu0 %v1374
  %1781 = vmatprep.subr.bf16.mxu0 %v1371
  %1782 = vmatpush2.bf16.msra.mxu0 %v1370
  %1783 = vmatprep.subr.bf16.mxu0 %v1367
  %1784 = vmatpush2.bf16.msra.mxu0 %v1366
  %1785 = vmatprep.subr.bf16.mxu0 %v1363
  %1786 = vmatpush2.bf16.msra.mxu0 %v1362
  %1787 = vmatprep.subr.bf16.mxu0 %v1359
  %1788 = vmatpush2.bf16.msra.mxu0 %v1358
  %1789 = vmatprep.subr.bf16.mxu0 %v1355
  %1790 = vmatpush2.bf16.msra.mxu0 %v1354
  %1791 = vmatprep.subr.bf16.mxu0 %v1351
  %1792 = vmatpush2.bf16.msra.mxu0 %v1350
  %1793 = vmatprep.mubr.bf16.mxu0 %v79
  %1794 = vmatmul.mubr.bf16.gmra.mxu0 %v78
  %v1795 = vpop.f32.mrf.mxu0
  %v1796 = vadd.f32 %v1755, %v1795
  %v1797 = vpop.f32.mrf.mxu0
  %v1798 = vadd.f32 %v1757, %v1797
  %v1799 = vpop.f32.mrf.mxu0
  %v1800 = vpop.f32.mrf.mxu0
  %1801 = vdwg.mxu0
  %1802 = vmatprep.subr.bf16.mxu0 %v1157
  %1803 = vmatpush1.bf16.msra.mxu0 %v1156
  %1804 = vmatprep.subr.bf16.mxu0 %v1153
  %1805 = vmatpush1.bf16.msra.mxu0 %v1152
  %1806 = vmatprep.subr.bf16.mxu0 %v1149
  %1807 = vmatpush1.bf16.msra.mxu0 %v1148
  %1808 = vmatprep.subr.bf16.mxu0 %v1145
  %1809 = vmatpush1.bf16.msra.mxu0 %v1144
  %1810 = vmatprep.subr.bf16.mxu0 %v1141
  %1811 = vmatpush1.bf16.msra.mxu0 %v1140
  %1812 = vmatprep.subr.bf16.mxu0 %v1137
  %1813 = vmatpush1.bf16.msra.mxu0 %v1136
  %1814 = vmatprep.subr.bf16.mxu0 %v1133
  %1815 = vmatpush1.bf16.msra.mxu0 %v1132
  %1816 = vmatprep.subr.bf16.mxu0 %v1129
  %1817 = vmatpush1.bf16.msra.mxu0 %v1128
  %1818 = vmatprep.subr.bf16.mxu0 %v1189
  %1819 = vmatpush2.bf16.msra.mxu0 %v1188
  %1820 = vmatprep.subr.bf16.mxu0 %v1185
  %1821 = vmatpush2.bf16.msra.mxu0 %v1184
  %1822 = vmatprep.subr.bf16.mxu0 %v1181
  %1823 = vmatpush2.bf16.msra.mxu0 %v1180
  %1824 = vmatprep.subr.bf16.mxu0 %v1177
  %1825 = vmatpush2.bf16.msra.mxu0 %v1176
  %1826 = vmatprep.subr.bf16.mxu0 %v1173
  %1827 = vmatpush2.bf16.msra.mxu0 %v1172
  %1828 = vmatprep.subr.bf16.mxu0 %v1169
  %1829 = vmatpush2.bf16.msra.mxu0 %v1168
  %1830 = vmatprep.subr.bf16.mxu0 %v1165
  %1831 = vmatpush2.bf16.msra.mxu0 %v1164
  %1832 = vmatprep.subr.bf16.mxu0 %v1161
  %1833 = vmatpush2.bf16.msra.mxu0 %v1160
  %1834 = vmatprep.mubr.bf16.mxu0 %v73
  %1835 = vmatmul.mubr.bf16.gmra.mxu0 %v72
  %v1836 = vpop.f32.mrf.mxu0
  %v1837 = vadd.f32 %v349, %v1836
  %v1838 = vpop.f32.mrf.mxu0
  %v1839 = vadd.f32 %v353, %v1838
  %v1840 = vpop.f32.mrf.mxu0
  %v1841 = vpop.f32.mrf.mxu0
  %1842 = vdwg.mxu0
  %1843 = vmatprep.subr.bf16.mxu0 %v1221
  %1844 = vmatpush1.bf16.msra.mxu0 %v1220
  %1845 = vmatprep.subr.bf16.mxu0 %v1217
  %1846 = vmatpush1.bf16.msra.mxu0 %v1216
  %1847 = vmatprep.subr.bf16.mxu0 %v1213
  %1848 = vmatpush1.bf16.msra.mxu0 %v1212
  %1849 = vmatprep.subr.bf16.mxu0 %v1209
  %1850 = vmatpush1.bf16.msra.mxu0 %v1208
  %1851 = vmatprep.subr.bf16.mxu0 %v1205
  %1852 = vmatpush1.bf16.msra.mxu0 %v1204
  %1853 = vmatprep.subr.bf16.mxu0 %v1201
  %1854 = vmatpush1.bf16.msra.mxu0 %v1200
  %1855 = vmatprep.subr.bf16.mxu0 %v1197
  %1856 = vmatpush1.bf16.msra.mxu0 %v1196
  %1857 = vmatprep.subr.bf16.mxu0 %v1193
  %1858 = vmatpush1.bf16.msra.mxu0 %v1192
  %1859 = vmatprep.subr.bf16.mxu0 %v1253
  %1860 = vmatpush2.bf16.msra.mxu0 %v1252
  %1861 = vmatprep.subr.bf16.mxu0 %v1249
  %1862 = vmatpush2.bf16.msra.mxu0 %v1248
  %1863 = vmatprep.subr.bf16.mxu0 %v1245
  %1864 = vmatpush2.bf16.msra.mxu0 %v1244
  %1865 = vmatprep.subr.bf16.mxu0 %v1241
  %1866 = vmatpush2.bf16.msra.mxu0 %v1240
  %1867 = vmatprep.subr.bf16.mxu0 %v1237
  %1868 = vmatpush2.bf16.msra.mxu0 %v1236
  %1869 = vmatprep.subr.bf16.mxu0 %v1233
  %1870 = vmatpush2.bf16.msra.mxu0 %v1232
  %1871 = vmatprep.subr.bf16.mxu0 %v1229
  %1872 = vmatpush2.bf16.msra.mxu0 %v1228
  %1873 = vmatprep.subr.bf16.mxu0 %v1225
  %1874 = vmatpush2.bf16.msra.mxu0 %v1224
  %1875 = vmatprep.mubr.bf16.mxu0 %v75
  %1876 = vmatmul.mubr.bf16.gmra.mxu0 %v74
  %v1877 = vpop.f32.mrf.mxu0
  %v1878 = vadd.f32 %v1837, %v1877
  %v1879 = vpop.f32.mrf.mxu0
  %v1880 = vadd.f32 %v1839, %v1879
  %v1881 = vpop.f32.mrf.mxu0
  %v1882 = vpop.f32.mrf.mxu0
  %1883 = vdwg.mxu0
  %1884 = vmatprep.subr.bf16.mxu0 %v1285
  %1885 = vmatpush1.bf16.msra.mxu0 %v1284
  %1886 = vmatprep.subr.bf16.mxu0 %v1281
  %1887 = vmatpush1.bf16.msra.mxu0 %v1280
  %1888 = vmatprep.subr.bf16.mxu0 %v1277
  %1889 = vmatpush1.bf16.msra.mxu0 %v1276
  %1890 = vmatprep.subr.bf16.mxu0 %v1273
  %1891 = vmatpush1.bf16.msra.mxu0 %v1272
  %1892 = vmatprep.subr.bf16.mxu0 %v1269
  %1893 = vmatpush1.bf16.msra.mxu0 %v1268
  %1894 = vmatprep.subr.bf16.mxu0 %v1265
  %1895 = vmatpush1.bf16.msra.mxu0 %v1264
  %1896 = vmatprep.subr.bf16.mxu0 %v1261
  %1897 = vmatpush1.bf16.msra.mxu0 %v1260
  %1898 = vmatprep.subr.bf16.mxu0 %v1257
  %1899 = vmatpush1.bf16.msra.mxu0 %v1256
  %1900 = vmatprep.subr.bf16.mxu0 %v1317
  %1901 = vmatpush2.bf16.msra.mxu0 %v1316
  %1902 = vmatprep.subr.bf16.mxu0 %v1313
  %1903 = vmatpush2.bf16.msra.mxu0 %v1312
  %1904 = vmatprep.subr.bf16.mxu0 %v1309
  %1905 = vmatpush2.bf16.msra.mxu0 %v1308
  %1906 = vmatprep.subr.bf16.mxu0 %v1305
  %1907 = vmatpush2.bf16.msra.mxu0 %v1304
  %1908 = vmatprep.subr.bf16.mxu0 %v1301
  %1909 = vmatpush2.bf16.msra.mxu0 %v1300
  %1910 = vmatprep.subr.bf16.mxu0 %v1297
  %1911 = vmatpush2.bf16.msra.mxu0 %v1296
  %1912 = vmatprep.subr.bf16.mxu0 %v1293
  %1913 = vmatpush2.bf16.msra.mxu0 %v1292
  %1914 = vmatprep.subr.bf16.mxu0 %v1289
  %1915 = vmatpush2.bf16.msra.mxu0 %v1288
  %1916 = vmatprep.mubr.bf16.mxu0 %v77
  %1917 = vmatmul.mubr.bf16.gmra.mxu0 %v76
  %v1918 = vpop.f32.mrf.mxu0
  %v1919 = vadd.f32 %v1878, %v1918
  %v1920 = vpop.f32.mrf.mxu0
  %v1921 = vadd.f32 %v1880, %v1920
  %v1922 = vpop.f32.mrf.mxu0
  %v1923 = vpop.f32.mrf.mxu0
  %1924 = vdwg.mxu0
  %1925 = vmatprep.subr.bf16.mxu0 %v1349
  %1926 = vmatpush1.bf16.msra.mxu0 %v1348
  %1927 = vmatprep.subr.bf16.mxu0 %v1345
  %1928 = vmatpush1.bf16.msra.mxu0 %v1344
  %1929 = vmatprep.subr.bf16.mxu0 %v1341
  %1930 = vmatpush1.bf16.msra.mxu0 %v1340
  %1931 = vmatprep.subr.bf16.mxu0 %v1337
  %1932 = vmatpush1.bf16.msra.mxu0 %v1336
  %1933 = vmatprep.subr.bf16.mxu0 %v1333
  %1934 = vmatpush1.bf16.msra.mxu0 %v1332
  %1935 = vmatprep.subr.bf16.mxu0 %v1329
  %1936 = vmatpush1.bf16.msra.mxu0 %v1328
  %1937 = vmatprep.subr.bf16.mxu0 %v1325
  %1938 = vmatpush1.bf16.msra.mxu0 %v1324
  %1939 = vmatprep.subr.bf16.mxu0 %v1321
  %1940 = vmatpush1.bf16.msra.mxu0 %v1320
  %1941 = vmatprep.subr.bf16.mxu0 %v1381
  %1942 = vmatpush2.bf16.msra.mxu0 %v1380
  %1943 = vmatprep.subr.bf16.mxu0 %v1377
  %1944 = vmatpush2.bf16.msra.mxu0 %v1376
  %1945 = vmatprep.subr.bf16.mxu0 %v1373
  %1946 = vmatpush2.bf16.msra.mxu0 %v1372
  %1947 = vmatprep.subr.bf16.mxu0 %v1369
  %1948 = vmatpush2.bf16.msra.mxu0 %v1368
  %1949 = vmatprep.subr.bf16.mxu0 %v1365
  %1950 = vmatpush2.bf16.msra.mxu0 %v1364
  %1951 = vmatprep.subr.bf16.mxu0 %v1361
  %1952 = vmatpush2.bf16.msra.mxu0 %v1360
  %1953 = vmatprep.subr.bf16.mxu0 %v1357
  %1954 = vmatpush2.bf16.msra.mxu0 %v1356
  %1955 = vmatprep.subr.bf16.mxu0 %v1353
  %1956 = vmatpush2.bf16.msra.mxu0 %v1352
  %1957 = vmatprep.mubr.bf16.mxu0 %v79
  %1958 = vmatmul.mubr.bf16.gmra.mxu0 %v78
  %v1959 = vpop.f32.mrf.mxu0
  %v1960 = vadd.f32 %v1919, %v1959
  %v1961 = vpop.f32.mrf.mxu0
  %v1962 = vadd.f32 %v1921, %v1961
  %v1963 = vpop.f32.mrf.mxu0
  %v1964 = vpop.f32.mrf.mxu0
  %1965 = vdwg.mxu0
  %v1966 = vmax.f32 %v1796, 0.0
  %v1967 = vmax.f32 %v1798, 0.0
  %v1968 = vmax.f32 %v1960, 0.0
  %v1969 = vmax.f32 %v1962, 0.0
  %v1970 = vpack.c.bf16 %v1966, %v1966
  %v1971 = vpack.c.bf16 %v1967, %v1967
  %v1972 = vpack.c.bf16 %v1968, %v1968
  %v1973 = vpack.c.bf16 %v1969, %v1969
  %v1974 = vld [vmem:[%s3] sm:$0xff]
  %v1975 = vld [vmem:[%s3 + $0x8] sm:$0xff]
  %v1976 = vld [vmem:[%s3 + $0x10] sm:$0xff]
  %v1977 = vld [vmem:[%s3 + $0x18] sm:$0xff]
  %v1978 = vld [vmem:[%s3 + $0x20] sm:$0xff]
  %v1979 = vld [vmem:[%s3 + $0x28] sm:$0xff]
  %v1980 = vld [vmem:[%s3 + $0x30] sm:$0xff]
  %v1981 = vld [vmem:[%s3 + $0x38] sm:$0xff]
  %v1982 = vld [vmem:[%s3 + $0x40] sm:$0xff]
  %v1983 = vld [vmem:[%s3 + $0x48] sm:$0xff]
  %v1984 = vld [vmem:[%s3 + $0x50] sm:$0xff]
  %v1985 = vld [vmem:[%s3 + $0x58] sm:$0xff]
  %v1986 = vld [vmem:[%s3 + $0x60] sm:$0xff]
  %v1987 = vld [vmem:[%s3 + $0x68] sm:$0xff]
  %v1988 = vld [vmem:[%s3 + $0x70] sm:$0xff]
  %v1989 = vld [vmem:[%s3 + $0x78] sm:$0xff]
  %v1990 = vld [vmem:[%s3 + $0x80] sm:$0xff]
  %v1991 = vld [vmem:[%s3 + $0x88] sm:$0xff]
  %v1992 = vld [vmem:[%s3 + $0x90] sm:$0xff]
  %v1993 = vld [vmem:[%s3 + $0x98] sm:$0xff]
  %v1994 = vld [vmem:[%s3 + $0xa0] sm:$0xff]
  %v1995 = vld [vmem:[%s3 + $0xa8] sm:$0xff]
  %v1996 = vld [vmem:[%s3 + $0xb0] sm:$0xff]
  %v1997 = vld [vmem:[%s3 + $0xb8] sm:$0xff]
  %v1998 = vld [vmem:[%s3 + $0xc0] sm:$0xff]
  %v1999 = vld [vmem:[%s3 + $0xc8] sm:$0xff]
  %v2000 = vld [vmem:[%s3 + $0xd0] sm:$0xff]
  %v2001 = vld [vmem:[%s3 + $0xd8] sm:$0xff]
  %v2002 = vld [vmem:[%s3 + $0xe0] sm:$0xff]
  %v2003 = vld [vmem:[%s3 + $0xe8] sm:$0xff]
  %v2004 = vld [vmem:[%s3 + $0xf0] sm:$0xff]
  %v2005 = vld [vmem:[%s3 + $0xf8] sm:$0xff]
  %v2006 = vld [vmem:[%s3 + $0x100] sm:$0xff]
  %v2007 = vld [vmem:[%s3 + $0x108] sm:$0xff]
  %v2008 = vld [vmem:[%s3 + $0x110] sm:$0xff]
  %v2009 = vld [vmem:[%s3 + $0x118] sm:$0xff]
  %v2010 = vld [vmem:[%s3 + $0x120] sm:$0xff]
  %v2011 = vld [vmem:[%s3 + $0x128] sm:$0xff]
  %v2012 = vld [vmem:[%s3 + $0x130] sm:$0xff]
  %v2013 = vld [vmem:[%s3 + $0x138] sm:$0xff]
  %v2014 = vld [vmem:[%s3 + $0x140] sm:$0xff]
  %v2015 = vld [vmem:[%s3 + $0x148] sm:$0xff]
  %v2016 = vld [vmem:[%s3 + $0x150] sm:$0xff]
  %v2017 = vld [vmem:[%s3 + $0x158] sm:$0xff]
  %v2018 = vld [vmem:[%s3 + $0x160] sm:$0xff]
  %v2019 = vld [vmem:[%s3 + $0x168] sm:$0xff]
  %v2020 = vld [vmem:[%s3 + $0x170] sm:$0xff]
  %v2021 = vld [vmem:[%s3 + $0x178] sm:$0xff]
  %v2022 = vld [vmem:[%s3 + $0x180] sm:$0xff]
  %v2023 = vld [vmem:[%s3 + $0x188] sm:$0xff]
  %v2024 = vld [vmem:[%s3 + $0x190] sm:$0xff]
  %v2025 = vld [vmem:[%s3 + $0x198] sm:$0xff]
  %v2026 = vld [vmem:[%s3 + $0x1a0] sm:$0xff]
  %v2027 = vld [vmem:[%s3 + $0x1a8] sm:$0xff]
  %v2028 = vld [vmem:[%s3 + $0x1b0] sm:$0xff]
  %v2029 = vld [vmem:[%s3 + $0x1b8] sm:$0xff]
  %v2030 = vld [vmem:[%s3 + $0x1c0] sm:$0xff]
  %v2031 = vld [vmem:[%s3 + $0x1c8] sm:$0xff]
  %v2032 = vld [vmem:[%s3 + $0x1d0] sm:$0xff]
  %v2033 = vld [vmem:[%s3 + $0x1d8] sm:$0xff]
  %v2034 = vld [vmem:[%s3 + $0x1e0] sm:$0xff]
  %v2035 = vld [vmem:[%s3 + $0x1e8] sm:$0xff]
  %v2036 = vld [vmem:[%s3 + $0x1f0] sm:$0xff]
  %v2037 = vld [vmem:[%s3 + $0x1f8] sm:$0xff]
  %v2038 = vld [vmem:[%s4] sm:$0x3]
  %v2040 = vlaneseq
  %v2041 = vshrl.u32 %v2040, 7
  %v2042 = vsub.s32 0, %v2041
  %v2043 = vrot.slane %v2038, %v2042
  %v2044 = vlaneseq
  %v2045 = vshrl.u32 %v2044, 7
  %v2046 = vsub.s32 1, %v2045
  %v2047 = vrot.slane %v2038, %v2046
  %v2114 = vunpack.c.l.b16 %v1974
  %v2115 = vunpack.c.h.b16 %v1974
  %v2116 = vunpack.c.l.b16 %v1975
  %v2117 = vunpack.c.h.b16 %v1975
  %v2118 = vunpack.c.l.b16 %v1976
  %v2119 = vunpack.c.h.b16 %v1976
  %v2120 = vunpack.c.l.b16 %v1977
  %v2121 = vunpack.c.h.b16 %v1977
  %v2122 = vunpack.c.l.b16 %v1978
  %v2123 = vunpack.c.h.b16 %v1978
  %v2124 = vunpack.c.l.b16 %v1979
  %v2125 = vunpack.c.h.b16 %v1979
  %v2126 = vunpack.c.l.b16 %v1980
  %v2127 = vunpack.c.h.b16 %v1980
  %v2128 = vunpack.c.l.b16 %v1981
  %v2129 = vunpack.c.h.b16 %v1981
  %v2130 = vunpack.c.l.b16 %v1982
  %v2131 = vunpack.c.h.b16 %v1982
  %v2132 = vunpack.c.l.b16 %v1983
  %v2133 = vunpack.c.h.b16 %v1983
  %v2134 = vunpack.c.l.b16 %v1984
  %v2135 = vunpack.c.h.b16 %v1984
  %v2136 = vunpack.c.l.b16 %v1985
  %v2137 = vunpack.c.h.b16 %v1985
  %v2138 = vunpack.c.l.b16 %v1986
  %v2139 = vunpack.c.h.b16 %v1986
  %v2140 = vunpack.c.l.b16 %v1987
  %v2141 = vunpack.c.h.b16 %v1987
  %v2142 = vunpack.c.l.b16 %v1988
  %v2143 = vunpack.c.h.b16 %v1988
  %v2144 = vunpack.c.l.b16 %v1989
  %v2145 = vunpack.c.h.b16 %v1989
  %v2146 = vunpack.c.l.b16 %v1990
  %v2147 = vunpack.c.h.b16 %v1990
  %v2148 = vunpack.c.l.b16 %v1991
  %v2149 = vunpack.c.h.b16 %v1991
  %v2150 = vunpack.c.l.b16 %v1992
  %v2151 = vunpack.c.h.b16 %v1992
  %v2152 = vunpack.c.l.b16 %v1993
  %v2153 = vunpack.c.h.b16 %v1993
  %v2154 = vunpack.c.l.b16 %v1994
  %v2155 = vunpack.c.h.b16 %v1994
  %v2156 = vunpack.c.l.b16 %v1995
  %v2157 = vunpack.c.h.b16 %v1995
  %v2158 = vunpack.c.l.b16 %v1996
  %v2159 = vunpack.c.h.b16 %v1996
  %v2160 = vunpack.c.l.b16 %v1997
  %v2161 = vunpack.c.h.b16 %v1997
  %v2162 = vunpack.c.l.b16 %v1998
  %v2163 = vunpack.c.h.b16 %v1998
  %v2164 = vunpack.c.l.b16 %v1999
  %v2165 = vunpack.c.h.b16 %v1999
  %v2166 = vunpack.c.l.b16 %v2000
  %v2167 = vunpack.c.h.b16 %v2000
  %v2168 = vunpack.c.l.b16 %v2001
  %v2169 = vunpack.c.h.b16 %v2001
  %v2170 = vunpack.c.l.b16 %v2002
  %v2171 = vunpack.c.h.b16 %v2002
  %v2172 = vunpack.c.l.b16 %v2003
  %v2173 = vunpack.c.h.b16 %v2003
  %v2174 = vunpack.c.l.b16 %v2004
  %v2175 = vunpack.c.h.b16 %v2004
  %v2176 = vunpack.c.l.b16 %v2005
  %v2177 = vunpack.c.h.b16 %v2005
  %v2178 = vunpack.c.l.b16 %v2006
  %v2179 = vunpack.c.h.b16 %v2006
  %v2180 = vunpack.c.l.b16 %v2007
  %v2181 = vunpack.c.h.b16 %v2007
  %v2182 = vunpack.c.l.b16 %v2008
  %v2183 = vunpack.c.h.b16 %v2008
  %v2184 = vunpack.c.l.b16 %v2009
  %v2185 = vunpack.c.h.b16 %v2009
  %v2186 = vunpack.c.l.b16 %v2010
  %v2187 = vunpack.c.h.b16 %v2010
  %v2188 = vunpack.c.l.b16 %v2011
  %v2189 = vunpack.c.h.b16 %v2011
  %v2190 = vunpack.c.l.b16 %v2012
  %v2191 = vunpack.c.h.b16 %v2012
  %v2192 = vunpack.c.l.b16 %v2013
  %v2193 = vunpack.c.h.b16 %v2013
  %v2194 = vunpack.c.l.b16 %v2014
  %v2195 = vunpack.c.h.b16 %v2014
  %v2196 = vunpack.c.l.b16 %v2015
  %v2197 = vunpack.c.h.b16 %v2015
  %v2198 = vunpack.c.l.b16 %v2016
  %v2199 = vunpack.c.h.b16 %v2016
  %v2200 = vunpack.c.l.b16 %v2017
  %v2201 = vunpack.c.h.b16 %v2017
  %v2202 = vunpack.c.l.b16 %v2018
  %v2203 = vunpack.c.h.b16 %v2018
  %v2204 = vunpack.c.l.b16 %v2019
  %v2205 = vunpack.c.h.b16 %v2019
  %v2206 = vunpack.c.l.b16 %v2020
  %v2207 = vunpack.c.h.b16 %v2020
  %v2208 = vunpack.c.l.b16 %v2021
  %v2209 = vunpack.c.h.b16 %v2021
  %v2210 = vunpack.c.l.b16 %v2022
  %v2211 = vunpack.c.h.b16 %v2022
  %v2212 = vunpack.c.l.b16 %v2023
  %v2213 = vunpack.c.h.b16 %v2023
  %v2214 = vunpack.c.l.b16 %v2024
  %v2215 = vunpack.c.h.b16 %v2024
  %v2216 = vunpack.c.l.b16 %v2025
  %v2217 = vunpack.c.h.b16 %v2025
  %v2218 = vunpack.c.l.b16 %v2026
  %v2219 = vunpack.c.h.b16 %v2026
  %v2220 = vunpack.c.l.b16 %v2027
  %v2221 = vunpack.c.h.b16 %v2027
  %v2222 = vunpack.c.l.b16 %v2028
  %v2223 = vunpack.c.h.b16 %v2028
  %v2224 = vunpack.c.l.b16 %v2029
  %v2225 = vunpack.c.h.b16 %v2029
  %v2226 = vunpack.c.l.b16 %v2030
  %v2227 = vunpack.c.h.b16 %v2030
  %v2228 = vunpack.c.l.b16 %v2031
  %v2229 = vunpack.c.h.b16 %v2031
  %v2230 = vunpack.c.l.b16 %v2032
  %v2231 = vunpack.c.h.b16 %v2032
  %v2232 = vunpack.c.l.b16 %v2033
  %v2233 = vunpack.c.h.b16 %v2033
  %v2234 = vunpack.c.l.b16 %v2034
  %v2235 = vunpack.c.h.b16 %v2034
  %v2236 = vunpack.c.l.b16 %v2035
  %v2237 = vunpack.c.h.b16 %v2035
  %v2238 = vunpack.c.l.b16 %v2036
  %v2239 = vunpack.c.h.b16 %v2036
  %v2240 = vunpack.c.l.b16 %v2037
  %v2241 = vunpack.c.h.b16 %v2037
  %v2242 = vpack.c.b16 %v2116, %v2114
  %v2243 = vpack.c.b16 %v2117, %v2115
  %v2244 = vpack.c.b16 %v2120, %v2118
  %v2245 = vpack.c.b16 %v2121, %v2119
  %v2246 = vpack.c.b16 %v2124, %v2122
  %v2247 = vpack.c.b16 %v2125, %v2123
  %v2248 = vpack.c.b16 %v2128, %v2126
  %v2249 = vpack.c.b16 %v2129, %v2127
  %v2250 = vpack.c.b16 %v2132, %v2130
  %v2251 = vpack.c.b16 %v2133, %v2131
  %v2252 = vpack.c.b16 %v2136, %v2134
  %v2253 = vpack.c.b16 %v2137, %v2135
  %v2254 = vpack.c.b16 %v2140, %v2138
  %v2255 = vpack.c.b16 %v2141, %v2139
  %v2256 = vpack.c.b16 %v2144, %v2142
  %v2257 = vpack.c.b16 %v2145, %v2143
  %v2258 = vpack.c.b16 %v2148, %v2146
  %v2259 = vpack.c.b16 %v2149, %v2147
  %v2260 = vpack.c.b16 %v2152, %v2150
  %v2261 = vpack.c.b16 %v2153, %v2151
  %v2262 = vpack.c.b16 %v2156, %v2154
  %v2263 = vpack.c.b16 %v2157, %v2155
  %v2264 = vpack.c.b16 %v2160, %v2158
  %v2265 = vpack.c.b16 %v2161, %v2159
  %v2266 = vpack.c.b16 %v2164, %v2162
  %v2267 = vpack.c.b16 %v2165, %v2163
  %v2268 = vpack.c.b16 %v2168, %v2166
  %v2269 = vpack.c.b16 %v2169, %v2167
  %v2270 = vpack.c.b16 %v2172, %v2170
  %v2271 = vpack.c.b16 %v2173, %v2171
  %v2272 = vpack.c.b16 %v2176, %v2174
  %v2273 = vpack.c.b16 %v2177, %v2175
  %v2274 = vpack.c.b16 %v2180, %v2178
  %v2275 = vpack.c.b16 %v2181, %v2179
  %v2276 = vpack.c.b16 %v2184, %v2182
  %v2277 = vpack.c.b16 %v2185, %v2183
  %v2278 = vpack.c.b16 %v2188, %v2186
  %v2279 = vpack.c.b16 %v2189, %v2187
  %v2280 = vpack.c.b16 %v2192, %v2190
  %v2281 = vpack.c.b16 %v2193, %v2191
  %v2282 = vpack.c.b16 %v2196, %v2194
  %v2283 = vpack.c.b16 %v2197, %v2195
  %v2284 = vpack.c.b16 %v2200, %v2198
  %v2285 = vpack.c.b16 %v2201, %v2199
  %v2286 = vpack.c.b16 %v2204, %v2202
  %v2287 = vpack.c.b16 %v2205, %v2203
  %v2288 = vpack.c.b16 %v2208, %v2206
  %v2289 = vpack.c.b16 %v2209, %v2207
  %v2290 = vpack.c.b16 %v2212, %v2210
  %v2291 = vpack.c.b16 %v2213, %v2211
  %v2292 = vpack.c.b16 %v2216, %v2214
  %v2293 = vpack.c.b16 %v2217, %v2215
  %v2294 = vpack.c.b16 %v2220, %v2218
  %v2295 = vpack.c.b16 %v2221, %v2219
  %v2296 = vpack.c.b16 %v2224, %v2222
  %v2297 = vpack.c.b16 %v2225, %v2223
  %v2298 = vpack.c.b16 %v2228, %v2226
  %v2299 = vpack.c.b16 %v2229, %v2227
  %v2300 = vpack.c.b16 %v2232, %v2230
  %v2301 = vpack.c.b16 %v2233, %v2231
  %v2302 = vpack.c.b16 %v2236, %v2234
  %v2303 = vpack.c.b16 %v2237, %v2235
  %v2304 = vpack.c.b16 %v2240, %v2238
  %v2305 = vpack.c.b16 %v2241, %v2239
  %2370 = vmatprep.subr.bf16.mxu0 %v2257
  %2371 = vmatpush1.bf16.msra.mxu0 %v2256
  %2372 = vmatprep.subr.bf16.mxu0 %v2255
  %2373 = vmatpush1.bf16.msra.mxu0 %v2254
  %2374 = vmatprep.subr.bf16.mxu0 %v2253
  %2375 = vmatpush1.bf16.msra.mxu0 %v2252
  %2376 = vmatprep.subr.bf16.mxu0 %v2251
  %2377 = vmatpush1.bf16.msra.mxu0 %v2250
  %2378 = vmatprep.subr.bf16.mxu0 %v2249
  %2379 = vmatpush1.bf16.msra.mxu0 %v2248
  %2380 = vmatprep.subr.bf16.mxu0 %v2247
  %2381 = vmatpush1.bf16.msra.mxu0 %v2246
  %2382 = vmatprep.subr.bf16.mxu0 %v2245
  %2383 = vmatpush1.bf16.msra.mxu0 %v2244
  %2384 = vmatprep.subr.bf16.mxu0 %v2243
  %2385 = vmatpush1.bf16.msra.mxu0 %v2242
  %2386 = vmatprep.subr.bf16.mxu0 %v2273
  %2387 = vmatpush2.bf16.msra.mxu0 %v2272
  %2388 = vmatprep.subr.bf16.mxu0 %v2271
  %2389 = vmatpush2.bf16.msra.mxu0 %v2270
  %2390 = vmatprep.subr.bf16.mxu0 %v2269
  %2391 = vmatpush2.bf16.msra.mxu0 %v2268
  %2392 = vmatprep.subr.bf16.mxu0 %v2267
  %2393 = vmatpush2.bf16.msra.mxu0 %v2266
  %2394 = vmatprep.subr.bf16.mxu0 %v2265
  %2395 = vmatpush2.bf16.msra.mxu0 %v2264
  %2396 = vmatprep.subr.bf16.mxu0 %v2263
  %2397 = vmatpush2.bf16.msra.mxu0 %v2262
  %2398 = vmatprep.subr.bf16.mxu0 %v2261
  %2399 = vmatpush2.bf16.msra.mxu0 %v2260
  %2400 = vmatprep.subr.bf16.mxu0 %v2259
  %2401 = vmatpush2.bf16.msra.mxu0 %v2258
  %2402 = vmatprep.mubr.bf16.mxu0 %v1971
  %2403 = vmatmul.mubr.bf16.gmra.mxu0 %v1970
  %v2404 = vpop.f32.mrf.mxu0
  %v2405 = vadd.f32 %v2043, %v2404
  %v2406 = vpop.f32.mrf.mxu0
  %v2407 = vadd.f32 %v2047, %v2406
  %v2408 = vpop.f32.mrf.mxu0
  %v2409 = vpop.f32.mrf.mxu0
  %2410 = vdwg.mxu0
  %2411 = vmatprep.subr.bf16.mxu0 %v2289
  %2412 = vmatpush1.bf16.msra.mxu0 %v2288
  %2413 = vmatprep.subr.bf16.mxu0 %v2287
  %2414 = vmatpush1.bf16.msra.mxu0 %v2286
  %2415 = vmatprep.subr.bf16.mxu0 %v2285
  %2416 = vmatpush1.bf16.msra.mxu0 %v2284
  %2417 = vmatprep.subr.bf16.mxu0 %v2283
  %2418 = vmatpush1.bf16.msra.mxu0 %v2282
  %2419 = vmatprep.subr.bf16.mxu0 %v2281
  %2420 = vmatpush1.bf16.msra.mxu0 %v2280
  %2421 = vmatprep.subr.bf16.mxu0 %v2279
  %2422 = vmatpush1.bf16.msra.mxu0 %v2278
  %2423 = vmatprep.subr.bf16.mxu0 %v2277
  %2424 = vmatpush1.bf16.msra.mxu0 %v2276
  %2425 = vmatprep.subr.bf16.mxu0 %v2275
  %2426 = vmatpush1.bf16.msra.mxu0 %v2274
  %2427 = vmatprep.subr.bf16.mxu0 %v2305
  %2428 = vmatpush2.bf16.msra.mxu0 %v2304
  %2429 = vmatprep.subr.bf16.mxu0 %v2303
  %2430 = vmatpush2.bf16.msra.mxu0 %v2302
  %2431 = vmatprep.subr.bf16.mxu0 %v2301
  %2432 = vmatpush2.bf16.msra.mxu0 %v2300
  %2433 = vmatprep.subr.bf16.mxu0 %v2299
  %2434 = vmatpush2.bf16.msra.mxu0 %v2298
  %2435 = vmatprep.subr.bf16.mxu0 %v2297
  %2436 = vmatpush2.bf16.msra.mxu0 %v2296
  %2437 = vmatprep.subr.bf16.mxu0 %v2295
  %2438 = vmatpush2.bf16.msra.mxu0 %v2294
  %2439 = vmatprep.subr.bf16.mxu0 %v2293
  %2440 = vmatpush2.bf16.msra.mxu0 %v2292
  %2441 = vmatprep.subr.bf16.mxu0 %v2291
  %2442 = vmatpush2.bf16.msra.mxu0 %v2290
  %2443 = vmatprep.mubr.bf16.mxu0 %v1973
  %2444 = vmatmul.mubr.bf16.gmra.mxu0 %v1972
  %v2445 = vpop.f32.mrf.mxu0
  %v2446 = vadd.f32 %v2405, %v2445
  %v2447 = vpop.f32.mrf.mxu0
  %v2448 = vadd.f32 %v2407, %v2447
  %v2449 = vpop.f32.mrf.mxu0
  %v2450 = vpop.f32.mrf.mxu0
  %2451 = vdwg.mxu0
  %v2452 = vmax.f32 %v2446, 0.0
  %v2453 = vmax.f32 %v2448, 0.0
  %v2454 = vld [vmem:[%s5] sm:$0xff]
  %v2455 = vld [vmem:[%s5 + $0x8] sm:$0xff]
  %v2456 = vld [vmem:[%s5 + $0x10] sm:$0xff]
  %v2457 = vld [vmem:[%s5 + $0x18] sm:$0xff]
  %v2458 = vld [vmem:[%s5 + $0x20] sm:$0xff]
  %v2459 = vld [vmem:[%s5 + $0x28] sm:$0xff]
  %v2460 = vld [vmem:[%s5 + $0x30] sm:$0xff]
  %v2461 = vld [vmem:[%s5 + $0x38] sm:$0xff]
  %v2462 = vld [vmem:[%s5 + $0x40] sm:$0xff]
  %v2463 = vld [vmem:[%s5 + $0x48] sm:$0xff]
  %v2464 = vld [vmem:[%s5 + $0x50] sm:$0xff]
  %v2465 = vld [vmem:[%s5 + $0x58] sm:$0xff]
  %v2466 = vld [vmem:[%s5 + $0x60] sm:$0xff]
  %v2467 = vld [vmem:[%s5 + $0x68] sm:$0xff]
  %v2468 = vld [vmem:[%s5 + $0x70] sm:$0xff]
  %v2469 = vld [vmem:[%s5 + $0x78] sm:$0xff]
  %v2470 = vld [vmem:[%s5 + $0x80] sm:$0xff]
  %v2471 = vld [vmem:[%s5 + $0x88] sm:$0xff]
  %v2472 = vld [vmem:[%s5 + $0x90] sm:$0xff]
  %v2473 = vld [vmem:[%s5 + $0x98] sm:$0xff]
  %v2474 = vld [vmem:[%s5 + $0xa0] sm:$0xff]
  %v2475 = vld [vmem:[%s5 + $0xa8] sm:$0xff]
  %v2476 = vld [vmem:[%s5 + $0xb0] sm:$0xff]
  %v2477 = vld [vmem:[%s5 + $0xb8] sm:$0xff]
  %v2478 = vld [vmem:[%s5 + $0xc0] sm:$0xff]
  %v2479 = vld [vmem:[%s5 + $0xc8] sm:$0xff]
  %v2480 = vld [vmem:[%s5 + $0xd0] sm:$0xff]
  %v2481 = vld [vmem:[%s5 + $0xd8] sm:$0xff]
  %v2482 = vld [vmem:[%s5 + $0xe0] sm:$0xff]
  %v2483 = vld [vmem:[%s5 + $0xe8] sm:$0xff]
  %v2484 = vld [vmem:[%s5 + $0xf0] sm:$0xff]
  %v2485 = vld [vmem:[%s5 + $0xf8] sm:$0xff]
  %v2486 = vld [vmem:[%s6] sm:$0x1]
  %v2488 = vlaneseq
  %v2489 = vshrl.u32 %v2488, 7
  %v2490 = vsub.s32 0, %v2489
  %v2491 = vrot.slane %v2486, %v2490
  %2493 = vmatprep.subr.mxu0 0.0
  %2494 = vmatpush1.msra.mxu0 %v2469
  %2495 = vmatprep.subr.mxu0 0.0
  %2496 = vmatpush1.msra.mxu0 %v2468
  %2497 = vmatprep.subr.mxu0 0.0
  %2498 = vmatpush1.msra.mxu0 %v2467
  %2499 = vmatprep.subr.mxu0 0.0
  %2500 = vmatpush1.msra.mxu0 %v2466
  %2501 = vmatprep.subr.mxu0 0.0
  %2502 = vmatpush1.msra.mxu0 %v2465
  %2503 = vmatprep.subr.mxu0 0.0
  %2504 = vmatpush1.msra.mxu0 %v2464
  %2505 = vmatprep.subr.mxu0 0.0
  %2506 = vmatpush1.msra.mxu0 %v2463
  %2507 = vmatprep.subr.mxu0 0.0
  %2508 = vmatpush1.msra.mxu0 %v2462
  %2509 = vmatprep.subr.mxu0 0.0
  %2510 = vmatpush1.msra.mxu0 %v2461
  %2511 = vmatprep.subr.mxu0 0.0
  %2512 = vmatpush1.msra.mxu0 %v2460
  %2513 = vmatprep.subr.mxu0 0.0
  %2514 = vmatpush1.msra.mxu0 %v2459
  %2515 = vmatprep.subr.mxu0 0.0
  %2516 = vmatpush1.msra.mxu0 %v2458
  %2517 = vmatprep.subr.mxu0 0.0
  %2518 = vmatpush1.msra.mxu0 %v2457
  %2519 = vmatprep.subr.mxu0 0.0
  %2520 = vmatpush1.msra.mxu0 %v2456
  %2521 = vmatprep.subr.mxu0 0.0
  %2522 = vmatpush1.msra.mxu0 %v2455
  %2523 = vmatprep.subr.mxu0 0.0
  %2524 = vmatpush1.msra.mxu0 %v2454
  %2525 = vmatprep.subr.mxu0 0.0
  %2526 = vmatpush2.msra.mxu0 %v2485
  %2527 = vmatprep.subr.mxu0 0.0
  %2528 = vmatpush2.msra.mxu0 %v2484
  %2529 = vmatprep.subr.mxu0 0.0
  %2530 = vmatpush2.msra.mxu0 %v2483
  %2531 = vmatprep.subr.mxu0 0.0
  %2532 = vmatpush2.msra.mxu0 %v2482
  %2533 = vmatprep.subr.mxu0 0.0
  %2534 = vmatpush2.msra.mxu0 %v2481
  %2535 = vmatprep.subr.mxu0 0.0
  %2536 = vmatpush2.msra.mxu0 %v2480
  %2537 = vmatprep.subr.mxu0 0.0
  %2538 = vmatpush2.msra.mxu0 %v2479
  %2539 = vmatprep.subr.mxu0 0.0
  %2540 = vmatpush2.msra.mxu0 %v2478
  %2541 = vmatprep.subr.mxu0 0.0
  %2542 = vmatpush2.msra.mxu0 %v2477
  %2543 = vmatprep.subr.mxu0 0.0
  %2544 = vmatpush2.msra.mxu0 %v2476
  %2545 = vmatprep.subr.mxu0 0.0
  %2546 = vmatpush2.msra.mxu0 %v2475
  %2547 = vmatprep.subr.mxu0 0.0
  %2548 = vmatpush2.msra.mxu0 %v2474
  %2549 = vmatprep.subr.mxu0 0.0
  %2550 = vmatpush2.msra.mxu0 %v2473
  %2551 = vmatprep.subr.mxu0 0.0
  %2552 = vmatpush2.msra.mxu0 %v2472
  %2553 = vmatprep.subr.mxu0 0.0
  %2554 = vmatpush2.msra.mxu0 %v2471
  %2555 = vmatprep.subr.mxu0 0.0
  %2556 = vmatpush2.msra.mxu0 %v2470
  %2557 = vmatprep.mubr.f32.mxu0 %v2453
  %2558 = vmatmul.mubr.f32.gmra.mxu0 %v2452
  %v2559 = vpop.f32.mrf.mxu0
  %v2560 = vadd.f32 %v2491, %v2559
  %v2561 = vpop.f32.mrf.mxu0
  %2562 = vdwg.mxu0
  %vm2563 = vcmask 66560
  %2564 = vst.msk [vmem:[%s7] sm:$0x3] %vm2563, %v2560
  // Predicated region
  $region30: #{pointnet_encoder_forward.4} parent=0 // pred_check
    _
  $region31: #{pointnet_encoder_forward.4} parent=0 // pred_check_branch
    %2566 = sbr.rel (0) target = $region33
  $region32: #{pointnet_encoder_forward.4} parent=0 // pred_region
    _
  $region33: #{pointnet_encoder_forward.4} parent=0 // pred_fallthru
    _
  // Predicated region
  $region34: #{pointnet_encoder_forward.4} parent=0 // pred_check
    _
  $region35: #{pointnet_encoder_forward.4} parent=0 // pred_check_branch
    %2568 = sbr.rel (0) target = $region37
  $region36: #{pointnet_encoder_forward.4} parent=0 // pred_region
    _
  $region37: #{pointnet_encoder_forward.4} parent=0 // pred_fallthru
    _

</llo_original>
